<compile_context>
chip_gen: v7x
topology: tpu7x:2x2x1
jax: 0.10.0
libtpu: 0.0.40
codegen_flags: <defaults>
</compile_context>

<pallas_src>
import jax
import jax.numpy as jnp
from jax.experimental import pallas as pl
from jax.experimental.pallas import tpu as pltpu


def _fused_cnn_kernel(x_ref, w1c_ref, b1c_ref, w2c_ref, b2c_ref,
                      wf1_ref, bf1_ref, wf2_ref, bf2_ref,
                      o_ref, pad1_ref, pd2_ref, s2_ref):
    # x_ref   : (1, C1, H, W)        VMEM   one batch element
    # w1c_ref : (C2*C1*9,)           SMEM   conv1 weights (PyTorch order, flat)
    # b1c_ref : (C2,)                SMEM
    # w2c_ref : (C2*9,)              SMEM   conv2 weights (flat)
    # b2c_ref : (1,)                 SMEM
    # wf1_ref : (HQ, W-2, 10)        VMEM   fc1 weights, pool2+flatten folded in
    # bf1_ref : (1, 10)              VMEM
    # wf2_ref : (10, 10)             VMEM
    # bf2_ref : (1, 10)              VMEM
    # o_ref   : (1, 1, 10)           VMEM   output row for this batch element
    # pad1_ref: (C1, H+2, W+2)       VMEM   zero-padded conv1 input
    # pd2_ref : (C2, H+4, W+4)       VMEM   dilated, zero-padded conv2 input
    # s2_ref  : (H, W)               VMEM   conv2+sigmoid output (dilated)
    C1 = x_ref.shape[1]
    H = x_ref.shape[2]
    W = x_ref.shape[3]
    C2 = pd2_ref.shape[0]
    HQ = wf1_ref.shape[0]          # H // 4
    WF = wf1_ref.shape[1]          # W - 2
    f32 = jnp.float32

    # ---- in-kernel zero padding of the conv1 input --------------------------
    pad1_ref[...] = jnp.zeros(pad1_ref.shape, f32)
    for ci in range(C1):
        pad1_ref[ci, pl.ds(1, H), pl.ds(1, W)] = x_ref[0, ci]

    # ---- dilated, zero-padded conv2 input buffer (borders must stay zero) ---
    pd2_ref[...] = jnp.zeros(pd2_ref.shape, f32)

    # ---- conv1 (3x3, pad 1): shift-and-accumulate, each patch loaded once ---
    accs = [jnp.zeros((H, W), f32) for _ in range(C2)]
    for ci in range(C1):
        for dy in range(3):
            for dx in range(3):
                patch = pad1_ref[ci, pl.ds(dy, H), pl.ds(dx, W)]
                for co in range(C2):
                    w = w1c_ref[(co * C1 + ci) * 9 + dy * 3 + dx]
                    accs[co] = accs[co] + patch * w

    # ---- sigmoid + 2x2 max-pool (pure VPU), result kept dilated -------------
    # After this, pd2[co, 2+p, 2+q] == pooled1[co, p//2, q//2] for even p, q;
    # odd positions hold harmless finite junk, borders are zero.
    for co in range(C2):
        s1 = 1.0 / (1.0 + jnp.exp(-(accs[co] + b1c_ref[co])))
        pd2_ref[co, pl.ds(2, H), pl.ds(2, W)] = s1
        a00 = pd2_ref[co, pl.ds(2, H), pl.ds(2, W)]
        a01 = pd2_ref[co, pl.ds(2, H), pl.ds(3, W)]
        a10 = pd2_ref[co, pl.ds(3, H), pl.ds(2, W)]
        a11 = pd2_ref[co, pl.ds(3, H), pl.ds(3, W)]
        pd2_ref[co, pl.ds(2, H), pl.ds(2, W)] = jnp.maximum(
            jnp.maximum(a00, a01), jnp.maximum(a10, a11))

    # ---- conv2 (3x3, pad 1) on the dilated pooled activations ---------------
    # Even output positions (2u, 2v) equal conv2(pooled1)[u, v]; odd positions
    # are finite junk masked later by the zero rows of wf1.
    acc2 = jnp.zeros((H, W), f32)
    for ci in range(C2):
        for dy in range(3):
            for dx in range(3):
                w = w2c_ref[ci * 9 + dy * 3 + dx]
                acc2 = acc2 + pd2_ref[ci, pl.ds(2 * dy, H), pl.ds(2 * dx, W)] * w
    s2_ref[...] = 1.0 / (1.0 + jnp.exp(-(acc2 + b2c_ref[0])))

    # ---- 2x2 max-pool (stride-2 shifted reads) + flatten + fc1, fused --------
    # Row 4*m of the window max holds pooled2[m, n] at lane 4*n; wf1 was
    # pre-scattered so exactly those lanes hit W_fc1[7*m + n, :], all other
    # lanes multiply finite junk by zero.
    y = bf1_ref[...]                                        # (1, 10)
    for m in range(HQ):
        p = 4 * m
        r00 = s2_ref[pl.ds(p, 1), pl.ds(0, WF)]
        r01 = s2_ref[pl.ds(p, 1), pl.ds(2, WF)]
        r10 = s2_ref[pl.ds(p + 2, 1), pl.ds(0, WF)]
        r11 = s2_ref[pl.ds(p + 2, 1), pl.ds(2, WF)]
        row = jnp.maximum(jnp.maximum(r00, r01), jnp.maximum(r10, r11))
        y = y + jnp.dot(row, wf1_ref[m], preferred_element_type=f32)

    # ---- fc2 -----------------------------------------------------------------
    y = jnp.dot(y, wf2_ref[...], preferred_element_type=f32) + bf2_ref[...]
    o_ref[0] = y


@jax.jit
def cnn_forward(x, params):
    """x: (N, 3, H, W) f32 -> (N, 10) f32 (H = W = 28 for the reference fc)."""
    N, C1, H, W = x.shape
    C2 = params["w_c1"].shape[0]                 # conv1 out-channels (3)
    HQ, WQ = H // 4, W // 4                      # pooled-twice spatial (7, 7)
    WF = W - 2                                   # lane width of the fc1 fold
    n_fc1 = params["w_f1"].shape[1]
    n_fc2 = params["w_f2"].shape[1]
    f32 = jnp.float32

    w1c = params["w_c1"].astype(f32).reshape(-1)
    b1c = params["b_c1"].astype(f32)
    w2c = params["w_c2"].astype(f32).reshape(-1)
    b2c = params["b_c2"].astype(f32)

    # Fold MaxPool2's compaction + the flatten into the fc1 weights:
    # scatter W_fc1[7*m + n, :] to lane 4*n of row-group m, zeros elsewhere.
    w1r = params["w_f1"].astype(f32).reshape(HQ, WQ, n_fc1)
    wf1 = jnp.zeros((HQ, WF, n_fc1), f32).at[:, 0:4 * WQ:4, :].set(w1r)
    bf1 = params["b_f1"].astype(f32).reshape(1, n_fc1)
    wf2 = params["w_f2"].astype(f32)
    bf2 = params["b_f2"].astype(f32).reshape(1, n_fc2)

    smem = pl.BlockSpec(memory_space=pltpu.MemorySpace.SMEM)
    out = pl.pallas_call(
        _fused_cnn_kernel,
        out_shape=jax.ShapeDtypeStruct((N, 1, n_fc2), f32),
        grid=(N,),
        in_specs=[
            pl.BlockSpec((1, C1, H, W), lambda n: (n, 0, 0, 0)),
            smem, smem, smem, smem,
            pl.BlockSpec((HQ, WF, n_fc1), lambda n: (0, 0, 0)),
            pl.BlockSpec((1, n_fc1), lambda n: (0, 0)),
            pl.BlockSpec((n_fc1, n_fc2), lambda n: (0, 0)),
            pl.BlockSpec((1, n_fc2), lambda n: (0, 0)),
        ],
        out_specs=pl.BlockSpec((1, 1, n_fc2), lambda n: (n, 0, 0)),
        scratch_shapes=[
            pltpu.VMEM((C1, H + 2, W + 2), f32),   # zero-padded conv1 input
            pltpu.VMEM((C2, H + 4, W + 4), f32),   # dilated padded conv2 input
            pltpu.VMEM((H, W), f32),               # conv2 + sigmoid output
        ],
        compiler_params=pltpu.CompilerParams(
            dimension_semantics=("parallel",)),
    )(x.astype(f32), w1c, b1c, w2c, b2c, wf1, bf1, wf2, bf2)
    return out.reshape(N, n_fc2)


def _reference_forward(x, params):
    """Pure-JAX (non-Pallas) reference of the same forward pass."""
    hp = jax.lax.Precision.HIGHEST

    def block(h, w, b):
        y = jax.lax.conv_general_dilated(
            h, w, window_strides=(1, 1), padding=((1, 1), (1, 1)),
            dimension_numbers=("NCHW", "OIHW", "NCHW"), precision=hp)
        y = jax.nn.sigmoid(y + b.reshape(1, -1, 1, 1))
        return jax.lax.reduce_window(y, -jnp.inf, jax.lax.max,
                                     (1, 1, 2, 2), (1, 1, 2, 2), "VALID")

    h = block(x, params["w_c1"], params["b_c1"])
    h = block(h, params["w_c2"], params["b_c2"])
    h = h.reshape(h.shape[0], -1)
    h = jnp.dot(h, params["w_f1"], precision=hp) + params["b_f1"]
    return jnp.dot(h, params["w_f2"], precision=hp) + params["b_f2"]


if __name__ == "__main__":
    import numpy as np

    key = jax.random.PRNGKey(0)
    ks = jax.random.split(key, 9)

    # Input implied by fc = Linear(7*7*1, 10) after two 2x pools: 28x28, 3 ch.
    x = jax.random.normal(ks[0], (2, 3, 28, 28), dtype=jnp.float32)

    params = {
        "w_c1": 0.2 * jax.random.normal(ks[1], (3, 3, 3, 3), jnp.float32),   # Conv2d(3,3,3,p=1)
        "b_c1": 0.1 * jax.random.normal(ks[2], (3,), jnp.float32),
        "w_c2": 0.2 * jax.random.normal(ks[3], (1, 3, 3, 3), jnp.float32),   # Conv2d(3,1,3,p=1)
        "b_c2": 0.1 * jax.random.normal(ks[4], (1,), jnp.float32),
        "w_f1": 0.1 * jax.random.normal(ks[5], (49, 10), jnp.float32),       # Linear(49,10) (transposed)
        "b_f1": 0.1 * jax.random.normal(ks[6], (1, 10), jnp.float32),
        "w_f2": 0.1 * jax.random.normal(ks[7], (10, 10), jnp.float32),       # Linear(10,10) (transposed)
        "b_f2": 0.1 * jax.random.normal(ks[8], (1, 10), jnp.float32),
    }

    out = jax.block_until_ready(cnn_forward(x, params))
    assert out.shape == (2, 10), out.shape

    ref = jax.block_until_ready(_reference_forward(x, params))
    np.testing.assert_allclose(np.asarray(out), np.asarray(ref),
                               rtol=5e-3, atol=5e-3)
    print("KERNEL_OK")
</pallas_src>

<mosaic_0001>
module attributes {stable_mosaic.version = 11 : i64} {
  func.func @_fused_cnn_kernel(%arg0: i32, %arg1: memref<1x3x28x28xf32, #tpu.memory_space<vmem>>, %arg2: memref<81xf32, #tpu.memory_space<smem>>, %arg3: memref<3xf32, #tpu.memory_space<smem>>, %arg4: memref<27xf32, #tpu.memory_space<smem>>, %arg5: memref<1xf32, #tpu.memory_space<smem>>, %arg6: memref<7x26x10xf32, #tpu.memory_space<vmem>>, %arg7: memref<1x10xf32, #tpu.memory_space<vmem>>, %arg8: memref<10x10xf32, #tpu.memory_space<vmem>>, %arg9: memref<1x10xf32, #tpu.memory_space<vmem>>, %arg10: memref<1x1x10xf32, #tpu.memory_space<vmem>>, %arg11: memref<3x30x30xf32, #tpu.memory_space<vmem>>, %arg12: memref<3x32x32xf32, #tpu.memory_space<vmem>>, %arg13: memref<28x28xf32, #tpu.memory_space<vmem>>) attributes {dimension_semantics = [#tpu.dimension_semantics<parallel>], iteration_bounds = array<i64: 2>, scalar_prefetch = 0 : i64, scratch_operands = 3 : i64, tpu.core_type = #tpu.core_type<tc>, window_params = [{transform_indices = @transform_0, window_bounds = array<i64: 1, 3, 28, 28>}, {transform_indices = @transform_1, window_bounds = array<i64: 81>}, {transform_indices = @transform_2, window_bounds = array<i64: 3>}, {transform_indices = @transform_3, window_bounds = array<i64: 27>}, {transform_indices = @transform_4, window_bounds = array<i64: 1>}, {pipeline_mode = #tpu.pipeline_mode<synchronous>, transform_indices = @transform_5, window_bounds = array<i64: 7, 26, 10>}, {pipeline_mode = #tpu.pipeline_mode<synchronous>, transform_indices = @transform_6, window_bounds = array<i64: 1, 10>}, {pipeline_mode = #tpu.pipeline_mode<synchronous>, transform_indices = @transform_7, window_bounds = array<i64: 10, 10>}, {pipeline_mode = #tpu.pipeline_mode<synchronous>, transform_indices = @transform_8, window_bounds = array<i64: 1, 10>}, {transform_indices = @transform_9, window_bounds = array<i64: 1, 1, 10>}]} {
    %cst = arith.constant 0.000000e+00 : f32
    %0 = vector.broadcast %cst : f32 to vector<3x30x30xf32>
    %c0 = arith.constant 0 : index
    %c0_0 = arith.constant 0 : index
    %c0_1 = arith.constant 0 : index
    %1 = vector.load %arg11[%c0, %c0_0, %c0_1] : memref<3x30x30xf32, #tpu.memory_space<vmem>>, vector<3x30x30xf32>
    tpu.vector_store %arg11[%c0, %c0_0, %c0_1], %0 {strides = array<i32>} : memref<3x30x30xf32, #tpu.memory_space<vmem>>, vector<3x30x30xf32>,
    %c0_2 = arith.constant 0 : index
    %c0_3 = arith.constant 0 : index
    %c0_4 = arith.constant 0 : index
    %c0_5 = arith.constant 0 : index
    %2 = vector.load %arg1[%c0_2, %c0_3, %c0_4, %c0_5] : memref<1x3x28x28xf32, #tpu.memory_space<vmem>>, vector<1x1x28x28xf32>
    %3 = vector.shape_cast %2 : vector<1x1x28x28xf32> to vector<28x28xf32>
    %c0_6 = arith.constant 0 : index
    %c1 = arith.constant 1 : index
    %c1_7 = arith.constant 1 : index
    %4 = vector.load %arg11[%c0_6, %c1, %c1_7] : memref<3x30x30xf32, #tpu.memory_space<vmem>>, vector<1x28x28xf32>
    %5 = vector.shape_cast %4 : vector<1x28x28xf32> to vector<28x28xf32>
    %6 = vector.shape_cast %3 : vector<28x28xf32> to vector<1x28x28xf32>
    tpu.vector_store %arg11[%c0_6, %c1, %c1_7], %6 {strides = array<i32>} : memref<3x30x30xf32, #tpu.memory_space<vmem>>, vector<1x28x28xf32>,
    %c0_8 = arith.constant 0 : index
    %c1_9 = arith.constant 1 : index
    %c0_10 = arith.constant 0 : index
    %c0_11 = arith.constant 0 : index
    %7 = vector.load %arg1[%c0_8, %c1_9, %c0_10, %c0_11] : memref<1x3x28x28xf32, #tpu.memory_space<vmem>>, vector<1x1x28x28xf32>
    %8 = vector.shape_cast %7 : vector<1x1x28x28xf32> to vector<28x28xf32>
    %c1_12 = arith.constant 1 : index
    %c1_13 = arith.constant 1 : index
    %c1_14 = arith.constant 1 : index
    %9 = vector.load %arg11[%c1_12, %c1_13, %c1_14] : memref<3x30x30xf32, #tpu.memory_space<vmem>>, vector<1x28x28xf32>
    %10 = vector.shape_cast %9 : vector<1x28x28xf32> to vector<28x28xf32>
    %11 = vector.shape_cast %8 : vector<28x28xf32> to vector<1x28x28xf32>
    tpu.vector_store %arg11[%c1_12, %c1_13, %c1_14], %11 {strides = array<i32>} : memref<3x30x30xf32, #tpu.memory_space<vmem>>, vector<1x28x28xf32>,
    %c0_15 = arith.constant 0 : index
    %c2 = arith.constant 2 : index
    %c0_16 = arith.constant 0 : index
    %c0_17 = arith.constant 0 : index
    %12 = vector.load %arg1[%c0_15, %c2, %c0_16, %c0_17] : memref<1x3x28x28xf32, #tpu.memory_space<vmem>>, vector<1x1x28x28xf32>
    %13 = vector.shape_cast %12 : vector<1x1x28x28xf32> to vector<28x28xf32>
    %c2_18 = arith.constant 2 : index
    %c1_19 = arith.constant 1 : index
    %c1_20 = arith.constant 1 : index
    %14 = vector.load %arg11[%c2_18, %c1_19, %c1_20] : memref<3x30x30xf32, #tpu.memory_space<vmem>>, vector<1x28x28xf32>
    %15 = vector.shape_cast %14 : vector<1x28x28xf32> to vector<28x28xf32>
    %16 = vector.shape_cast %13 : vector<28x28xf32> to vector<1x28x28xf32>
    tpu.vector_store %arg11[%c2_18, %c1_19, %c1_20], %16 {strides = array<i32>} : memref<3x30x30xf32, #tpu.memory_space<vmem>>, vector<1x28x28xf32>,
    %cst_21 = arith.constant 0.000000e+00 : f32
    %17 = vector.broadcast %cst_21 : f32 to vector<3x32x32xf32>
    %c0_22 = arith.constant 0 : index
    %c0_23 = arith.constant 0 : index
    %c0_24 = arith.constant 0 : index
    %18 = vector.load %arg12[%c0_22, %c0_23, %c0_24] : memref<3x32x32xf32, #tpu.memory_space<vmem>>, vector<3x32x32xf32>
    tpu.vector_store %arg12[%c0_22, %c0_23, %c0_24], %17 {strides = array<i32>} : memref<3x32x32xf32, #tpu.memory_space<vmem>>, vector<3x32x32xf32>,
    %cst_25 = arith.constant 0.000000e+00 : f32
    %19 = vector.broadcast %cst_25 : f32 to vector<28x28xf32>
    %cst_26 = arith.constant 0.000000e+00 : f32
    %20 = vector.broadcast %cst_26 : f32 to vector<28x28xf32>
    %cst_27 = arith.constant 0.000000e+00 : f32
    %21 = vector.broadcast %cst_27 : f32 to vector<28x28xf32>
    %c0_28 = arith.constant 0 : index
    %c0_29 = arith.constant 0 : index
    %c0_30 = arith.constant 0 : index
    %22 = vector.load %arg11[%c0_28, %c0_29, %c0_30] : memref<3x30x30xf32, #tpu.memory_space<vmem>>, vector<1x28x28xf32>
    %23 = vector.shape_cast %22 : vector<1x28x28xf32> to vector<28x28xf32>
    %c0_31 = arith.constant 0 : index
    %24 = memref.load %arg2[%c0_31] : memref<81xf32, #tpu.memory_space<smem>>
    %25 = vector.broadcast %24 : f32 to vector<28x28xf32>
    %26 = arith.mulf %23, %25 : vector<28x28xf32>
    %27 = arith.addf %19, %26 : vector<28x28xf32>
    %c27 = arith.constant 27 : index
    %28 = memref.load %arg2[%c27] : memref<81xf32, #tpu.memory_space<smem>>
    %29 = vector.broadcast %28 : f32 to vector<28x28xf32>
    %30 = arith.mulf %23, %29 : vector<28x28xf32>
    %31 = arith.addf %20, %30 : vector<28x28xf32>
    %c54 = arith.constant 54 : index
    %32 = memref.load %arg2[%c54] : memref<81xf32, #tpu.memory_space<smem>>
    %33 = vector.broadcast %32 : f32 to vector<28x28xf32>
    %34 = arith.mulf %23, %33 : vector<28x28xf32>
    %35 = arith.addf %21, %34 : vector<28x28xf32>
    %c0_32 = arith.constant 0 : index
    %c0_33 = arith.constant 0 : index
    %c1_34 = arith.constant 1 : index
    %36 = vector.load %arg11[%c0_32, %c0_33, %c1_34] : memref<3x30x30xf32, #tpu.memory_space<vmem>>, vector<1x28x28xf32>
    %37 = vector.shape_cast %36 : vector<1x28x28xf32> to vector<28x28xf32>
    %c1_35 = arith.constant 1 : index
    %38 = memref.load %arg2[%c1_35] : memref<81xf32, #tpu.memory_space<smem>>
    %39 = vector.broadcast %38 : f32 to vector<28x28xf32>
    %40 = arith.mulf %37, %39 : vector<28x28xf32>
    %41 = arith.addf %27, %40 : vector<28x28xf32>
    %c28 = arith.constant 28 : index
    %42 = memref.load %arg2[%c28] : memref<81xf32, #tpu.memory_space<smem>>
    %43 = vector.broadcast %42 : f32 to vector<28x28xf32>
    %44 = arith.mulf %37, %43 : vector<28x28xf32>
    %45 = arith.addf %31, %44 : vector<28x28xf32>
    %c55 = arith.constant 55 : index
    %46 = memref.load %arg2[%c55] : memref<81xf32, #tpu.memory_space<smem>>
    %47 = vector.broadcast %46 : f32 to vector<28x28xf32>
    %48 = arith.mulf %37, %47 : vector<28x28xf32>
    %49 = arith.addf %35, %48 : vector<28x28xf32>
    %c0_36 = arith.constant 0 : index
    %c0_37 = arith.constant 0 : index
    %c2_38 = arith.constant 2 : index
    %50 = vector.load %arg11[%c0_36, %c0_37, %c2_38] : memref<3x30x30xf32, #tpu.memory_space<vmem>>, vector<1x28x28xf32>
    %51 = vector.shape_cast %50 : vector<1x28x28xf32> to vector<28x28xf32>
    %c2_39 = arith.constant 2 : index
    %52 = memref.load %arg2[%c2_39] : memref<81xf32, #tpu.memory_space<smem>>
    %53 = vector.broadcast %52 : f32 to vector<28x28xf32>
    %54 = arith.mulf %51, %53 : vector<28x28xf32>
    %55 = arith.addf %41, %54 : vector<28x28xf32>
    %c29 = arith.constant 29 : index
    %56 = memref.load %arg2[%c29] : memref<81xf32, #tpu.memory_space<smem>>
    %57 = vector.broadcast %56 : f32 to vector<28x28xf32>
    %58 = arith.mulf %51, %57 : vector<28x28xf32>
    %59 = arith.addf %45, %58 : vector<28x28xf32>
    %c56 = arith.constant 56 : index
    %60 = memref.load %arg2[%c56] : memref<81xf32, #tpu.memory_space<smem>>
    %61 = vector.broadcast %60 : f32 to vector<28x28xf32>
    %62 = arith.mulf %51, %61 : vector<28x28xf32>
    %63 = arith.addf %49, %62 : vector<28x28xf32>
    %c0_40 = arith.constant 0 : index
    %c1_41 = arith.constant 1 : index
    %c0_42 = arith.constant 0 : index
    %64 = vector.load %arg11[%c0_40, %c1_41, %c0_42] : memref<3x30x30xf32, #tpu.memory_space<vmem>>, vector<1x28x28xf32>
    %65 = vector.shape_cast %64 : vector<1x28x28xf32> to vector<28x28xf32>
    %c3 = arith.constant 3 : index
    %66 = memref.load %arg2[%c3] : memref<81xf32, #tpu.memory_space<smem>>
    %67 = vector.broadcast %66 : f32 to vector<28x28xf32>
    %68 = arith.mulf %65, %67 : vector<28x28xf32>
    %69 = arith.addf %55, %68 : vector<28x28xf32>
    %c30 = arith.constant 30 : index
    %70 = memref.load %arg2[%c30] : memref<81xf32, #tpu.memory_space<smem>>
    %71 = vector.broadcast %70 : f32 to vector<28x28xf32>
    %72 = arith.mulf %65, %71 : vector<28x28xf32>
    %73 = arith.addf %59, %72 : vector<28x28xf32>
    %c57 = arith.constant 57 : index
    %74 = memref.load %arg2[%c57] : memref<81xf32, #tpu.memory_space<smem>>
    %75 = vector.broadcast %74 : f32 to vector<28x28xf32>
    %76 = arith.mulf %65, %75 : vector<28x28xf32>
    %77 = arith.addf %63, %76 : vector<28x28xf32>
    %c0_43 = arith.constant 0 : index
    %c1_44 = arith.constant 1 : index
    %c1_45 = arith.constant 1 : index
    %78 = vector.load %arg11[%c0_43, %c1_44, %c1_45] : memref<3x30x30xf32, #tpu.memory_space<vmem>>, vector<1x28x28xf32>
    %79 = vector.shape_cast %78 : vector<1x28x28xf32> to vector<28x28xf32>
    %c4 = arith.constant 4 : index
    %80 = memref.load %arg2[%c4] : memref<81xf32, #tpu.memory_space<smem>>
    %81 = vector.broadcast %80 : f32 to vector<28x28xf32>
    %82 = arith.mulf %79, %81 : vector<28x28xf32>
    %83 = arith.addf %69, %82 : vector<28x28xf32>
    %c31 = arith.constant 31 : index
    %84 = memref.load %arg2[%c31] : memref<81xf32, #tpu.memory_space<smem>>
    %85 = vector.broadcast %84 : f32 to vector<28x28xf32>
    %86 = arith.mulf %79, %85 : vector<28x28xf32>
    %87 = arith.addf %73, %86 : vector<28x28xf32>
    %c58 = arith.constant 58 : index
    %88 = memref.load %arg2[%c58] : memref<81xf32, #tpu.memory_space<smem>>
    %89 = vector.broadcast %88 : f32 to vector<28x28xf32>
    %90 = arith.mulf %79, %89 : vector<28x28xf32>
    %91 = arith.addf %77, %90 : vector<28x28xf32>
    %c0_46 = arith.constant 0 : index
    %c1_47 = arith.constant 1 : index
    %c2_48 = arith.constant 2 : index
    %92 = vector.load %arg11[%c0_46, %c1_47, %c2_48] : memref<3x30x30xf32, #tpu.memory_space<vmem>>, vector<1x28x28xf32>
    %93 = vector.shape_cast %92 : vector<1x28x28xf32> to vector<28x28xf32>
    %c5 = arith.constant 5 : index
    %94 = memref.load %arg2[%c5] : memref<81xf32, #tpu.memory_space<smem>>
    %95 = vector.broadcast %94 : f32 to vector<28x28xf32>
    %96 = arith.mulf %93, %95 : vector<28x28xf32>
    %97 = arith.addf %83, %96 : vector<28x28xf32>
    %c32 = arith.constant 32 : index
    %98 = memref.load %arg2[%c32] : memref<81xf32, #tpu.memory_space<smem>>
    %99 = vector.broadcast %98 : f32 to vector<28x28xf32>
    %100 = arith.mulf %93, %99 : vector<28x28xf32>
    %101 = arith.addf %87, %100 : vector<28x28xf32>
    %c59 = arith.constant 59 : index
    %102 = memref.load %arg2[%c59] : memref<81xf32, #tpu.memory_space<smem>>
    %103 = vector.broadcast %102 : f32 to vector<28x28xf32>
    %104 = arith.mulf %93, %103 : vector<28x28xf32>
    %105 = arith.addf %91, %104 : vector<28x28xf32>
    %c0_49 = arith.constant 0 : index
    %c2_50 = arith.constant 2 : index
    %c0_51 = arith.constant 0 : index
    %106 = vector.load %arg11[%c0_49, %c2_50, %c0_51] : memref<3x30x30xf32, #tpu.memory_space<vmem>>, vector<1x28x28xf32>
    %107 = vector.shape_cast %106 : vector<1x28x28xf32> to vector<28x28xf32>
    %c6 = arith.constant 6 : index
    %108 = memref.load %arg2[%c6] : memref<81xf32, #tpu.memory_space<smem>>
    %109 = vector.broadcast %108 : f32 to vector<28x28xf32>
    %110 = arith.mulf %107, %109 : vector<28x28xf32>
    %111 = arith.addf %97, %110 : vector<28x28xf32>
    %c33 = arith.constant 33 : index
    %112 = memref.load %arg2[%c33] : memref<81xf32, #tpu.memory_space<smem>>
    %113 = vector.broadcast %112 : f32 to vector<28x28xf32>
    %114 = arith.mulf %107, %113 : vector<28x28xf32>
    %115 = arith.addf %101, %114 : vector<28x28xf32>
    %c60 = arith.constant 60 : index
    %116 = memref.load %arg2[%c60] : memref<81xf32, #tpu.memory_space<smem>>
    %117 = vector.broadcast %116 : f32 to vector<28x28xf32>
    %118 = arith.mulf %107, %117 : vector<28x28xf32>
    %119 = arith.addf %105, %118 : vector<28x28xf32>
    %c0_52 = arith.constant 0 : index
    %c2_53 = arith.constant 2 : index
    %c1_54 = arith.constant 1 : index
    %120 = vector.load %arg11[%c0_52, %c2_53, %c1_54] : memref<3x30x30xf32, #tpu.memory_space<vmem>>, vector<1x28x28xf32>
    %121 = vector.shape_cast %120 : vector<1x28x28xf32> to vector<28x28xf32>
    %c7 = arith.constant 7 : index
    %122 = memref.load %arg2[%c7] : memref<81xf32, #tpu.memory_space<smem>>
    %123 = vector.broadcast %122 : f32 to vector<28x28xf32>
    %124 = arith.mulf %121, %123 : vector<28x28xf32>
    %125 = arith.addf %111, %124 : vector<28x28xf32>
    %c34 = arith.constant 34 : index
    %126 = memref.load %arg2[%c34] : memref<81xf32, #tpu.memory_space<smem>>
    %127 = vector.broadcast %126 : f32 to vector<28x28xf32>
    %128 = arith.mulf %121, %127 : vector<28x28xf32>
    %129 = arith.addf %115, %128 : vector<28x28xf32>
    %c61 = arith.constant 61 : index
    %130 = memref.load %arg2[%c61] : memref<81xf32, #tpu.memory_space<smem>>
    %131 = vector.broadcast %130 : f32 to vector<28x28xf32>
    %132 = arith.mulf %121, %131 : vector<28x28xf32>
    %133 = arith.addf %119, %132 : vector<28x28xf32>
    %c0_55 = arith.constant 0 : index
    %c2_56 = arith.constant 2 : index
    %c2_57 = arith.constant 2 : index
    %134 = vector.load %arg11[%c0_55, %c2_56, %c2_57] : memref<3x30x30xf32, #tpu.memory_space<vmem>>, vector<1x28x28xf32>
    %135 = vector.shape_cast %134 : vector<1x28x28xf32> to vector<28x28xf32>
    %c8 = arith.constant 8 : index
    %136 = memref.load %arg2[%c8] : memref<81xf32, #tpu.memory_space<smem>>
    %137 = vector.broadcast %136 : f32 to vector<28x28xf32>
    %138 = arith.mulf %135, %137 : vector<28x28xf32>
    %139 = arith.addf %125, %138 : vector<28x28xf32>
    %c35 = arith.constant 35 : index
    %140 = memref.load %arg2[%c35] : memref<81xf32, #tpu.memory_space<smem>>
    %141 = vector.broadcast %140 : f32 to vector<28x28xf32>
    %142 = arith.mulf %135, %141 : vector<28x28xf32>
    %143 = arith.addf %129, %142 : vector<28x28xf32>
    %c62 = arith.constant 62 : index
    %144 = memref.load %arg2[%c62] : memref<81xf32, #tpu.memory_space<smem>>
    %145 = vector.broadcast %144 : f32 to vector<28x28xf32>
    %146 = arith.mulf %135, %145 : vector<28x28xf32>
    %147 = arith.addf %133, %146 : vector<28x28xf32>
    %c1_58 = arith.constant 1 : index
    %c0_59 = arith.constant 0 : index
    %c0_60 = arith.constant 0 : index
    %148 = vector.load %arg11[%c1_58, %c0_59, %c0_60] : memref<3x30x30xf32, #tpu.memory_space<vmem>>, vector<1x28x28xf32>
    %149 = vector.shape_cast %148 : vector<1x28x28xf32> to vector<28x28xf32>
    %c9 = arith.constant 9 : index
    %150 = memref.load %arg2[%c9] : memref<81xf32, #tpu.memory_space<smem>>
    %151 = vector.broadcast %150 : f32 to vector<28x28xf32>
    %152 = arith.mulf %149, %151 : vector<28x28xf32>
    %153 = arith.addf %139, %152 : vector<28x28xf32>
    %c36 = arith.constant 36 : index
    %154 = memref.load %arg2[%c36] : memref<81xf32, #tpu.memory_space<smem>>
    %155 = vector.broadcast %154 : f32 to vector<28x28xf32>
    %156 = arith.mulf %149, %155 : vector<28x28xf32>
    %157 = arith.addf %143, %156 : vector<28x28xf32>
    %c63 = arith.constant 63 : index
    %158 = memref.load %arg2[%c63] : memref<81xf32, #tpu.memory_space<smem>>
    %159 = vector.broadcast %158 : f32 to vector<28x28xf32>
    %160 = arith.mulf %149, %159 : vector<28x28xf32>
    %161 = arith.addf %147, %160 : vector<28x28xf32>
    %c1_61 = arith.constant 1 : index
    %c0_62 = arith.constant 0 : index
    %c1_63 = arith.constant 1 : index
    %162 = vector.load %arg11[%c1_61, %c0_62, %c1_63] : memref<3x30x30xf32, #tpu.memory_space<vmem>>, vector<1x28x28xf32>
    %163 = vector.shape_cast %162 : vector<1x28x28xf32> to vector<28x28xf32>
    %c10 = arith.constant 10 : index
    %164 = memref.load %arg2[%c10] : memref<81xf32, #tpu.memory_space<smem>>
    %165 = vector.broadcast %164 : f32 to vector<28x28xf32>
    %166 = arith.mulf %163, %165 : vector<28x28xf32>
    %167 = arith.addf %153, %166 : vector<28x28xf32>
    %c37 = arith.constant 37 : index
    %168 = memref.load %arg2[%c37] : memref<81xf32, #tpu.memory_space<smem>>
    %169 = vector.broadcast %168 : f32 to vector<28x28xf32>
    %170 = arith.mulf %163, %169 : vector<28x28xf32>
    %171 = arith.addf %157, %170 : vector<28x28xf32>
    %c64 = arith.constant 64 : index
    %172 = memref.load %arg2[%c64] : memref<81xf32, #tpu.memory_space<smem>>
    %173 = vector.broadcast %172 : f32 to vector<28x28xf32>
    %174 = arith.mulf %163, %173 : vector<28x28xf32>
    %175 = arith.addf %161, %174 : vector<28x28xf32>
    %c1_64 = arith.constant 1 : index
    %c0_65 = arith.constant 0 : index
    %c2_66 = arith.constant 2 : index
    %176 = vector.load %arg11[%c1_64, %c0_65, %c2_66] : memref<3x30x30xf32, #tpu.memory_space<vmem>>, vector<1x28x28xf32>
    %177 = vector.shape_cast %176 : vector<1x28x28xf32> to vector<28x28xf32>
    %c11 = arith.constant 11 : index
    %178 = memref.load %arg2[%c11] : memref<81xf32, #tpu.memory_space<smem>>
    %179 = vector.broadcast %178 : f32 to vector<28x28xf32>
    %180 = arith.mulf %177, %179 : vector<28x28xf32>
    %181 = arith.addf %167, %180 : vector<28x28xf32>
    %c38 = arith.constant 38 : index
    %182 = memref.load %arg2[%c38] : memref<81xf32, #tpu.memory_space<smem>>
    %183 = vector.broadcast %182 : f32 to vector<28x28xf32>
    %184 = arith.mulf %177, %183 : vector<28x28xf32>
    %185 = arith.addf %171, %184 : vector<28x28xf32>
    %c65 = arith.constant 65 : index
    %186 = memref.load %arg2[%c65] : memref<81xf32, #tpu.memory_space<smem>>
    %187 = vector.broadcast %186 : f32 to vector<28x28xf32>
    %188 = arith.mulf %177, %187 : vector<28x28xf32>
    %189 = arith.addf %175, %188 : vector<28x28xf32>
    %c1_67 = arith.constant 1 : index
    %c1_68 = arith.constant 1 : index
    %c0_69 = arith.constant 0 : index
    %190 = vector.load %arg11[%c1_67, %c1_68, %c0_69] : memref<3x30x30xf32, #tpu.memory_space<vmem>>, vector<1x28x28xf32>
    %191 = vector.shape_cast %190 : vector<1x28x28xf32> to vector<28x28xf32>
    %c12 = arith.constant 12 : index
    %192 = memref.load %arg2[%c12] : memref<81xf32, #tpu.memory_space<smem>>
    %193 = vector.broadcast %192 : f32 to vector<28x28xf32>
    %194 = arith.mulf %191, %193 : vector<28x28xf32>
    %195 = arith.addf %181, %194 : vector<28x28xf32>
    %c39 = arith.constant 39 : index
    %196 = memref.load %arg2[%c39] : memref<81xf32, #tpu.memory_space<smem>>
    %197 = vector.broadcast %196 : f32 to vector<28x28xf32>
    %198 = arith.mulf %191, %197 : vector<28x28xf32>
    %199 = arith.addf %185, %198 : vector<28x28xf32>
    %c66 = arith.constant 66 : index
    %200 = memref.load %arg2[%c66] : memref<81xf32, #tpu.memory_space<smem>>
    %201 = vector.broadcast %200 : f32 to vector<28x28xf32>
    %202 = arith.mulf %191, %201 : vector<28x28xf32>
    %203 = arith.addf %189, %202 : vector<28x28xf32>
    %c1_70 = arith.constant 1 : index
    %c1_71 = arith.constant 1 : index
    %c1_72 = arith.constant 1 : index
    %204 = vector.load %arg11[%c1_70, %c1_71, %c1_72] : memref<3x30x30xf32, #tpu.memory_space<vmem>>, vector<1x28x28xf32>
    %205 = vector.shape_cast %204 : vector<1x28x28xf32> to vector<28x28xf32>
    %c13 = arith.constant 13 : index
    %206 = memref.load %arg2[%c13] : memref<81xf32, #tpu.memory_space<smem>>
    %207 = vector.broadcast %206 : f32 to vector<28x28xf32>
    %208 = arith.mulf %205, %207 : vector<28x28xf32>
    %209 = arith.addf %195, %208 : vector<28x28xf32>
    %c40 = arith.constant 40 : index
    %210 = memref.load %arg2[%c40] : memref<81xf32, #tpu.memory_space<smem>>
    %211 = vector.broadcast %210 : f32 to vector<28x28xf32>
    %212 = arith.mulf %205, %211 : vector<28x28xf32>
    %213 = arith.addf %199, %212 : vector<28x28xf32>
    %c67 = arith.constant 67 : index
    %214 = memref.load %arg2[%c67] : memref<81xf32, #tpu.memory_space<smem>>
    %215 = vector.broadcast %214 : f32 to vector<28x28xf32>
    %216 = arith.mulf %205, %215 : vector<28x28xf32>
    %217 = arith.addf %203, %216 : vector<28x28xf32>
    %c1_73 = arith.constant 1 : index
    %c1_74 = arith.constant 1 : index
    %c2_75 = arith.constant 2 : index
    %218 = vector.load %arg11[%c1_73, %c1_74, %c2_75] : memref<3x30x30xf32, #tpu.memory_space<vmem>>, vector<1x28x28xf32>
    %219 = vector.shape_cast %218 : vector<1x28x28xf32> to vector<28x28xf32>
    %c14 = arith.constant 14 : index
    %220 = memref.load %arg2[%c14] : memref<81xf32, #tpu.memory_space<smem>>
    %221 = vector.broadcast %220 : f32 to vector<28x28xf32>
    %222 = arith.mulf %219, %221 : vector<28x28xf32>
    %223 = arith.addf %209, %222 : vector<28x28xf32>
    %c41 = arith.constant 41 : index
    %224 = memref.load %arg2[%c41] : memref<81xf32, #tpu.memory_space<smem>>
    %225 = vector.broadcast %224 : f32 to vector<28x28xf32>
    %226 = arith.mulf %219, %225 : vector<28x28xf32>
    %227 = arith.addf %213, %226 : vector<28x28xf32>
    %c68 = arith.constant 68 : index
    %228 = memref.load %arg2[%c68] : memref<81xf32, #tpu.memory_space<smem>>
    %229 = vector.broadcast %228 : f32 to vector<28x28xf32>
    %230 = arith.mulf %219, %229 : vector<28x28xf32>
    %231 = arith.addf %217, %230 : vector<28x28xf32>
    %c1_76 = arith.constant 1 : index
    %c2_77 = arith.constant 2 : index
    %c0_78 = arith.constant 0 : index
    %232 = vector.load %arg11[%c1_76, %c2_77, %c0_78] : memref<3x30x30xf32, #tpu.memory_space<vmem>>, vector<1x28x28xf32>
    %233 = vector.shape_cast %232 : vector<1x28x28xf32> to vector<28x28xf32>
    %c15 = arith.constant 15 : index
    %234 = memref.load %arg2[%c15] : memref<81xf32, #tpu.memory_space<smem>>
    %235 = vector.broadcast %234 : f32 to vector<28x28xf32>
    %236 = arith.mulf %233, %235 : vector<28x28xf32>
    %237 = arith.addf %223, %236 : vector<28x28xf32>
    %c42 = arith.constant 42 : index
    %238 = memref.load %arg2[%c42] : memref<81xf32, #tpu.memory_space<smem>>
    %239 = vector.broadcast %238 : f32 to vector<28x28xf32>
    %240 = arith.mulf %233, %239 : vector<28x28xf32>
    %241 = arith.addf %227, %240 : vector<28x28xf32>
    %c69 = arith.constant 69 : index
    %242 = memref.load %arg2[%c69] : memref<81xf32, #tpu.memory_space<smem>>
    %243 = vector.broadcast %242 : f32 to vector<28x28xf32>
    %244 = arith.mulf %233, %243 : vector<28x28xf32>
    %245 = arith.addf %231, %244 : vector<28x28xf32>
    %c1_79 = arith.constant 1 : index
    %c2_80 = arith.constant 2 : index
    %c1_81 = arith.constant 1 : index
    %246 = vector.load %arg11[%c1_79, %c2_80, %c1_81] : memref<3x30x30xf32, #tpu.memory_space<vmem>>, vector<1x28x28xf32>
    %247 = vector.shape_cast %246 : vector<1x28x28xf32> to vector<28x28xf32>
    %c16 = arith.constant 16 : index
    %248 = memref.load %arg2[%c16] : memref<81xf32, #tpu.memory_space<smem>>
    %249 = vector.broadcast %248 : f32 to vector<28x28xf32>
    %250 = arith.mulf %247, %249 : vector<28x28xf32>
    %251 = arith.addf %237, %250 : vector<28x28xf32>
    %c43 = arith.constant 43 : index
    %252 = memref.load %arg2[%c43] : memref<81xf32, #tpu.memory_space<smem>>
    %253 = vector.broadcast %252 : f32 to vector<28x28xf32>
    %254 = arith.mulf %247, %253 : vector<28x28xf32>
    %255 = arith.addf %241, %254 : vector<28x28xf32>
    %c70 = arith.constant 70 : index
    %256 = memref.load %arg2[%c70] : memref<81xf32, #tpu.memory_space<smem>>
    %257 = vector.broadcast %256 : f32 to vector<28x28xf32>
    %258 = arith.mulf %247, %257 : vector<28x28xf32>
    %259 = arith.addf %245, %258 : vector<28x28xf32>
    %c1_82 = arith.constant 1 : index
    %c2_83 = arith.constant 2 : index
    %c2_84 = arith.constant 2 : index
    %260 = vector.load %arg11[%c1_82, %c2_83, %c2_84] : memref<3x30x30xf32, #tpu.memory_space<vmem>>, vector<1x28x28xf32>
    %261 = vector.shape_cast %260 : vector<1x28x28xf32> to vector<28x28xf32>
    %c17 = arith.constant 17 : index
    %262 = memref.load %arg2[%c17] : memref<81xf32, #tpu.memory_space<smem>>
    %263 = vector.broadcast %262 : f32 to vector<28x28xf32>
    %264 = arith.mulf %261, %263 : vector<28x28xf32>
    %265 = arith.addf %251, %264 : vector<28x28xf32>
    %c44 = arith.constant 44 : index
    %266 = memref.load %arg2[%c44] : memref<81xf32, #tpu.memory_space<smem>>
    %267 = vector.broadcast %266 : f32 to vector<28x28xf32>
    %268 = arith.mulf %261, %267 : vector<28x28xf32>
    %269 = arith.addf %255, %268 : vector<28x28xf32>
    %c71 = arith.constant 71 : index
    %270 = memref.load %arg2[%c71] : memref<81xf32, #tpu.memory_space<smem>>
    %271 = vector.broadcast %270 : f32 to vector<28x28xf32>
    %272 = arith.mulf %261, %271 : vector<28x28xf32>
    %273 = arith.addf %259, %272 : vector<28x28xf32>
    %c2_85 = arith.constant 2 : index
    %c0_86 = arith.constant 0 : index
    %c0_87 = arith.constant 0 : index
    %274 = vector.load %arg11[%c2_85, %c0_86, %c0_87] : memref<3x30x30xf32, #tpu.memory_space<vmem>>, vector<1x28x28xf32>
    %275 = vector.shape_cast %274 : vector<1x28x28xf32> to vector<28x28xf32>
    %c18 = arith.constant 18 : index
    %276 = memref.load %arg2[%c18] : memref<81xf32, #tpu.memory_space<smem>>
    %277 = vector.broadcast %276 : f32 to vector<28x28xf32>
    %278 = arith.mulf %275, %277 : vector<28x28xf32>
    %279 = arith.addf %265, %278 : vector<28x28xf32>
    %c45 = arith.constant 45 : index
    %280 = memref.load %arg2[%c45] : memref<81xf32, #tpu.memory_space<smem>>
    %281 = vector.broadcast %280 : f32 to vector<28x28xf32>
    %282 = arith.mulf %275, %281 : vector<28x28xf32>
    %283 = arith.addf %269, %282 : vector<28x28xf32>
    %c72 = arith.constant 72 : index
    %284 = memref.load %arg2[%c72] : memref<81xf32, #tpu.memory_space<smem>>
    %285 = vector.broadcast %284 : f32 to vector<28x28xf32>
    %286 = arith.mulf %275, %285 : vector<28x28xf32>
    %287 = arith.addf %273, %286 : vector<28x28xf32>
    %c2_88 = arith.constant 2 : index
    %c0_89 = arith.constant 0 : index
    %c1_90 = arith.constant 1 : index
    %288 = vector.load %arg11[%c2_88, %c0_89, %c1_90] : memref<3x30x30xf32, #tpu.memory_space<vmem>>, vector<1x28x28xf32>
    %289 = vector.shape_cast %288 : vector<1x28x28xf32> to vector<28x28xf32>
    %c19 = arith.constant 19 : index
    %290 = memref.load %arg2[%c19] : memref<81xf32, #tpu.memory_space<smem>>
    %291 = vector.broadcast %290 : f32 to vector<28x28xf32>
    %292 = arith.mulf %289, %291 : vector<28x28xf32>
    %293 = arith.addf %279, %292 : vector<28x28xf32>
    %c46 = arith.constant 46 : index
    %294 = memref.load %arg2[%c46] : memref<81xf32, #tpu.memory_space<smem>>
    %295 = vector.broadcast %294 : f32 to vector<28x28xf32>
    %296 = arith.mulf %289, %295 : vector<28x28xf32>
    %297 = arith.addf %283, %296 : vector<28x28xf32>
    %c73 = arith.constant 73 : index
    %298 = memref.load %arg2[%c73] : memref<81xf32, #tpu.memory_space<smem>>
    %299 = vector.broadcast %298 : f32 to vector<28x28xf32>
    %300 = arith.mulf %289, %299 : vector<28x28xf32>
    %301 = arith.addf %287, %300 : vector<28x28xf32>
    %c2_91 = arith.constant 2 : index
    %c0_92 = arith.constant 0 : index
    %c2_93 = arith.constant 2 : index
    %302 = vector.load %arg11[%c2_91, %c0_92, %c2_93] : memref<3x30x30xf32, #tpu.memory_space<vmem>>, vector<1x28x28xf32>
    %303 = vector.shape_cast %302 : vector<1x28x28xf32> to vector<28x28xf32>
    %c20 = arith.constant 20 : index
    %304 = memref.load %arg2[%c20] : memref<81xf32, #tpu.memory_space<smem>>
    %305 = vector.broadcast %304 : f32 to vector<28x28xf32>
    %306 = arith.mulf %303, %305 : vector<28x28xf32>
    %307 = arith.addf %293, %306 : vector<28x28xf32>
    %c47 = arith.constant 47 : index
    %308 = memref.load %arg2[%c47] : memref<81xf32, #tpu.memory_space<smem>>
    %309 = vector.broadcast %308 : f32 to vector<28x28xf32>
    %310 = arith.mulf %303, %309 : vector<28x28xf32>
    %311 = arith.addf %297, %310 : vector<28x28xf32>
    %c74 = arith.constant 74 : index
    %312 = memref.load %arg2[%c74] : memref<81xf32, #tpu.memory_space<smem>>
    %313 = vector.broadcast %312 : f32 to vector<28x28xf32>
    %314 = arith.mulf %303, %313 : vector<28x28xf32>
    %315 = arith.addf %301, %314 : vector<28x28xf32>
    %c2_94 = arith.constant 2 : index
    %c1_95 = arith.constant 1 : index
    %c0_96 = arith.constant 0 : index
    %316 = vector.load %arg11[%c2_94, %c1_95, %c0_96] : memref<3x30x30xf32, #tpu.memory_space<vmem>>, vector<1x28x28xf32>
    %317 = vector.shape_cast %316 : vector<1x28x28xf32> to vector<28x28xf32>
    %c21 = arith.constant 21 : index
    %318 = memref.load %arg2[%c21] : memref<81xf32, #tpu.memory_space<smem>>
    %319 = vector.broadcast %318 : f32 to vector<28x28xf32>
    %320 = arith.mulf %317, %319 : vector<28x28xf32>
    %321 = arith.addf %307, %320 : vector<28x28xf32>
    %c48 = arith.constant 48 : index
    %322 = memref.load %arg2[%c48] : memref<81xf32, #tpu.memory_space<smem>>
    %323 = vector.broadcast %322 : f32 to vector<28x28xf32>
    %324 = arith.mulf %317, %323 : vector<28x28xf32>
    %325 = arith.addf %311, %324 : vector<28x28xf32>
    %c75 = arith.constant 75 : index
    %326 = memref.load %arg2[%c75] : memref<81xf32, #tpu.memory_space<smem>>
    %327 = vector.broadcast %326 : f32 to vector<28x28xf32>
    %328 = arith.mulf %317, %327 : vector<28x28xf32>
    %329 = arith.addf %315, %328 : vector<28x28xf32>
    %c2_97 = arith.constant 2 : index
    %c1_98 = arith.constant 1 : index
    %c1_99 = arith.constant 1 : index
    %330 = vector.load %arg11[%c2_97, %c1_98, %c1_99] : memref<3x30x30xf32, #tpu.memory_space<vmem>>, vector<1x28x28xf32>
    %331 = vector.shape_cast %330 : vector<1x28x28xf32> to vector<28x28xf32>
    %c22 = arith.constant 22 : index
    %332 = memref.load %arg2[%c22] : memref<81xf32, #tpu.memory_space<smem>>
    %333 = vector.broadcast %332 : f32 to vector<28x28xf32>
    %334 = arith.mulf %331, %333 : vector<28x28xf32>
    %335 = arith.addf %321, %334 : vector<28x28xf32>
    %c49 = arith.constant 49 : index
    %336 = memref.load %arg2[%c49] : memref<81xf32, #tpu.memory_space<smem>>
    %337 = vector.broadcast %336 : f32 to vector<28x28xf32>
    %338 = arith.mulf %331, %337 : vector<28x28xf32>
    %339 = arith.addf %325, %338 : vector<28x28xf32>
    %c76 = arith.constant 76 : index
    %340 = memref.load %arg2[%c76] : memref<81xf32, #tpu.memory_space<smem>>
    %341 = vector.broadcast %340 : f32 to vector<28x28xf32>
    %342 = arith.mulf %331, %341 : vector<28x28xf32>
    %343 = arith.addf %329, %342 : vector<28x28xf32>
    %c2_100 = arith.constant 2 : index
    %c1_101 = arith.constant 1 : index
    %c2_102 = arith.constant 2 : index
    %344 = vector.load %arg11[%c2_100, %c1_101, %c2_102] : memref<3x30x30xf32, #tpu.memory_space<vmem>>, vector<1x28x28xf32>
    %345 = vector.shape_cast %344 : vector<1x28x28xf32> to vector<28x28xf32>
    %c23 = arith.constant 23 : index
    %346 = memref.load %arg2[%c23] : memref<81xf32, #tpu.memory_space<smem>>
    %347 = vector.broadcast %346 : f32 to vector<28x28xf32>
    %348 = arith.mulf %345, %347 : vector<28x28xf32>
    %349 = arith.addf %335, %348 : vector<28x28xf32>
    %c50 = arith.constant 50 : index
    %350 = memref.load %arg2[%c50] : memref<81xf32, #tpu.memory_space<smem>>
    %351 = vector.broadcast %350 : f32 to vector<28x28xf32>
    %352 = arith.mulf %345, %351 : vector<28x28xf32>
    %353 = arith.addf %339, %352 : vector<28x28xf32>
    %c77 = arith.constant 77 : index
    %354 = memref.load %arg2[%c77] : memref<81xf32, #tpu.memory_space<smem>>
    %355 = vector.broadcast %354 : f32 to vector<28x28xf32>
    %356 = arith.mulf %345, %355 : vector<28x28xf32>
    %357 = arith.addf %343, %356 : vector<28x28xf32>
    %c2_103 = arith.constant 2 : index
    %c2_104 = arith.constant 2 : index
    %c0_105 = arith.constant 0 : index
    %358 = vector.load %arg11[%c2_103, %c2_104, %c0_105] : memref<3x30x30xf32, #tpu.memory_space<vmem>>, vector<1x28x28xf32>
    %359 = vector.shape_cast %358 : vector<1x28x28xf32> to vector<28x28xf32>
    %c24 = arith.constant 24 : index
    %360 = memref.load %arg2[%c24] : memref<81xf32, #tpu.memory_space<smem>>
    %361 = vector.broadcast %360 : f32 to vector<28x28xf32>
    %362 = arith.mulf %359, %361 : vector<28x28xf32>
    %363 = arith.addf %349, %362 : vector<28x28xf32>
    %c51 = arith.constant 51 : index
    %364 = memref.load %arg2[%c51] : memref<81xf32, #tpu.memory_space<smem>>
    %365 = vector.broadcast %364 : f32 to vector<28x28xf32>
    %366 = arith.mulf %359, %365 : vector<28x28xf32>
    %367 = arith.addf %353, %366 : vector<28x28xf32>
    %c78 = arith.constant 78 : index
    %368 = memref.load %arg2[%c78] : memref<81xf32, #tpu.memory_space<smem>>
    %369 = vector.broadcast %368 : f32 to vector<28x28xf32>
    %370 = arith.mulf %359, %369 : vector<28x28xf32>
    %371 = arith.addf %357, %370 : vector<28x28xf32>
    %c2_106 = arith.constant 2 : index
    %c2_107 = arith.constant 2 : index
    %c1_108 = arith.constant 1 : index
    %372 = vector.load %arg11[%c2_106, %c2_107, %c1_108] : memref<3x30x30xf32, #tpu.memory_space<vmem>>, vector<1x28x28xf32>
    %373 = vector.shape_cast %372 : vector<1x28x28xf32> to vector<28x28xf32>
    %c25 = arith.constant 25 : index
    %374 = memref.load %arg2[%c25] : memref<81xf32, #tpu.memory_space<smem>>
    %375 = vector.broadcast %374 : f32 to vector<28x28xf32>
    %376 = arith.mulf %373, %375 : vector<28x28xf32>
    %377 = arith.addf %363, %376 : vector<28x28xf32>
    %c52 = arith.constant 52 : index
    %378 = memref.load %arg2[%c52] : memref<81xf32, #tpu.memory_space<smem>>
    %379 = vector.broadcast %378 : f32 to vector<28x28xf32>
    %380 = arith.mulf %373, %379 : vector<28x28xf32>
    %381 = arith.addf %367, %380 : vector<28x28xf32>
    %c79 = arith.constant 79 : index
    %382 = memref.load %arg2[%c79] : memref<81xf32, #tpu.memory_space<smem>>
    %383 = vector.broadcast %382 : f32 to vector<28x28xf32>
    %384 = arith.mulf %373, %383 : vector<28x28xf32>
    %385 = arith.addf %371, %384 : vector<28x28xf32>
    %c2_109 = arith.constant 2 : index
    %c2_110 = arith.constant 2 : index
    %c2_111 = arith.constant 2 : index
    %386 = vector.load %arg11[%c2_109, %c2_110, %c2_111] : memref<3x30x30xf32, #tpu.memory_space<vmem>>, vector<1x28x28xf32>
    %387 = vector.shape_cast %386 : vector<1x28x28xf32> to vector<28x28xf32>
    %c26 = arith.constant 26 : index
    %388 = memref.load %arg2[%c26] : memref<81xf32, #tpu.memory_space<smem>>
    %389 = vector.broadcast %388 : f32 to vector<28x28xf32>
    %390 = arith.mulf %387, %389 : vector<28x28xf32>
    %391 = arith.addf %377, %390 : vector<28x28xf32>
    %c53 = arith.constant 53 : index
    %392 = memref.load %arg2[%c53] : memref<81xf32, #tpu.memory_space<smem>>
    %393 = vector.broadcast %392 : f32 to vector<28x28xf32>
    %394 = arith.mulf %387, %393 : vector<28x28xf32>
    %395 = arith.addf %381, %394 : vector<28x28xf32>
    %c80 = arith.constant 80 : index
    %396 = memref.load %arg2[%c80] : memref<81xf32, #tpu.memory_space<smem>>
    %397 = vector.broadcast %396 : f32 to vector<28x28xf32>
    %398 = arith.mulf %387, %397 : vector<28x28xf32>
    %399 = arith.addf %385, %398 : vector<28x28xf32>
    %c0_112 = arith.constant 0 : index
    %400 = memref.load %arg3[%c0_112] : memref<3xf32, #tpu.memory_space<smem>>
    %401 = vector.broadcast %400 : f32 to vector<28x28xf32>
    %402 = arith.addf %391, %401 : vector<28x28xf32>
    %cst_113 = arith.constant 0.000000e+00 : f32
    %403 = vector.broadcast %cst_113 : f32 to vector<28x28xf32>
    %404 = arith.subf %403, %402 : vector<28x28xf32>
    %405 = math.exp %404 : vector<28x28xf32>
    %cst_114 = arith.constant 1.000000e+00 : f32
    %406 = vector.broadcast %cst_114 : f32 to vector<28x28xf32>
    %407 = arith.addf %406, %405 : vector<28x28xf32>
    %cst_115 = arith.constant 1.000000e+00 : f32
    %408 = vector.broadcast %cst_115 : f32 to vector<28x28xf32>
    %409 = arith.divf %408, %407 : vector<28x28xf32>
    %c0_116 = arith.constant 0 : index
    %c2_117 = arith.constant 2 : index
    %c2_118 = arith.constant 2 : index
    %410 = vector.load %arg12[%c0_116, %c2_117, %c2_118] : memref<3x32x32xf32, #tpu.memory_space<vmem>>, vector<1x28x28xf32>
    %411 = vector.shape_cast %410 : vector<1x28x28xf32> to vector<28x28xf32>
    %412 = vector.shape_cast %409 : vector<28x28xf32> to vector<1x28x28xf32>
    tpu.vector_store %arg12[%c0_116, %c2_117, %c2_118], %412 {strides = array<i32>} : memref<3x32x32xf32, #tpu.memory_space<vmem>>, vector<1x28x28xf32>,
    %c0_119 = arith.constant 0 : index
    %c2_120 = arith.constant 2 : index
    %c2_121 = arith.constant 2 : index
    %413 = vector.load %arg12[%c0_119, %c2_120, %c2_121] : memref<3x32x32xf32, #tpu.memory_space<vmem>>, vector<1x28x28xf32>
    %414 = vector.shape_cast %413 : vector<1x28x28xf32> to vector<28x28xf32>
    %c0_122 = arith.constant 0 : index
    %c2_123 = arith.constant 2 : index
    %c3_124 = arith.constant 3 : index
    %415 = vector.load %arg12[%c0_122, %c2_123, %c3_124] : memref<3x32x32xf32, #tpu.memory_space<vmem>>, vector<1x28x28xf32>
    %416 = vector.shape_cast %415 : vector<1x28x28xf32> to vector<28x28xf32>
    %c0_125 = arith.constant 0 : index
    %c3_126 = arith.constant 3 : index
    %c2_127 = arith.constant 2 : index
    %417 = vector.load %arg12[%c0_125, %c3_126, %c2_127] : memref<3x32x32xf32, #tpu.memory_space<vmem>>, vector<1x28x28xf32>
    %418 = vector.shape_cast %417 : vector<1x28x28xf32> to vector<28x28xf32>
    %c0_128 = arith.constant 0 : index
    %c3_129 = arith.constant 3 : index
    %c3_130 = arith.constant 3 : index
    %419 = vector.load %arg12[%c0_128, %c3_129, %c3_130] : memref<3x32x32xf32, #tpu.memory_space<vmem>>, vector<1x28x28xf32>
    %420 = vector.shape_cast %419 : vector<1x28x28xf32> to vector<28x28xf32>
    %421 = arith.maximumf %414, %416 : vector<28x28xf32>
    %422 = arith.maximumf %418, %420 : vector<28x28xf32>
    %423 = arith.maximumf %421, %422 : vector<28x28xf32>
    %c0_131 = arith.constant 0 : index
    %c2_132 = arith.constant 2 : index
    %c2_133 = arith.constant 2 : index
    %424 = vector.load %arg12[%c0_131, %c2_132, %c2_133] : memref<3x32x32xf32, #tpu.memory_space<vmem>>, vector<1x28x28xf32>
    %425 = vector.shape_cast %424 : vector<1x28x28xf32> to vector<28x28xf32>
    %426 = vector.shape_cast %423 : vector<28x28xf32> to vector<1x28x28xf32>
    tpu.vector_store %arg12[%c0_131, %c2_132, %c2_133], %426 {strides = array<i32>} : memref<3x32x32xf32, #tpu.memory_space<vmem>>, vector<1x28x28xf32>,
    %c1_134 = arith.constant 1 : index
    %427 = memref.load %arg3[%c1_134] : memref<3xf32, #tpu.memory_space<smem>>
    %428 = vector.broadcast %427 : f32 to vector<28x28xf32>
    %429 = arith.addf %395, %428 : vector<28x28xf32>
    %cst_135 = arith.constant 0.000000e+00 : f32
    %430 = vector.broadcast %cst_135 : f32 to vector<28x28xf32>
    %431 = arith.subf %430, %429 : vector<28x28xf32>
    %432 = math.exp %431 : vector<28x28xf32>
    %cst_136 = arith.constant 1.000000e+00 : f32
    %433 = vector.broadcast %cst_136 : f32 to vector<28x28xf32>
    %434 = arith.addf %433, %432 : vector<28x28xf32>
    %cst_137 = arith.constant 1.000000e+00 : f32
    %435 = vector.broadcast %cst_137 : f32 to vector<28x28xf32>
    %436 = arith.divf %435, %434 : vector<28x28xf32>
    %c1_138 = arith.constant 1 : index
    %c2_139 = arith.constant 2 : index
    %c2_140 = arith.constant 2 : index
    %437 = vector.load %arg12[%c1_138, %c2_139, %c2_140] : memref<3x32x32xf32, #tpu.memory_space<vmem>>, vector<1x28x28xf32>
    %438 = vector.shape_cast %437 : vector<1x28x28xf32> to vector<28x28xf32>
    %439 = vector.shape_cast %436 : vector<28x28xf32> to vector<1x28x28xf32>
    tpu.vector_store %arg12[%c1_138, %c2_139, %c2_140], %439 {strides = array<i32>} : memref<3x32x32xf32, #tpu.memory_space<vmem>>, vector<1x28x28xf32>,
    %c1_141 = arith.constant 1 : index
    %c2_142 = arith.constant 2 : index
    %c2_143 = arith.constant 2 : index
    %440 = vector.load %arg12[%c1_141, %c2_142, %c2_143] : memref<3x32x32xf32, #tpu.memory_space<vmem>>, vector<1x28x28xf32>
    %441 = vector.shape_cast %440 : vector<1x28x28xf32> to vector<28x28xf32>
    %c1_144 = arith.constant 1 : index
    %c2_145 = arith.constant 2 : index
    %c3_146 = arith.constant 3 : index
    %442 = vector.load %arg12[%c1_144, %c2_145, %c3_146] : memref<3x32x32xf32, #tpu.memory_space<vmem>>, vector<1x28x28xf32>
    %443 = vector.shape_cast %442 : vector<1x28x28xf32> to vector<28x28xf32>
    %c1_147 = arith.constant 1 : index
    %c3_148 = arith.constant 3 : index
    %c2_149 = arith.constant 2 : index
    %444 = vector.load %arg12[%c1_147, %c3_148, %c2_149] : memref<3x32x32xf32, #tpu.memory_space<vmem>>, vector<1x28x28xf32>
    %445 = vector.shape_cast %444 : vector<1x28x28xf32> to vector<28x28xf32>
    %c1_150 = arith.constant 1 : index
    %c3_151 = arith.constant 3 : index
    %c3_152 = arith.constant 3 : index
    %446 = vector.load %arg12[%c1_150, %c3_151, %c3_152] : memref<3x32x32xf32, #tpu.memory_space<vmem>>, vector<1x28x28xf32>
    %447 = vector.shape_cast %446 : vector<1x28x28xf32> to vector<28x28xf32>
    %448 = arith.maximumf %441, %443 : vector<28x28xf32>
    %449 = arith.maximumf %445, %447 : vector<28x28xf32>
    %450 = arith.maximumf %448, %449 : vector<28x28xf32>
    %c1_153 = arith.constant 1 : index
    %c2_154 = arith.constant 2 : index
    %c2_155 = arith.constant 2 : index
    %451 = vector.load %arg12[%c1_153, %c2_154, %c2_155] : memref<3x32x32xf32, #tpu.memory_space<vmem>>, vector<1x28x28xf32>
    %452 = vector.shape_cast %451 : vector<1x28x28xf32> to vector<28x28xf32>
    %453 = vector.shape_cast %450 : vector<28x28xf32> to vector<1x28x28xf32>
    tpu.vector_store %arg12[%c1_153, %c2_154, %c2_155], %453 {strides = array<i32>} : memref<3x32x32xf32, #tpu.memory_space<vmem>>, vector<1x28x28xf32>,
    %c2_156 = arith.constant 2 : index
    %454 = memref.load %arg3[%c2_156] : memref<3xf32, #tpu.memory_space<smem>>
    %455 = vector.broadcast %454 : f32 to vector<28x28xf32>
    %456 = arith.addf %399, %455 : vector<28x28xf32>
    %cst_157 = arith.constant 0.000000e+00 : f32
    %457 = vector.broadcast %cst_157 : f32 to vector<28x28xf32>
    %458 = arith.subf %457, %456 : vector<28x28xf32>
    %459 = math.exp %458 : vector<28x28xf32>
    %cst_158 = arith.constant 1.000000e+00 : f32
    %460 = vector.broadcast %cst_158 : f32 to vector<28x28xf32>
    %461 = arith.addf %460, %459 : vector<28x28xf32>
    %cst_159 = arith.constant 1.000000e+00 : f32
    %462 = vector.broadcast %cst_159 : f32 to vector<28x28xf32>
    %463 = arith.divf %462, %461 : vector<28x28xf32>
    %c2_160 = arith.constant 2 : index
    %c2_161 = arith.constant 2 : index
    %c2_162 = arith.constant 2 : index
    %464 = vector.load %arg12[%c2_160, %c2_161, %c2_162] : memref<3x32x32xf32, #tpu.memory_space<vmem>>, vector<1x28x28xf32>
    %465 = vector.shape_cast %464 : vector<1x28x28xf32> to vector<28x28xf32>
    %466 = vector.shape_cast %463 : vector<28x28xf32> to vector<1x28x28xf32>
    tpu.vector_store %arg12[%c2_160, %c2_161, %c2_162], %466 {strides = array<i32>} : memref<3x32x32xf32, #tpu.memory_space<vmem>>, vector<1x28x28xf32>,
    %c2_163 = arith.constant 2 : index
    %c2_164 = arith.constant 2 : index
    %c2_165 = arith.constant 2 : index
    %467 = vector.load %arg12[%c2_163, %c2_164, %c2_165] : memref<3x32x32xf32, #tpu.memory_space<vmem>>, vector<1x28x28xf32>
    %468 = vector.shape_cast %467 : vector<1x28x28xf32> to vector<28x28xf32>
    %c2_166 = arith.constant 2 : index
    %c2_167 = arith.constant 2 : index
    %c3_168 = arith.constant 3 : index
    %469 = vector.load %arg12[%c2_166, %c2_167, %c3_168] : memref<3x32x32xf32, #tpu.memory_space<vmem>>, vector<1x28x28xf32>
    %470 = vector.shape_cast %469 : vector<1x28x28xf32> to vector<28x28xf32>
    %c2_169 = arith.constant 2 : index
    %c3_170 = arith.constant 3 : index
    %c2_171 = arith.constant 2 : index
    %471 = vector.load %arg12[%c2_169, %c3_170, %c2_171] : memref<3x32x32xf32, #tpu.memory_space<vmem>>, vector<1x28x28xf32>
    %472 = vector.shape_cast %471 : vector<1x28x28xf32> to vector<28x28xf32>
    %c2_172 = arith.constant 2 : index
    %c3_173 = arith.constant 3 : index
    %c3_174 = arith.constant 3 : index
    %473 = vector.load %arg12[%c2_172, %c3_173, %c3_174] : memref<3x32x32xf32, #tpu.memory_space<vmem>>, vector<1x28x28xf32>
    %474 = vector.shape_cast %473 : vector<1x28x28xf32> to vector<28x28xf32>
    %475 = arith.maximumf %468, %470 : vector<28x28xf32>
    %476 = arith.maximumf %472, %474 : vector<28x28xf32>
    %477 = arith.maximumf %475, %476 : vector<28x28xf32>
    %c2_175 = arith.constant 2 : index
    %c2_176 = arith.constant 2 : index
    %c2_177 = arith.constant 2 : index
    %478 = vector.load %arg12[%c2_175, %c2_176, %c2_177] : memref<3x32x32xf32, #tpu.memory_space<vmem>>, vector<1x28x28xf32>
    %479 = vector.shape_cast %478 : vector<1x28x28xf32> to vector<28x28xf32>
    %480 = vector.shape_cast %477 : vector<28x28xf32> to vector<1x28x28xf32>
    tpu.vector_store %arg12[%c2_175, %c2_176, %c2_177], %480 {strides = array<i32>} : memref<3x32x32xf32, #tpu.memory_space<vmem>>, vector<1x28x28xf32>,
    %cst_178 = arith.constant 0.000000e+00 : f32
    %481 = vector.broadcast %cst_178 : f32 to vector<28x28xf32>
    %c0_179 = arith.constant 0 : index
    %482 = memref.load %arg4[%c0_179] : memref<27xf32, #tpu.memory_space<smem>>
    %c0_180 = arith.constant 0 : index
    %c0_181 = arith.constant 0 : index
    %c0_182 = arith.constant 0 : index
    %483 = vector.load %arg12[%c0_180, %c0_181, %c0_182] : memref<3x32x32xf32, #tpu.memory_space<vmem>>, vector<1x28x28xf32>
    %484 = vector.shape_cast %483 : vector<1x28x28xf32> to vector<28x28xf32>
    %485 = vector.broadcast %482 : f32 to vector<28x28xf32>
    %486 = arith.mulf %484, %485 : vector<28x28xf32>
    %487 = arith.addf %481, %486 : vector<28x28xf32>
    %c1_183 = arith.constant 1 : index
    %488 = memref.load %arg4[%c1_183] : memref<27xf32, #tpu.memory_space<smem>>
    %c0_184 = arith.constant 0 : index
    %c0_185 = arith.constant 0 : index
    %c2_186 = arith.constant 2 : index
    %489 = vector.load %arg12[%c0_184, %c0_185, %c2_186] : memref<3x32x32xf32, #tpu.memory_space<vmem>>, vector<1x28x28xf32>
    %490 = vector.shape_cast %489 : vector<1x28x28xf32> to vector<28x28xf32>
    %491 = vector.broadcast %488 : f32 to vector<28x28xf32>
    %492 = arith.mulf %490, %491 : vector<28x28xf32>
    %493 = arith.addf %487, %492 : vector<28x28xf32>
    %c2_187 = arith.constant 2 : index
    %494 = memref.load %arg4[%c2_187] : memref<27xf32, #tpu.memory_space<smem>>
    %c0_188 = arith.constant 0 : index
    %c0_189 = arith.constant 0 : index
    %c4_190 = arith.constant 4 : index
    %495 = vector.load %arg12[%c0_188, %c0_189, %c4_190] : memref<3x32x32xf32, #tpu.memory_space<vmem>>, vector<1x28x28xf32>
    %496 = vector.shape_cast %495 : vector<1x28x28xf32> to vector<28x28xf32>
    %497 = vector.broadcast %494 : f32 to vector<28x28xf32>
    %498 = arith.mulf %496, %497 : vector<28x28xf32>
    %499 = arith.addf %493, %498 : vector<28x28xf32>
    %c3_191 = arith.constant 3 : index
    %500 = memref.load %arg4[%c3_191] : memref<27xf32, #tpu.memory_space<smem>>
    %c0_192 = arith.constant 0 : index
    %c2_193 = arith.constant 2 : index
    %c0_194 = arith.constant 0 : index
    %501 = vector.load %arg12[%c0_192, %c2_193, %c0_194] : memref<3x32x32xf32, #tpu.memory_space<vmem>>, vector<1x28x28xf32>
    %502 = vector.shape_cast %501 : vector<1x28x28xf32> to vector<28x28xf32>
    %503 = vector.broadcast %500 : f32 to vector<28x28xf32>
    %504 = arith.mulf %502, %503 : vector<28x28xf32>
    %505 = arith.addf %499, %504 : vector<28x28xf32>
    %c4_195 = arith.constant 4 : index
    %506 = memref.load %arg4[%c4_195] : memref<27xf32, #tpu.memory_space<smem>>
    %c0_196 = arith.constant 0 : index
    %c2_197 = arith.constant 2 : index
    %c2_198 = arith.constant 2 : index
    %507 = vector.load %arg12[%c0_196, %c2_197, %c2_198] : memref<3x32x32xf32, #tpu.memory_space<vmem>>, vector<1x28x28xf32>
    %508 = vector.shape_cast %507 : vector<1x28x28xf32> to vector<28x28xf32>
    %509 = vector.broadcast %506 : f32 to vector<28x28xf32>
    %510 = arith.mulf %508, %509 : vector<28x28xf32>
    %511 = arith.addf %505, %510 : vector<28x28xf32>
    %c5_199 = arith.constant 5 : index
    %512 = memref.load %arg4[%c5_199] : memref<27xf32, #tpu.memory_space<smem>>
    %c0_200 = arith.constant 0 : index
    %c2_201 = arith.constant 2 : index
    %c4_202 = arith.constant 4 : index
    %513 = vector.load %arg12[%c0_200, %c2_201, %c4_202] : memref<3x32x32xf32, #tpu.memory_space<vmem>>, vector<1x28x28xf32>
    %514 = vector.shape_cast %513 : vector<1x28x28xf32> to vector<28x28xf32>
    %515 = vector.broadcast %512 : f32 to vector<28x28xf32>
    %516 = arith.mulf %514, %515 : vector<28x28xf32>
    %517 = arith.addf %511, %516 : vector<28x28xf32>
    %c6_203 = arith.constant 6 : index
    %518 = memref.load %arg4[%c6_203] : memref<27xf32, #tpu.memory_space<smem>>
    %c0_204 = arith.constant 0 : index
    %c4_205 = arith.constant 4 : index
    %c0_206 = arith.constant 0 : index
    %519 = vector.load %arg12[%c0_204, %c4_205, %c0_206] : memref<3x32x32xf32, #tpu.memory_space<vmem>>, vector<1x28x28xf32>
    %520 = vector.shape_cast %519 : vector<1x28x28xf32> to vector<28x28xf32>
    %521 = vector.broadcast %518 : f32 to vector<28x28xf32>
    %522 = arith.mulf %520, %521 : vector<28x28xf32>
    %523 = arith.addf %517, %522 : vector<28x28xf32>
    %c7_207 = arith.constant 7 : index
    %524 = memref.load %arg4[%c7_207] : memref<27xf32, #tpu.memory_space<smem>>
    %c0_208 = arith.constant 0 : index
    %c4_209 = arith.constant 4 : index
    %c2_210 = arith.constant 2 : index
    %525 = vector.load %arg12[%c0_208, %c4_209, %c2_210] : memref<3x32x32xf32, #tpu.memory_space<vmem>>, vector<1x28x28xf32>
    %526 = vector.shape_cast %525 : vector<1x28x28xf32> to vector<28x28xf32>
    %527 = vector.broadcast %524 : f32 to vector<28x28xf32>
    %528 = arith.mulf %526, %527 : vector<28x28xf32>
    %529 = arith.addf %523, %528 : vector<28x28xf32>
    %c8_211 = arith.constant 8 : index
    %530 = memref.load %arg4[%c8_211] : memref<27xf32, #tpu.memory_space<smem>>
    %c0_212 = arith.constant 0 : index
    %c4_213 = arith.constant 4 : index
    %c4_214 = arith.constant 4 : index
    %531 = vector.load %arg12[%c0_212, %c4_213, %c4_214] : memref<3x32x32xf32, #tpu.memory_space<vmem>>, vector<1x28x28xf32>
    %532 = vector.shape_cast %531 : vector<1x28x28xf32> to vector<28x28xf32>
    %533 = vector.broadcast %530 : f32 to vector<28x28xf32>
    %534 = arith.mulf %532, %533 : vector<28x28xf32>
    %535 = arith.addf %529, %534 : vector<28x28xf32>
    %c9_215 = arith.constant 9 : index
    %536 = memref.load %arg4[%c9_215] : memref<27xf32, #tpu.memory_space<smem>>
    %c1_216 = arith.constant 1 : index
    %c0_217 = arith.constant 0 : index
    %c0_218 = arith.constant 0 : index
    %537 = vector.load %arg12[%c1_216, %c0_217, %c0_218] : memref<3x32x32xf32, #tpu.memory_space<vmem>>, vector<1x28x28xf32>
    %538 = vector.shape_cast %537 : vector<1x28x28xf32> to vector<28x28xf32>
    %539 = vector.broadcast %536 : f32 to vector<28x28xf32>
    %540 = arith.mulf %538, %539 : vector<28x28xf32>
    %541 = arith.addf %535, %540 : vector<28x28xf32>
    %c10_219 = arith.constant 10 : index
    %542 = memref.load %arg4[%c10_219] : memref<27xf32, #tpu.memory_space<smem>>
    %c1_220 = arith.constant 1 : index
    %c0_221 = arith.constant 0 : index
    %c2_222 = arith.constant 2 : index
    %543 = vector.load %arg12[%c1_220, %c0_221, %c2_222] : memref<3x32x32xf32, #tpu.memory_space<vmem>>, vector<1x28x28xf32>
    %544 = vector.shape_cast %543 : vector<1x28x28xf32> to vector<28x28xf32>
    %545 = vector.broadcast %542 : f32 to vector<28x28xf32>
    %546 = arith.mulf %544, %545 : vector<28x28xf32>
    %547 = arith.addf %541, %546 : vector<28x28xf32>
    %c11_223 = arith.constant 11 : index
    %548 = memref.load %arg4[%c11_223] : memref<27xf32, #tpu.memory_space<smem>>
    %c1_224 = arith.constant 1 : index
    %c0_225 = arith.constant 0 : index
    %c4_226 = arith.constant 4 : index
    %549 = vector.load %arg12[%c1_224, %c0_225, %c4_226] : memref<3x32x32xf32, #tpu.memory_space<vmem>>, vector<1x28x28xf32>
    %550 = vector.shape_cast %549 : vector<1x28x28xf32> to vector<28x28xf32>
    %551 = vector.broadcast %548 : f32 to vector<28x28xf32>
    %552 = arith.mulf %550, %551 : vector<28x28xf32>
    %553 = arith.addf %547, %552 : vector<28x28xf32>
    %c12_227 = arith.constant 12 : index
    %554 = memref.load %arg4[%c12_227] : memref<27xf32, #tpu.memory_space<smem>>
    %c1_228 = arith.constant 1 : index
    %c2_229 = arith.constant 2 : index
    %c0_230 = arith.constant 0 : index
    %555 = vector.load %arg12[%c1_228, %c2_229, %c0_230] : memref<3x32x32xf32, #tpu.memory_space<vmem>>, vector<1x28x28xf32>
    %556 = vector.shape_cast %555 : vector<1x28x28xf32> to vector<28x28xf32>
    %557 = vector.broadcast %554 : f32 to vector<28x28xf32>
    %558 = arith.mulf %556, %557 : vector<28x28xf32>
    %559 = arith.addf %553, %558 : vector<28x28xf32>
    %c13_231 = arith.constant 13 : index
    %560 = memref.load %arg4[%c13_231] : memref<27xf32, #tpu.memory_space<smem>>
    %c1_232 = arith.constant 1 : index
    %c2_233 = arith.constant 2 : index
    %c2_234 = arith.constant 2 : index
    %561 = vector.load %arg12[%c1_232, %c2_233, %c2_234] : memref<3x32x32xf32, #tpu.memory_space<vmem>>, vector<1x28x28xf32>
    %562 = vector.shape_cast %561 : vector<1x28x28xf32> to vector<28x28xf32>
    %563 = vector.broadcast %560 : f32 to vector<28x28xf32>
    %564 = arith.mulf %562, %563 : vector<28x28xf32>
    %565 = arith.addf %559, %564 : vector<28x28xf32>
    %c14_235 = arith.constant 14 : index
    %566 = memref.load %arg4[%c14_235] : memref<27xf32, #tpu.memory_space<smem>>
    %c1_236 = arith.constant 1 : index
    %c2_237 = arith.constant 2 : index
    %c4_238 = arith.constant 4 : index
    %567 = vector.load %arg12[%c1_236, %c2_237, %c4_238] : memref<3x32x32xf32, #tpu.memory_space<vmem>>, vector<1x28x28xf32>
    %568 = vector.shape_cast %567 : vector<1x28x28xf32> to vector<28x28xf32>
    %569 = vector.broadcast %566 : f32 to vector<28x28xf32>
    %570 = arith.mulf %568, %569 : vector<28x28xf32>
    %571 = arith.addf %565, %570 : vector<28x28xf32>
    %c15_239 = arith.constant 15 : index
    %572 = memref.load %arg4[%c15_239] : memref<27xf32, #tpu.memory_space<smem>>
    %c1_240 = arith.constant 1 : index
    %c4_241 = arith.constant 4 : index
    %c0_242 = arith.constant 0 : index
    %573 = vector.load %arg12[%c1_240, %c4_241, %c0_242] : memref<3x32x32xf32, #tpu.memory_space<vmem>>, vector<1x28x28xf32>
    %574 = vector.shape_cast %573 : vector<1x28x28xf32> to vector<28x28xf32>
    %575 = vector.broadcast %572 : f32 to vector<28x28xf32>
    %576 = arith.mulf %574, %575 : vector<28x28xf32>
    %577 = arith.addf %571, %576 : vector<28x28xf32>
    %c16_243 = arith.constant 16 : index
    %578 = memref.load %arg4[%c16_243] : memref<27xf32, #tpu.memory_space<smem>>
    %c1_244 = arith.constant 1 : index
    %c4_245 = arith.constant 4 : index
    %c2_246 = arith.constant 2 : index
    %579 = vector.load %arg12[%c1_244, %c4_245, %c2_246] : memref<3x32x32xf32, #tpu.memory_space<vmem>>, vector<1x28x28xf32>
    %580 = vector.shape_cast %579 : vector<1x28x28xf32> to vector<28x28xf32>
    %581 = vector.broadcast %578 : f32 to vector<28x28xf32>
    %582 = arith.mulf %580, %581 : vector<28x28xf32>
    %583 = arith.addf %577, %582 : vector<28x28xf32>
    %c17_247 = arith.constant 17 : index
    %584 = memref.load %arg4[%c17_247] : memref<27xf32, #tpu.memory_space<smem>>
    %c1_248 = arith.constant 1 : index
    %c4_249 = arith.constant 4 : index
    %c4_250 = arith.constant 4 : index
    %585 = vector.load %arg12[%c1_248, %c4_249, %c4_250] : memref<3x32x32xf32, #tpu.memory_space<vmem>>, vector<1x28x28xf32>
    %586 = vector.shape_cast %585 : vector<1x28x28xf32> to vector<28x28xf32>
    %587 = vector.broadcast %584 : f32 to vector<28x28xf32>
    %588 = arith.mulf %586, %587 : vector<28x28xf32>
    %589 = arith.addf %583, %588 : vector<28x28xf32>
    %c18_251 = arith.constant 18 : index
    %590 = memref.load %arg4[%c18_251] : memref<27xf32, #tpu.memory_space<smem>>
    %c2_252 = arith.constant 2 : index
    %c0_253 = arith.constant 0 : index
    %c0_254 = arith.constant 0 : index
    %591 = vector.load %arg12[%c2_252, %c0_253, %c0_254] : memref<3x32x32xf32, #tpu.memory_space<vmem>>, vector<1x28x28xf32>
    %592 = vector.shape_cast %591 : vector<1x28x28xf32> to vector<28x28xf32>
    %593 = vector.broadcast %590 : f32 to vector<28x28xf32>
    %594 = arith.mulf %592, %593 : vector<28x28xf32>
    %595 = arith.addf %589, %594 : vector<28x28xf32>
    %c19_255 = arith.constant 19 : index
    %596 = memref.load %arg4[%c19_255] : memref<27xf32, #tpu.memory_space<smem>>
    %c2_256 = arith.constant 2 : index
    %c0_257 = arith.constant 0 : index
    %c2_258 = arith.constant 2 : index
    %597 = vector.load %arg12[%c2_256, %c0_257, %c2_258] : memref<3x32x32xf32, #tpu.memory_space<vmem>>, vector<1x28x28xf32>
    %598 = vector.shape_cast %597 : vector<1x28x28xf32> to vector<28x28xf32>
    %599 = vector.broadcast %596 : f32 to vector<28x28xf32>
    %600 = arith.mulf %598, %599 : vector<28x28xf32>
    %601 = arith.addf %595, %600 : vector<28x28xf32>
    %c20_259 = arith.constant 20 : index
    %602 = memref.load %arg4[%c20_259] : memref<27xf32, #tpu.memory_space<smem>>
    %c2_260 = arith.constant 2 : index
    %c0_261 = arith.constant 0 : index
    %c4_262 = arith.constant 4 : index
    %603 = vector.load %arg12[%c2_260, %c0_261, %c4_262] : memref<3x32x32xf32, #tpu.memory_space<vmem>>, vector<1x28x28xf32>
    %604 = vector.shape_cast %603 : vector<1x28x28xf32> to vector<28x28xf32>
    %605 = vector.broadcast %602 : f32 to vector<28x28xf32>
    %606 = arith.mulf %604, %605 : vector<28x28xf32>
    %607 = arith.addf %601, %606 : vector<28x28xf32>
    %c21_263 = arith.constant 21 : index
    %608 = memref.load %arg4[%c21_263] : memref<27xf32, #tpu.memory_space<smem>>
    %c2_264 = arith.constant 2 : index
    %c2_265 = arith.constant 2 : index
    %c0_266 = arith.constant 0 : index
    %609 = vector.load %arg12[%c2_264, %c2_265, %c0_266] : memref<3x32x32xf32, #tpu.memory_space<vmem>>, vector<1x28x28xf32>
    %610 = vector.shape_cast %609 : vector<1x28x28xf32> to vector<28x28xf32>
    %611 = vector.broadcast %608 : f32 to vector<28x28xf32>
    %612 = arith.mulf %610, %611 : vector<28x28xf32>
    %613 = arith.addf %607, %612 : vector<28x28xf32>
    %c22_267 = arith.constant 22 : index
    %614 = memref.load %arg4[%c22_267] : memref<27xf32, #tpu.memory_space<smem>>
    %c2_268 = arith.constant 2 : index
    %c2_269 = arith.constant 2 : index
    %c2_270 = arith.constant 2 : index
    %615 = vector.load %arg12[%c2_268, %c2_269, %c2_270] : memref<3x32x32xf32, #tpu.memory_space<vmem>>, vector<1x28x28xf32>
    %616 = vector.shape_cast %615 : vector<1x28x28xf32> to vector<28x28xf32>
    %617 = vector.broadcast %614 : f32 to vector<28x28xf32>
    %618 = arith.mulf %616, %617 : vector<28x28xf32>
    %619 = arith.addf %613, %618 : vector<28x28xf32>
    %c23_271 = arith.constant 23 : index
    %620 = memref.load %arg4[%c23_271] : memref<27xf32, #tpu.memory_space<smem>>
    %c2_272 = arith.constant 2 : index
    %c2_273 = arith.constant 2 : index
    %c4_274 = arith.constant 4 : index
    %621 = vector.load %arg12[%c2_272, %c2_273, %c4_274] : memref<3x32x32xf32, #tpu.memory_space<vmem>>, vector<1x28x28xf32>
    %622 = vector.shape_cast %621 : vector<1x28x28xf32> to vector<28x28xf32>
    %623 = vector.broadcast %620 : f32 to vector<28x28xf32>
    %624 = arith.mulf %622, %623 : vector<28x28xf32>
    %625 = arith.addf %619, %624 : vector<28x28xf32>
    %c24_275 = arith.constant 24 : index
    %626 = memref.load %arg4[%c24_275] : memref<27xf32, #tpu.memory_space<smem>>
    %c2_276 = arith.constant 2 : index
    %c4_277 = arith.constant 4 : index
    %c0_278 = arith.constant 0 : index
    %627 = vector.load %arg12[%c2_276, %c4_277, %c0_278] : memref<3x32x32xf32, #tpu.memory_space<vmem>>, vector<1x28x28xf32>
    %628 = vector.shape_cast %627 : vector<1x28x28xf32> to vector<28x28xf32>
    %629 = vector.broadcast %626 : f32 to vector<28x28xf32>
    %630 = arith.mulf %628, %629 : vector<28x28xf32>
    %631 = arith.addf %625, %630 : vector<28x28xf32>
    %c25_279 = arith.constant 25 : index
    %632 = memref.load %arg4[%c25_279] : memref<27xf32, #tpu.memory_space<smem>>
    %c2_280 = arith.constant 2 : index
    %c4_281 = arith.constant 4 : index
    %c2_282 = arith.constant 2 : index
    %633 = vector.load %arg12[%c2_280, %c4_281, %c2_282] : memref<3x32x32xf32, #tpu.memory_space<vmem>>, vector<1x28x28xf32>
    %634 = vector.shape_cast %633 : vector<1x28x28xf32> to vector<28x28xf32>
    %635 = vector.broadcast %632 : f32 to vector<28x28xf32>
    %636 = arith.mulf %634, %635 : vector<28x28xf32>
    %637 = arith.addf %631, %636 : vector<28x28xf32>
    %c26_283 = arith.constant 26 : index
    %638 = memref.load %arg4[%c26_283] : memref<27xf32, #tpu.memory_space<smem>>
    %c2_284 = arith.constant 2 : index
    %c4_285 = arith.constant 4 : index
    %c4_286 = arith.constant 4 : index
    %639 = vector.load %arg12[%c2_284, %c4_285, %c4_286] : memref<3x32x32xf32, #tpu.memory_space<vmem>>, vector<1x28x28xf32>
    %640 = vector.shape_cast %639 : vector<1x28x28xf32> to vector<28x28xf32>
    %641 = vector.broadcast %638 : f32 to vector<28x28xf32>
    %642 = arith.mulf %640, %641 : vector<28x28xf32>
    %643 = arith.addf %637, %642 : vector<28x28xf32>
    %c0_287 = arith.constant 0 : index
    %644 = memref.load %arg5[%c0_287] : memref<1xf32, #tpu.memory_space<smem>>
    %645 = vector.broadcast %644 : f32 to vector<28x28xf32>
    %646 = arith.addf %643, %645 : vector<28x28xf32>
    %cst_288 = arith.constant 0.000000e+00 : f32
    %647 = vector.broadcast %cst_288 : f32 to vector<28x28xf32>
    %648 = arith.subf %647, %646 : vector<28x28xf32>
    %649 = math.exp %648 : vector<28x28xf32>
    %cst_289 = arith.constant 1.000000e+00 : f32
    %650 = vector.broadcast %cst_289 : f32 to vector<28x28xf32>
    %651 = arith.addf %650, %649 : vector<28x28xf32>
    %cst_290 = arith.constant 1.000000e+00 : f32
    %652 = vector.broadcast %cst_290 : f32 to vector<28x28xf32>
    %653 = arith.divf %652, %651 : vector<28x28xf32>
    %c0_291 = arith.constant 0 : index
    %c0_292 = arith.constant 0 : index
    %654 = vector.load %arg13[%c0_291, %c0_292] : memref<28x28xf32, #tpu.memory_space<vmem>>, vector<28x28xf32>
    tpu.vector_store %arg13[%c0_291, %c0_292], %653 {strides = array<i32>} : memref<28x28xf32, #tpu.memory_space<vmem>>, vector<28x28xf32>,
    %c0_293 = arith.constant 0 : index
    %c0_294 = arith.constant 0 : index
    %655 = vector.load %arg7[%c0_293, %c0_294] : memref<1x10xf32, #tpu.memory_space<vmem>>, vector<1x10xf32>
    %c0_295 = arith.constant 0 : index
    %c0_296 = arith.constant 0 : index
    %656 = vector.load %arg13[%c0_295, %c0_296] : memref<28x28xf32, #tpu.memory_space<vmem>>, vector<1x26xf32>
    %c0_297 = arith.constant 0 : index
    %c2_298 = arith.constant 2 : index
    %657 = vector.load %arg13[%c0_297, %c2_298] : memref<28x28xf32, #tpu.memory_space<vmem>>, vector<1x26xf32>
    %c2_299 = arith.constant 2 : index
    %c0_300 = arith.constant 0 : index
    %658 = vector.load %arg13[%c2_299, %c0_300] : memref<28x28xf32, #tpu.memory_space<vmem>>, vector<1x26xf32>
    %c2_301 = arith.constant 2 : index
    %c2_302 = arith.constant 2 : index
    %659 = vector.load %arg13[%c2_301, %c2_302] : memref<28x28xf32, #tpu.memory_space<vmem>>, vector<1x26xf32>
    %660 = arith.maximumf %656, %657 : vector<1x26xf32>
    %661 = arith.maximumf %658, %659 : vector<1x26xf32>
    %662 = arith.maximumf %660, %661 : vector<1x26xf32>
    %c0_303 = arith.constant 0 : index
    %c0_304 = arith.constant 0 : index
    %c0_305 = arith.constant 0 : index
    %663 = vector.load %arg6[%c0_303, %c0_304, %c0_305] : memref<7x26x10xf32, #tpu.memory_space<vmem>>, vector<1x26x10xf32>
    %664 = vector.shape_cast %663 : vector<1x26x10xf32> to vector<26x10xf32>
    %cst_306 = arith.constant dense<0.000000e+00> : vector<1x10xf32>
    %665 = tpu.matmul %662, %664, %cst_306 {dimension_numbers = #tpu.dot_dimension_numbers<[1], [0], [0], [1], [0, 0, 1, 1], [], []>} : vector<1x26xf32>, vector<26x10xf32>, vector<1x10xf32> -> vector<1x10xf32>
    %666 = arith.addf %655, %665 : vector<1x10xf32>
    %c4_307 = arith.constant 4 : index
    %c0_308 = arith.constant 0 : index
    %667 = vector.load %arg13[%c4_307, %c0_308] : memref<28x28xf32, #tpu.memory_space<vmem>>, vector<1x26xf32>
    %c4_309 = arith.constant 4 : index
    %c2_310 = arith.constant 2 : index
    %668 = vector.load %arg13[%c4_309, %c2_310] : memref<28x28xf32, #tpu.memory_space<vmem>>, vector<1x26xf32>
    %c6_311 = arith.constant 6 : index
    %c0_312 = arith.constant 0 : index
    %669 = vector.load %arg13[%c6_311, %c0_312] : memref<28x28xf32, #tpu.memory_space<vmem>>, vector<1x26xf32>
    %c6_313 = arith.constant 6 : index
    %c2_314 = arith.constant 2 : index
    %670 = vector.load %arg13[%c6_313, %c2_314] : memref<28x28xf32, #tpu.memory_space<vmem>>, vector<1x26xf32>
    %671 = arith.maximumf %667, %668 : vector<1x26xf32>
    %672 = arith.maximumf %669, %670 : vector<1x26xf32>
    %673 = arith.maximumf %671, %672 : vector<1x26xf32>
    %c1_315 = arith.constant 1 : index
    %c0_316 = arith.constant 0 : index
    %c0_317 = arith.constant 0 : index
    %674 = vector.load %arg6[%c1_315, %c0_316, %c0_317] : memref<7x26x10xf32, #tpu.memory_space<vmem>>, vector<1x26x10xf32>
    %675 = vector.shape_cast %674 : vector<1x26x10xf32> to vector<26x10xf32>
    %cst_318 = arith.constant dense<0.000000e+00> : vector<1x10xf32>
    %676 = tpu.matmul %673, %675, %cst_318 {dimension_numbers = #tpu.dot_dimension_numbers<[1], [0], [0], [1], [0, 0, 1, 1], [], []>} : vector<1x26xf32>, vector<26x10xf32>, vector<1x10xf32> -> vector<1x10xf32>
    %677 = arith.addf %666, %676 : vector<1x10xf32>
    %c8_319 = arith.constant 8 : index
    %c0_320 = arith.constant 0 : index
    %678 = vector.load %arg13[%c8_319, %c0_320] : memref<28x28xf32, #tpu.memory_space<vmem>>, vector<1x26xf32>
    %c8_321 = arith.constant 8 : index
    %c2_322 = arith.constant 2 : index
    %679 = vector.load %arg13[%c8_321, %c2_322] : memref<28x28xf32, #tpu.memory_space<vmem>>, vector<1x26xf32>
    %c10_323 = arith.constant 10 : index
    %c0_324 = arith.constant 0 : index
    %680 = vector.load %arg13[%c10_323, %c0_324] : memref<28x28xf32, #tpu.memory_space<vmem>>, vector<1x26xf32>
    %c10_325 = arith.constant 10 : index
    %c2_326 = arith.constant 2 : index
    %681 = vector.load %arg13[%c10_325, %c2_326] : memref<28x28xf32, #tpu.memory_space<vmem>>, vector<1x26xf32>
    %682 = arith.maximumf %678, %679 : vector<1x26xf32>
    %683 = arith.maximumf %680, %681 : vector<1x26xf32>
    %684 = arith.maximumf %682, %683 : vector<1x26xf32>
    %c2_327 = arith.constant 2 : index
    %c0_328 = arith.constant 0 : index
    %c0_329 = arith.constant 0 : index
    %685 = vector.load %arg6[%c2_327, %c0_328, %c0_329] : memref<7x26x10xf32, #tpu.memory_space<vmem>>, vector<1x26x10xf32>
    %686 = vector.shape_cast %685 : vector<1x26x10xf32> to vector<26x10xf32>
    %cst_330 = arith.constant dense<0.000000e+00> : vector<1x10xf32>
    %687 = tpu.matmul %684, %686, %cst_330 {dimension_numbers = #tpu.dot_dimension_numbers<[1], [0], [0], [1], [0, 0, 1, 1], [], []>} : vector<1x26xf32>, vector<26x10xf32>, vector<1x10xf32> -> vector<1x10xf32>
    %688 = arith.addf %677, %687 : vector<1x10xf32>
    %c12_331 = arith.constant 12 : index
    %c0_332 = arith.constant 0 : index
    %689 = vector.load %arg13[%c12_331, %c0_332] : memref<28x28xf32, #tpu.memory_space<vmem>>, vector<1x26xf32>
    %c12_333 = arith.constant 12 : index
    %c2_334 = arith.constant 2 : index
    %690 = vector.load %arg13[%c12_333, %c2_334] : memref<28x28xf32, #tpu.memory_space<vmem>>, vector<1x26xf32>
    %c14_335 = arith.constant 14 : index
    %c0_336 = arith.constant 0 : index
    %691 = vector.load %arg13[%c14_335, %c0_336] : memref<28x28xf32, #tpu.memory_space<vmem>>, vector<1x26xf32>
    %c14_337 = arith.constant 14 : index
    %c2_338 = arith.constant 2 : index
    %692 = vector.load %arg13[%c14_337, %c2_338] : memref<28x28xf32, #tpu.memory_space<vmem>>, vector<1x26xf32>
    %693 = arith.maximumf %689, %690 : vector<1x26xf32>
    %694 = arith.maximumf %691, %692 : vector<1x26xf32>
    %695 = arith.maximumf %693, %694 : vector<1x26xf32>
    %c3_339 = arith.constant 3 : index
    %c0_340 = arith.constant 0 : index
    %c0_341 = arith.constant 0 : index
    %696 = vector.load %arg6[%c3_339, %c0_340, %c0_341] : memref<7x26x10xf32, #tpu.memory_space<vmem>>, vector<1x26x10xf32>
    %697 = vector.shape_cast %696 : vector<1x26x10xf32> to vector<26x10xf32>
    %cst_342 = arith.constant dense<0.000000e+00> : vector<1x10xf32>
    %698 = tpu.matmul %695, %697, %cst_342 {dimension_numbers = #tpu.dot_dimension_numbers<[1], [0], [0], [1], [0, 0, 1, 1], [], []>} : vector<1x26xf32>, vector<26x10xf32>, vector<1x10xf32> -> vector<1x10xf32>
    %699 = arith.addf %688, %698 : vector<1x10xf32>
    %c16_343 = arith.constant 16 : index
    %c0_344 = arith.constant 0 : index
    %700 = vector.load %arg13[%c16_343, %c0_344] : memref<28x28xf32, #tpu.memory_space<vmem>>, vector<1x26xf32>
    %c16_345 = arith.constant 16 : index
    %c2_346 = arith.constant 2 : index
    %701 = vector.load %arg13[%c16_345, %c2_346] : memref<28x28xf32, #tpu.memory_space<vmem>>, vector<1x26xf32>
    %c18_347 = arith.constant 18 : index
    %c0_348 = arith.constant 0 : index
    %702 = vector.load %arg13[%c18_347, %c0_348] : memref<28x28xf32, #tpu.memory_space<vmem>>, vector<1x26xf32>
    %c18_349 = arith.constant 18 : index
    %c2_350 = arith.constant 2 : index
    %703 = vector.load %arg13[%c18_349, %c2_350] : memref<28x28xf32, #tpu.memory_space<vmem>>, vector<1x26xf32>
    %704 = arith.maximumf %700, %701 : vector<1x26xf32>
    %705 = arith.maximumf %702, %703 : vector<1x26xf32>
    %706 = arith.maximumf %704, %705 : vector<1x26xf32>
    %c4_351 = arith.constant 4 : index
    %c0_352 = arith.constant 0 : index
    %c0_353 = arith.constant 0 : index
    %707 = vector.load %arg6[%c4_351, %c0_352, %c0_353] : memref<7x26x10xf32, #tpu.memory_space<vmem>>, vector<1x26x10xf32>
    %708 = vector.shape_cast %707 : vector<1x26x10xf32> to vector<26x10xf32>
    %cst_354 = arith.constant dense<0.000000e+00> : vector<1x10xf32>
    %709 = tpu.matmul %706, %708, %cst_354 {dimension_numbers = #tpu.dot_dimension_numbers<[1], [0], [0], [1], [0, 0, 1, 1], [], []>} : vector<1x26xf32>, vector<26x10xf32>, vector<1x10xf32> -> vector<1x10xf32>
    %710 = arith.addf %699, %709 : vector<1x10xf32>
    %c20_355 = arith.constant 20 : index
    %c0_356 = arith.constant 0 : index
    %711 = vector.load %arg13[%c20_355, %c0_356] : memref<28x28xf32, #tpu.memory_space<vmem>>, vector<1x26xf32>
    %c20_357 = arith.constant 20 : index
    %c2_358 = arith.constant 2 : index
    %712 = vector.load %arg13[%c20_357, %c2_358] : memref<28x28xf32, #tpu.memory_space<vmem>>, vector<1x26xf32>
    %c22_359 = arith.constant 22 : index
    %c0_360 = arith.constant 0 : index
    %713 = vector.load %arg13[%c22_359, %c0_360] : memref<28x28xf32, #tpu.memory_space<vmem>>, vector<1x26xf32>
    %c22_361 = arith.constant 22 : index
    %c2_362 = arith.constant 2 : index
    %714 = vector.load %arg13[%c22_361, %c2_362] : memref<28x28xf32, #tpu.memory_space<vmem>>, vector<1x26xf32>
    %715 = arith.maximumf %711, %712 : vector<1x26xf32>
    %716 = arith.maximumf %713, %714 : vector<1x26xf32>
    %717 = arith.maximumf %715, %716 : vector<1x26xf32>
    %c5_363 = arith.constant 5 : index
    %c0_364 = arith.constant 0 : index
    %c0_365 = arith.constant 0 : index
    %718 = vector.load %arg6[%c5_363, %c0_364, %c0_365] : memref<7x26x10xf32, #tpu.memory_space<vmem>>, vector<1x26x10xf32>
    %719 = vector.shape_cast %718 : vector<1x26x10xf32> to vector<26x10xf32>
    %cst_366 = arith.constant dense<0.000000e+00> : vector<1x10xf32>
    %720 = tpu.matmul %717, %719, %cst_366 {dimension_numbers = #tpu.dot_dimension_numbers<[1], [0], [0], [1], [0, 0, 1, 1], [], []>} : vector<1x26xf32>, vector<26x10xf32>, vector<1x10xf32> -> vector<1x10xf32>
    %721 = arith.addf %710, %720 : vector<1x10xf32>
    %c24_367 = arith.constant 24 : index
    %c0_368 = arith.constant 0 : index
    %722 = vector.load %arg13[%c24_367, %c0_368] : memref<28x28xf32, #tpu.memory_space<vmem>>, vector<1x26xf32>
    %c24_369 = arith.constant 24 : index
    %c2_370 = arith.constant 2 : index
    %723 = vector.load %arg13[%c24_369, %c2_370] : memref<28x28xf32, #tpu.memory_space<vmem>>, vector<1x26xf32>
    %c26_371 = arith.constant 26 : index
    %c0_372 = arith.constant 0 : index
    %724 = vector.load %arg13[%c26_371, %c0_372] : memref<28x28xf32, #tpu.memory_space<vmem>>, vector<1x26xf32>
    %c26_373 = arith.constant 26 : index
    %c2_374 = arith.constant 2 : index
    %725 = vector.load %arg13[%c26_373, %c2_374] : memref<28x28xf32, #tpu.memory_space<vmem>>, vector<1x26xf32>
    %726 = arith.maximumf %722, %723 : vector<1x26xf32>
    %727 = arith.maximumf %724, %725 : vector<1x26xf32>
    %728 = arith.maximumf %726, %727 : vector<1x26xf32>
    %c6_375 = arith.constant 6 : index
    %c0_376 = arith.constant 0 : index
    %c0_377 = arith.constant 0 : index
    %729 = vector.load %arg6[%c6_375, %c0_376, %c0_377] : memref<7x26x10xf32, #tpu.memory_space<vmem>>, vector<1x26x10xf32>
    %730 = vector.shape_cast %729 : vector<1x26x10xf32> to vector<26x10xf32>
    %cst_378 = arith.constant dense<0.000000e+00> : vector<1x10xf32>
    %731 = tpu.matmul %728, %730, %cst_378 {dimension_numbers = #tpu.dot_dimension_numbers<[1], [0], [0], [1], [0, 0, 1, 1], [], []>} : vector<1x26xf32>, vector<26x10xf32>, vector<1x10xf32> -> vector<1x10xf32>
    %732 = arith.addf %721, %731 : vector<1x10xf32>
    %c0_379 = arith.constant 0 : index
    %c0_380 = arith.constant 0 : index
    %733 = vector.load %arg8[%c0_379, %c0_380] : memref<10x10xf32, #tpu.memory_space<vmem>>, vector<10x10xf32>
    %cst_381 = arith.constant dense<0.000000e+00> : vector<1x10xf32>
    %734 = tpu.matmul %732, %733, %cst_381 {dimension_numbers = #tpu.dot_dimension_numbers<[1], [0], [0], [1], [0, 0, 1, 1], [], []>} : vector<1x10xf32>, vector<10x10xf32>, vector<1x10xf32> -> vector<1x10xf32>
    %c0_382 = arith.constant 0 : index
    %c0_383 = arith.constant 0 : index
    %735 = vector.load %arg9[%c0_382, %c0_383] : memref<1x10xf32, #tpu.memory_space<vmem>>, vector<1x10xf32>
    %736 = arith.addf %734, %735 : vector<1x10xf32>
    %c0_384 = arith.constant 0 : index
    %c0_385 = arith.constant 0 : index
    %c0_386 = arith.constant 0 : index
    %737 = vector.load %arg10[%c0_384, %c0_385, %c0_386] : memref<1x1x10xf32, #tpu.memory_space<vmem>>, vector<1x1x10xf32>
    %738 = vector.shape_cast %737 : vector<1x1x10xf32> to vector<1x10xf32>
    %739 = vector.shape_cast %736 : vector<1x10xf32> to vector<1x1x10xf32>
    tpu.vector_store %arg10[%c0_384, %c0_385, %c0_386], %739 {strides = array<i32>} : memref<1x1x10xf32, #tpu.memory_space<vmem>>, vector<1x1x10xf32>,
    return
  }
  func.func @transform_0(%arg0: i32) -> (i32, i32, i32, i32) {
    %c0_i32 = arith.constant 0 : i32
    %c0_i32_0 = arith.constant 0 : i32
    %c0_i32_1 = arith.constant 0 : i32
    %c0_i32_2 = arith.constant 0 : i32
    return %arg0, %c0_i32, %c0_i32_0, %c0_i32_1 : i32, i32, i32, i32
  }
  func.func @transform_1(%arg0: i32) -> i32 {
    %c0_i32 = arith.constant 0 : i32
    %c0_i32_0 = arith.constant 0 : i32
    return %c0_i32 : i32
  }
  func.func @transform_2(%arg0: i32) -> i32 {
    %c0_i32 = arith.constant 0 : i32
    %c0_i32_0 = arith.constant 0 : i32
    return %c0_i32 : i32
  }
  func.func @transform_3(%arg0: i32) -> i32 {
    %c0_i32 = arith.constant 0 : i32
    %c0_i32_0 = arith.constant 0 : i32
    return %c0_i32 : i32
  }
  func.func @transform_4(%arg0: i32) -> i32 {
    %c0_i32 = arith.constant 0 : i32
    %c0_i32_0 = arith.constant 0 : i32
    return %c0_i32 : i32
  }
  func.func @transform_5(%arg0: i32) -> (i32, i32, i32) {
    %c0_i32 = arith.constant 0 : i32
    %c0_i32_0 = arith.constant 0 : i32
    %c0_i32_1 = arith.constant 0 : i32
    %c0_i32_2 = arith.constant 0 : i32
    return %c0_i32, %c0_i32_0, %c0_i32_1 : i32, i32, i32
  }
  func.func @transform_6(%arg0: i32) -> (i32, i32) {
    %c0_i32 = arith.constant 0 : i32
    %c0_i32_0 = arith.constant 0 : i32
    %c0_i32_1 = arith.constant 0 : i32
    return %c0_i32, %c0_i32_0 : i32, i32
  }
  func.func @transform_7(%arg0: i32) -> (i32, i32) {
    %c0_i32 = arith.constant 0 : i32
    %c0_i32_0 = arith.constant 0 : i32
    %c0_i32_1 = arith.constant 0 : i32
    return %c0_i32, %c0_i32_0 : i32, i32
  }
  func.func @transform_8(%arg0: i32) -> (i32, i32) {
    %c0_i32 = arith.constant 0 : i32
    %c0_i32_0 = arith.constant 0 : i32
    %c0_i32_1 = arith.constant 0 : i32
    return %c0_i32, %c0_i32_0 : i32, i32
  }
  func.func @transform_9(%arg0: i32) -> (i32, i32, i32) {
    %c0_i32 = arith.constant 0 : i32
    %c0_i32_0 = arith.constant 0 : i32
    %c0_i32_1 = arith.constant 0 : i32
    return %arg0, %c0_i32, %c0_i32_0 : i32, i32, i32
  }
}

</mosaic_0001>

<llo_original>
// kernel: cnn_forward.1
$region0: #{cnn_forward.1}
  #allocation0 [shape = 'u32[]', space=smem, size = 0x4, offset = 0x4, fixed_abs, tag = 'smem constant byte address 0x4 - core index']
  #allocation1 [shape = 'u32[144,128]{1,0:T(1,128)}', space=vmem, size = 0x12000, scoped, tag = 'internal scratch']
  #allocation2 [shape = 'f32[3,30,30]{2,1,0:T(8,128)}', space=vmem, size = 0xc000, scoped, tag = 'scratch operand']
  #allocation3 [shape = 'f32[3,32,32]{2,1,0:T(8,128)}', space=vmem, size = 0xc000, scoped, tag = 'scratch operand']
  #allocation4 [shape = 'f32[28,28]{1,0:T(8,128)}', space=vmem, size = 0x4000, scoped, tag = 'scratch operand']
  #allocation5 [shape = 'f32[1]{0:T(128)S(6)}', space=smem, size = 0x200, scoped, tag = 'scoped memory for cnn_forward.1']
  %s0 = inlined_call_operand.vmem [shape: f32[2,3,28,28], index: 0, kind: input, shape index: {}]
  %s1 = inlined_call_operand.vmem [shape: f32[81], index: 1, kind: input, shape index: {}]
  %s2 = inlined_call_operand.vmem [shape: f32[3], index: 2, kind: input, shape index: {}]
  %s3 = inlined_call_operand.vmem [shape: f32[27], index: 3, kind: input, shape index: {}]
  %s4 = inlined_call_operand.<no memory space> [shape: f32[1], index: 4, kind: input, shape index: {}]
  %s5 = inlined_call_operand.vmem [shape: f32[7,26,10], index: 5, kind: input, shape index: {}]
  %s6 = inlined_call_operand.vmem [shape: f32[1,10], index: 6, kind: input, shape index: {}]
  %s7 = inlined_call_operand.vmem [shape: f32[10,10], index: 7, kind: input, shape index: {}]
  %s8 = inlined_call_operand.vmem [shape: f32[1,10], index: 8, kind: input, shape index: {}]
  %s9 = inlined_call_operand.hbm [shape: f32[2,1,10], index: 9, kind: output, shape index: {}]
  %s10 = sld [smem:[#allocation0]]
  $region81: #{cnn_forward.1} parent=0
    _
  %s12 = ssub.s32 1, %s10
  %s13 = scalar_select 0, %s12, %s10
  %14 = sst [smem:[#allocation5]] %s4
  $region1: #{cnn_forward.1} parent=0
    #allocation6 [shape = 'u8[512]{0}', space=smem, size = 0x200, scoped, tag = 'input window, operand 1, single buffered']
    #allocation7 [shape = 's32[2]{0}', space=sflag, size = 0x8, scoped, tag = 'scoped memory for cnn_forward.1']
    #allocation8 [shape = 's32[2]{0}', space=sflag, size = 0x8, scoped, tag = 'scoped memory for cnn_forward.1']
    #allocation9 [shape = 'u8[512]{0}', space=smem, size = 0x200, scoped, tag = 'input window, operand 2, single buffered']
    #allocation10 [shape = 's32[1]{0}', space=sflag, size = 0x4, scoped, tag = 'scoped memory for cnn_forward.1']
    #allocation11 [shape = 'u8[512]{0}', space=smem, size = 0x200, scoped, tag = 'input window, operand 3, single buffered']
    #allocation12 [shape = 'u8[1024]{0}', space=vmem, size = 0x400, scoped, tag = 'output window, operand 0']
    %15 = vsyncpa [#allocation8], 0
    %16 = vsyncpa [#allocation10], 0
    %17 = vsyncpa [#allocation7], 0
    %s18 = scalar_lea.sflag [#allocation7], 1
    %19 = vsyncpa %s18, 0
    loop: start=0, step=1, limit=4
    $region2: #{cnn_forward.1} parent=1 // loop_pre_header
      _
    $region3: #{cnn_forward.1} parent=1 // loop_header
      %s21 = sphi 0, %s25
      %p22 = scmp.ge.s32.totalorder %s21, 4
      %s31 = sphi 0, %s33
      %s34 = sphi 0, %s31
      %s35 = sphi 0, %s34
      %s51 = sphi 0, %s35
      %s55 = sphi 0, %s55
      %s57 = sphi 0, %s55
      %s58 = sphi 0, %s57
      %s72 = sphi 0, %s58
      %s76 = sphi 0, %s76
      %s78 = sphi 0, %s76
      %s79 = sphi 0, %s78
      %s93 = sphi 0, %s79
      %s97 = sphi 0, %s97
      %s99 = sphi 0, %s97
      %s100 = sphi 0, %s99
      %s114 = sphi 0, %s100
      %s118 = sphi 0, %s118
      %s120 = sphi 0, %s118
      %s121 = sphi 0, %s120
      %s135 = sphi 0, %s121
      %s139 = sphi 0, %s139
      %s141 = sphi 0, %s139
      %s142 = sphi 0, %s141
      %s156 = sphi 0, %s142
      %s160 = sphi 0, %s160
      %s162 = sphi 0, %s160
      %s163 = sphi 0, %s162
      %s177 = sphi 0, %s163
      %s181 = sphi 0, %s181
      %s183 = sphi 0, %s181
      %s184 = sphi 0, %s183
      %s198 = sphi 0, %s184
      %s202 = sphi 0, %s202
      %s204 = sphi 0, %s202
      %s205 = sphi 0, %s204
      %s219 = sphi 0, %s205
      %s225 = sphi 0, %s227
      %s228 = sphi 0, %s225
      %s229 = sphi 0, %s228
      %s245 = sphi 0, %s229
    $region4: #{cnn_forward.1} parent=1 // loop_header_branch
      %24 = sbr.rel (%p22) target = $region8
    $region5: #{cnn_forward.1} parent=1 // loop_body
      %s26 = ssub.s32 %s21, 1
      %s27 = ssub.s32 %s21, 2
      %s28 = sadd.s32 %s21, 1
      %s29 = ssub.s32 %s21, %s28
      %p30 = scmp.eq.s32.totalorder %s29, 0
      %s32 = sadd.s32 %s31, 1
      %s33 = scalar_select %p30, %s31, %s32
      %p36 = pneg %p30
      %p37 = scmp.eq.s32.totalorder %s21, 1
      %p38 = por %p36, %p37
      %p39 = scmp.ne.s32.totalorder %s31, %s34
      %p40 = scmp.eq.s32.totalorder %s21, 0
      %p41 = por %p39, %p40
      %p42 = scmp.ne.s32.totalorder %s31, %s34
      %p43 = scmp.eq.s32.totalorder %s26, 1
      %p44 = por %p42, %p43
      %p45 = scmp.ne.s32.totalorder %s34, %s35
      %p46 = scmp.eq.s32.totalorder %s26, 0
      %p47 = por %p45, %p46
      %p48 = scmp.ne.s32.totalorder %s34, %s35
      %p49 = scmp.eq.s32.totalorder %s27, 1
      %p50 = por %p48, %p49
      %p52 = scmp.ne.s32.totalorder %s35, %s51
      %p53 = scmp.eq.s32.totalorder %s27, 0
      %p54 = por %p52, %p53
      %s56 = sadd.s32 %s55, 1
      %p59 = scmp.eq.s32.totalorder %s21, 1
      %p60 = scmp.ne.s32.totalorder %s55, %s57
      %p61 = scmp.eq.s32.totalorder %s21, 0
      %p62 = por %p60, %p61
      %p63 = scmp.ne.s32.totalorder %s55, %s57
      %p64 = scmp.eq.s32.totalorder %s26, 1
      %p65 = por %p63, %p64
      %p66 = scmp.ne.s32.totalorder %s57, %s58
      %p67 = scmp.eq.s32.totalorder %s26, 0
      %p68 = por %p66, %p67
      %p69 = scmp.ne.s32.totalorder %s57, %s58
      %p70 = scmp.eq.s32.totalorder %s27, 1
      %p71 = por %p69, %p70
      %p73 = scmp.ne.s32.totalorder %s58, %s72
      %p74 = scmp.eq.s32.totalorder %s27, 0
      %p75 = por %p73, %p74
      %s77 = sadd.s32 %s76, 1
      %p80 = scmp.eq.s32.totalorder %s21, 1
      %p81 = scmp.ne.s32.totalorder %s76, %s78
      %p82 = scmp.eq.s32.totalorder %s21, 0
      %p83 = por %p81, %p82
      %p84 = scmp.ne.s32.totalorder %s76, %s78
      %p85 = scmp.eq.s32.totalorder %s26, 1
      %p86 = por %p84, %p85
      %p87 = scmp.ne.s32.totalorder %s78, %s79
      %p88 = scmp.eq.s32.totalorder %s26, 0
      %p89 = por %p87, %p88
      %p90 = scmp.ne.s32.totalorder %s78, %s79
      %p91 = scmp.eq.s32.totalorder %s27, 1
      %p92 = por %p90, %p91
      %p94 = scmp.ne.s32.totalorder %s79, %s93
      %p95 = scmp.eq.s32.totalorder %s27, 0
      %p96 = por %p94, %p95
      %s98 = sadd.s32 %s97, 1
      %p101 = scmp.eq.s32.totalorder %s21, 1
      %p102 = scmp.ne.s32.totalorder %s97, %s99
      %p103 = scmp.eq.s32.totalorder %s21, 0
      %p104 = por %p102, %p103
      %p105 = scmp.ne.s32.totalorder %s97, %s99
      %p106 = scmp.eq.s32.totalorder %s26, 1
      %p107 = por %p105, %p106
      %p108 = scmp.ne.s32.totalorder %s99, %s100
      %p109 = scmp.eq.s32.totalorder %s26, 0
      %p110 = por %p108, %p109
      %p111 = scmp.ne.s32.totalorder %s99, %s100
      %p112 = scmp.eq.s32.totalorder %s27, 1
      %p113 = por %p111, %p112
      %p115 = scmp.ne.s32.totalorder %s100, %s114
      %p116 = scmp.eq.s32.totalorder %s27, 0
      %p117 = por %p115, %p116
      %s119 = sadd.s32 %s118, 1
      %p122 = scmp.eq.s32.totalorder %s21, 1
      %p123 = scmp.ne.s32.totalorder %s118, %s120
      %p124 = scmp.eq.s32.totalorder %s21, 0
      %p125 = por %p123, %p124
      %p126 = scmp.ne.s32.totalorder %s118, %s120
      %p127 = scmp.eq.s32.totalorder %s26, 1
      %p128 = por %p126, %p127
      %p129 = scmp.ne.s32.totalorder %s120, %s121
      %p130 = scmp.eq.s32.totalorder %s26, 0
      %p131 = por %p129, %p130
      %p132 = scmp.ne.s32.totalorder %s120, %s121
      %p133 = scmp.eq.s32.totalorder %s27, 1
      %p134 = por %p132, %p133
      %p136 = scmp.ne.s32.totalorder %s121, %s135
      %p137 = scmp.eq.s32.totalorder %s27, 0
      %p138 = por %p136, %p137
      %s140 = sadd.s32 %s139, 1
      %p143 = scmp.eq.s32.totalorder %s21, 1
      %p144 = scmp.ne.s32.totalorder %s139, %s141
      %p145 = scmp.eq.s32.totalorder %s21, 0
      %p146 = por %p144, %p145
      %p147 = scmp.ne.s32.totalorder %s139, %s141
      %p148 = scmp.eq.s32.totalorder %s26, 1
      %p149 = por %p147, %p148
      %p150 = scmp.ne.s32.totalorder %s141, %s142
      %p151 = scmp.eq.s32.totalorder %s26, 0
      %p152 = por %p150, %p151
      %p153 = scmp.ne.s32.totalorder %s141, %s142
      %p154 = scmp.eq.s32.totalorder %s27, 1
      %p155 = por %p153, %p154
      %p157 = scmp.ne.s32.totalorder %s142, %s156
      %p158 = scmp.eq.s32.totalorder %s27, 0
      %p159 = por %p157, %p158
      %s161 = sadd.s32 %s160, 1
      %p164 = scmp.eq.s32.totalorder %s21, 1
      %p165 = scmp.ne.s32.totalorder %s160, %s162
      %p166 = scmp.eq.s32.totalorder %s21, 0
      %p167 = por %p165, %p166
      %p168 = scmp.ne.s32.totalorder %s160, %s162
      %p169 = scmp.eq.s32.totalorder %s26, 1
      %p170 = por %p168, %p169
      %p171 = scmp.ne.s32.totalorder %s162, %s163
      %p172 = scmp.eq.s32.totalorder %s26, 0
      %p173 = por %p171, %p172
      %p174 = scmp.ne.s32.totalorder %s162, %s163
      %p175 = scmp.eq.s32.totalorder %s27, 1
      %p176 = por %p174, %p175
      %p178 = scmp.ne.s32.totalorder %s163, %s177
      %p179 = scmp.eq.s32.totalorder %s27, 0
      %p180 = por %p178, %p179
      %s182 = sadd.s32 %s181, 1
      %p185 = scmp.eq.s32.totalorder %s21, 1
      %p186 = scmp.ne.s32.totalorder %s181, %s183
      %p187 = scmp.eq.s32.totalorder %s21, 0
      %p188 = por %p186, %p187
      %p189 = scmp.ne.s32.totalorder %s181, %s183
      %p190 = scmp.eq.s32.totalorder %s26, 1
      %p191 = por %p189, %p190
      %p192 = scmp.ne.s32.totalorder %s183, %s184
      %p193 = scmp.eq.s32.totalorder %s26, 0
      %p194 = por %p192, %p193
      %p195 = scmp.ne.s32.totalorder %s183, %s184
      %p196 = scmp.eq.s32.totalorder %s27, 1
      %p197 = por %p195, %p196
      %p199 = scmp.ne.s32.totalorder %s184, %s198
      %p200 = scmp.eq.s32.totalorder %s27, 0
      %p201 = por %p199, %p200
      %s203 = sadd.s32 %s202, 1
      %p206 = scmp.eq.s32.totalorder %s21, 1
      %p207 = scmp.ne.s32.totalorder %s202, %s204
      %p208 = scmp.eq.s32.totalorder %s21, 0
      %p209 = por %p207, %p208
      %p210 = scmp.ne.s32.totalorder %s202, %s204
      %p211 = scmp.eq.s32.totalorder %s26, 1
      %p212 = por %p210, %p211
      %p213 = scmp.ne.s32.totalorder %s204, %s205
      %p214 = scmp.eq.s32.totalorder %s26, 0
      %p215 = por %p213, %p214
      %p216 = scmp.ne.s32.totalorder %s204, %s205
      %p217 = scmp.eq.s32.totalorder %s27, 1
      %p218 = por %p216, %p217
      %p220 = scmp.ne.s32.totalorder %s205, %s219
      %p221 = scmp.eq.s32.totalorder %s27, 0
      %p222 = por %p220, %p221
      %s223 = ssub.s32 %s21, %s28
      %p224 = scmp.eq.s32.totalorder %s223, 0
      %s226 = sadd.s32 %s225, 1
      %s227 = scalar_select %p224, %s225, %s226
      %p230 = pneg %p224
      %p231 = scmp.eq.s32.totalorder %s21, 1
      %p232 = por %p230, %p231
      %p233 = scmp.ne.s32.totalorder %s225, %s228
      %p234 = scmp.eq.s32.totalorder %s21, 0
      %p235 = por %p233, %p234
      %p236 = scmp.ne.s32.totalorder %s225, %s228
      %p237 = scmp.eq.s32.totalorder %s26, 1
      %p238 = por %p236, %p237
      %p239 = scmp.ne.s32.totalorder %s228, %s229
      %p240 = scmp.eq.s32.totalorder %s26, 0
      %p241 = por %p239, %p240
      %p242 = scmp.ne.s32.totalorder %s228, %s229
      %p243 = scmp.eq.s32.totalorder %s27, 1
      %p244 = por %p242, %p243
      %p246 = scmp.ne.s32.totalorder %s229, %s245
      %p247 = scmp.eq.s32.totalorder %s27, 0
      %p248 = por %p246, %p247
      %p249 = scmp.le.s32.totalorder 1, %s21
      %p250 = scmp.lt.s32.totalorder %s21, 3
      %p251 = pnand %p249, %p250
      %p252 = pneg %p251
      // Predicated region
      $region9: #{cnn_forward.1} parent=5 // pred_check
        _
      $region10: #{cnn_forward.1} parent=5 // pred_check_branch
        %254 = sbr.rel (%p251) target = $region12
      $region11: #{cnn_forward.1} parent=5 // pred_region
        %s255 = ssub.s32 %s21, 1
        // Predicated region
        $region13: #{cnn_forward.1} parent=11 // pred_check
          %p256 = pneg %p68
        $region14: #{cnn_forward.1} parent=11 // pred_check_branch
          %258 = sbr.rel (%p256) target = $region16
        $region15: #{cnn_forward.1} parent=11 // pred_region
          %s260 = ssub.s32 16, 16
          %261 = vsyncadd [#allocation8], %s260
          %s263 = sshll.u32 %s1, 4
          %s264 = int_to_ptr.vmem [resolvable:$true] %s263
          %266 = dma.vmem_to_smem %s264, 16, [#allocation6], [#allocation8]
        $region16: #{cnn_forward.1} parent=11 // pred_fallthru
          _
        // Predicated region
        $region17: #{cnn_forward.1} parent=11 // pred_check
          %p267 = pneg %p89
        $region18: #{cnn_forward.1} parent=11 // pred_check_branch
          %269 = sbr.rel (%p267) target = $region20
        $region19: #{cnn_forward.1} parent=11 // pred_region
          %s271 = ssub.s32 16, 16
          %272 = vsyncadd [#allocation10], %s271
          %s274 = sshll.u32 %s2, 4
          %s275 = int_to_ptr.vmem [resolvable:$true] %s274
          %277 = dma.vmem_to_smem %s275, 16, [#allocation9], [#allocation10]
        $region20: #{cnn_forward.1} parent=11 // pred_fallthru
          _
        // Predicated region
        $region21: #{cnn_forward.1} parent=11 // pred_check
          %p278 = pneg %p110
        $region22: #{cnn_forward.1} parent=11 // pred_check_branch
          %280 = sbr.rel (%p278) target = $region24
        $region23: #{cnn_forward.1} parent=11 // pred_region
          %s282 = ssub.s32 16, 16
          %283 = vsyncadd [#allocation10], %s282
          %s285 = sshll.u32 %s3, 4
          %s286 = int_to_ptr.vmem [resolvable:$true] %s285
          %288 = dma.vmem_to_smem %s286, 16, [#allocation11], [#allocation10]
        $region24: #{cnn_forward.1} parent=11 // pred_fallthru
          _
        // Predicated region
        $region25: #{cnn_forward.1} parent=11 // pred_check
          %p289 = pneg %p131
        $region26: #{cnn_forward.1} parent=11 // pred_check_branch
          %291 = sbr.rel (%p289) target = $region28
        $region27: #{cnn_forward.1} parent=11 // pred_region
          _
        $region28: #{cnn_forward.1} parent=11 // pred_fallthru
          _
        // Predicated region
        $region29: #{cnn_forward.1} parent=11 // pred_check
          %p292 = pneg %p152
        $region30: #{cnn_forward.1} parent=11 // pred_check_branch
          %294 = sbr.rel (%p292) target = $region32
        $region31: #{cnn_forward.1} parent=11 // pred_region
          _
        $region32: #{cnn_forward.1} parent=11 // pred_fallthru
          _
        // Predicated region
        $region33: #{cnn_forward.1} parent=11 // pred_check
          %p295 = pneg %p173
        $region34: #{cnn_forward.1} parent=11 // pred_check_branch
          %297 = sbr.rel (%p295) target = $region36
        $region35: #{cnn_forward.1} parent=11 // pred_region
          _
        $region36: #{cnn_forward.1} parent=11 // pred_fallthru
          _
        // Predicated region
        $region37: #{cnn_forward.1} parent=11 // pred_check
          %p298 = pneg %p194
        $region38: #{cnn_forward.1} parent=11 // pred_check_branch
          %300 = sbr.rel (%p298) target = $region40
        $region39: #{cnn_forward.1} parent=11 // pred_region
          _
        $region40: #{cnn_forward.1} parent=11 // pred_fallthru
          _
        // Predicated region
        $region41: #{cnn_forward.1} parent=11 // pred_check
          %p301 = pneg %p215
        $region42: #{cnn_forward.1} parent=11 // pred_check_branch
          %303 = sbr.rel (%p301) target = $region44
        $region43: #{cnn_forward.1} parent=11 // pred_region
          _
        $region44: #{cnn_forward.1} parent=11 // pred_fallthru
          _
      $region12: #{cnn_forward.1} parent=5 // pred_fallthru
        _
      %p304 = scmp.lt.s32.totalorder %s21, 2
      // Predicated region
      $region45: #{cnn_forward.1} parent=5 // pred_check
        %p305 = pneg %p304
      $region46: #{cnn_forward.1} parent=5 // pred_check_branch
        %307 = sbr.rel (%p305) target = $region48
      $region47: #{cnn_forward.1} parent=5 // pred_region
        // Predicated region
        $region49: #{cnn_forward.1} parent=47 // pred_check
          %p308 = pneg %p41
        $region50: #{cnn_forward.1} parent=47 // pred_check_branch
          %310 = sbr.rel (%p308) target = $region52
        $region51: #{cnn_forward.1} parent=47 // pred_region
          %p311 = scmp.lt.s32.totalorder %s21, 1
          %s312 = scalar_select %p311, %s21, 1
          %s313 = smul.addr %s312, 12
          %s314 = smul.addr %s313, 8
          %s315 = scalar_lea.vmem %s0, %s314
        $region52: #{cnn_forward.1} parent=47 // pred_fallthru
          _
      $region48: #{cnn_forward.1} parent=5 // pred_fallthru
        _
      %p316 = scmp.le.s32.totalorder 1, %s21
      %p317 = scmp.lt.s32.totalorder %s21, 3
      %p318 = pnand %p316, %p317
      %p319 = pneg %p318
      // Predicated region
      $region53: #{cnn_forward.1} parent=5 // pred_check
        _
      $region54: #{cnn_forward.1} parent=5 // pred_check_branch
        %321 = sbr.rel (%p318) target = $region56
      $region55: #{cnn_forward.1} parent=5 // pred_region
        %s322 = ssub.s32 %s21, 1
        // Predicated region
        $region57: #{cnn_forward.1} parent=55 // pred_check
          %p323 = pneg %p68
        $region58: #{cnn_forward.1} parent=55 // pred_check_branch
          %325 = sbr.rel (%p323) target = $region60
        $region59: #{cnn_forward.1} parent=55 // pred_region
          %326 = dma.done [#allocation8], 16
        $region60: #{cnn_forward.1} parent=55 // pred_fallthru
          _
        // Predicated region
        $region61: #{cnn_forward.1} parent=55 // pred_check
          %p327 = pneg %p89
        $region62: #{cnn_forward.1} parent=55 // pred_check_branch
          %329 = sbr.rel (%p327) target = $region64
        $region63: #{cnn_forward.1} parent=55 // pred_region
          %330 = dma.done [#allocation10], 16
        $region64: #{cnn_forward.1} parent=55 // pred_fallthru
          _
        // Predicated region
        $region65: #{cnn_forward.1} parent=55 // pred_check
          %p331 = pneg %p110
        $region66: #{cnn_forward.1} parent=55 // pred_check_branch
          %333 = sbr.rel (%p331) target = $region68
        $region67: #{cnn_forward.1} parent=55 // pred_region
          %334 = dma.done [#allocation10], 16
        $region68: #{cnn_forward.1} parent=55 // pred_fallthru
          _
        %335 = sfence
        %p336 = scmp.lt.s32.totalorder %s26, 1
        %s337 = scalar_select %p336, %s26, 1
        %s338 = smul.addr %s337, 12
        %s339 = smul.addr %s338, 8
        %s340 = scalar_lea.vmem %s0, %s339
        %p341 = pneg %p47
        %p342 = pneg %p44
        %p343 = pneg %p68
        %p344 = pneg %p65
        %p345 = pneg %p89
        %p346 = pneg %p86
        %p347 = pneg %p110
        %p348 = pneg %p107
        %p349 = pneg %p131
        %p350 = pneg %p128
        %p351 = pneg %p152
        %p352 = pneg %p149
        %p353 = pneg %p173
        %p354 = pneg %p170
        %p355 = pneg %p194
        %p356 = pneg %p191
        %p357 = pneg %p215
        %p358 = pneg %p212
        %p359 = pneg %p241
        %p360 = pneg %p238
        %s361 = sand.u32 %s228, 1
        %s362 = scalar_lea.sflag [#allocation7], %s361
        %s363 = sand.u32 %s228, 1
        %s364 = scalar_lea.vmem [#allocation12], %s363
        %p365 = scmp.lt.s32.totalorder %s26, 1
        %s366 = scalar_select %p365, %s26, 1
        %s367 = smul.addr %s366, 12
        %s368 = smul.addr %s367, 8
        %s369 = scalar_lea.vmem %s0, %s368
        %vm370 = vcmask 244736
        %371 = vst.msk [vmem:[#allocation2] sm:$0xff] %vm370, 0.0
        %372 = vst.msk [vmem:[#allocation2 + $0x8] sm:$0xff] %vm370, 0.0
        %373 = vst.msk [vmem:[#allocation2 + $0x10] sm:$0xff] %vm370, 0.0
        %vm374 = vcmask 242688
        %375 = vst.msk [vmem:[#allocation2 + $0x18] sm:$0x3f] %vm374, 0.0
        %376 = vst.msk [vmem:[#allocation2 + $0x20] sm:$0xff] %vm370, 0.0
        %377 = vst.msk [vmem:[#allocation2 + $0x28] sm:$0xff] %vm370, 0.0
        %378 = vst.msk [vmem:[#allocation2 + $0x30] sm:$0xff] %vm370, 0.0
        %379 = vst.msk [vmem:[#allocation2 + $0x38] sm:$0x3f] %vm374, 0.0
        %380 = vst.msk [vmem:[#allocation2 + $0x40] sm:$0xff] %vm370, 0.0
        %381 = vst.msk [vmem:[#allocation2 + $0x48] sm:$0xff] %vm370, 0.0
        %382 = vst.msk [vmem:[#allocation2 + $0x50] sm:$0xff] %vm370, 0.0
        %383 = vst.msk [vmem:[#allocation2 + $0x58] sm:$0x3f] %vm374, 0.0
        %v384 = vld [vmem:[%s369] sm:$0xff]
        %v385 = vld [vmem:[%s369 + $0x8] sm:$0xff]
        %v386 = vld [vmem:[%s369 + $0x10] sm:$0xff]
        %v387 = vld [vmem:[%s369 + $0x18] sm:$0xf]
        %392 = vrot.lane.b32.xlu0 %v384, 1
        %v393 = vpop.permute.xlu0 %392
        %394 = vrot.lane.b32.xlu0 %v385, 1
        %v395 = vpop.permute.xlu0 %394
        %396 = vrot.lane.b32.xlu0 %v386, 1
        %v397 = vpop.permute.xlu0 %396
        %398 = vrot.lane.b32.xlu0 %v387, 1
        %v399 = vpop.permute.xlu0 %398
        %vm404 = vcmask 236552
        %405 = vst.msk [vmem:[#allocation2 + $0x1] sm:$0xff] %vm404, %v393
        %406 = vst.msk [vmem:[#allocation2 + $0x9] sm:$0xff] %vm404, %v395
        %407 = vst.msk [vmem:[#allocation2 + $0x11] sm:$0xff] %vm404, %v397
        %vm408 = vcmask 232456
        %409 = vst.msk [vmem:[#allocation2 + $0x19] sm:$0xf] %vm408, %v399
        %s410 = scalar_lea.vmem %s369, 32
        %v411 = vld [vmem:[%s410] sm:$0xff]
        %v412 = vld [vmem:[%s410 + $0x8] sm:$0xff]
        %v413 = vld [vmem:[%s410 + $0x10] sm:$0xff]
        %v414 = vld [vmem:[%s410 + $0x18] sm:$0xf]
        %419 = vrot.lane.b32.xlu0 %v411, 1
        %v420 = vpop.permute.xlu0 %419
        %421 = vrot.lane.b32.xlu0 %v412, 1
        %v422 = vpop.permute.xlu0 %421
        %423 = vrot.lane.b32.xlu0 %v413, 1
        %v424 = vpop.permute.xlu0 %423
        %425 = vrot.lane.b32.xlu0 %v414, 1
        %v426 = vpop.permute.xlu0 %425
        %s431 = scalar_lea.vmem [#allocation2], 32
        %432 = vst.msk [vmem:[%s431 + $0x1] sm:$0xff] %vm404, %v420
        %433 = vst.msk [vmem:[%s431 + $0x9] sm:$0xff] %vm404, %v422
        %434 = vst.msk [vmem:[%s431 + $0x11] sm:$0xff] %vm404, %v424
        %435 = vst.msk [vmem:[%s431 + $0x19] sm:$0xf] %vm408, %v426
        %s436 = scalar_lea.vmem %s369, 64
        %v437 = vld [vmem:[%s436] sm:$0xff]
        %v438 = vld [vmem:[%s436 + $0x8] sm:$0xff]
        %v439 = vld [vmem:[%s436 + $0x10] sm:$0xff]
        %v440 = vld [vmem:[%s436 + $0x18] sm:$0xf]
        %445 = vrot.lane.b32.xlu0 %v437, 1
        %v446 = vpop.permute.xlu0 %445
        %447 = vrot.lane.b32.xlu0 %v438, 1
        %v448 = vpop.permute.xlu0 %447
        %449 = vrot.lane.b32.xlu0 %v439, 1
        %v450 = vpop.permute.xlu0 %449
        %451 = vrot.lane.b32.xlu0 %v440, 1
        %v452 = vpop.permute.xlu0 %451
        %s457 = scalar_lea.vmem [#allocation2], 64
        %458 = vst.msk [vmem:[%s457 + $0x1] sm:$0xff] %vm404, %v446
        %459 = vst.msk [vmem:[%s457 + $0x9] sm:$0xff] %vm404, %v448
        %460 = vst.msk [vmem:[%s457 + $0x11] sm:$0xff] %vm404, %v450
        %461 = vst.msk [vmem:[%s457 + $0x19] sm:$0xf] %vm408, %v452
        %vm462 = vcmask 261120
        %463 = vst.msk [vmem:[#allocation3] sm:$0xff] %vm462, 0.0
        %464 = vst.msk [vmem:[#allocation3 + $0x8] sm:$0xff] %vm462, 0.0
        %465 = vst.msk [vmem:[#allocation3 + $0x10] sm:$0xff] %vm462, 0.0
        %466 = vst.msk [vmem:[#allocation3 + $0x18] sm:$0xff] %vm462, 0.0
        %467 = vst.msk [vmem:[#allocation3 + $0x20] sm:$0xff] %vm462, 0.0
        %468 = vst.msk [vmem:[#allocation3 + $0x28] sm:$0xff] %vm462, 0.0
        %469 = vst.msk [vmem:[#allocation3 + $0x30] sm:$0xff] %vm462, 0.0
        %470 = vst.msk [vmem:[#allocation3 + $0x38] sm:$0xff] %vm462, 0.0
        %471 = vst.msk [vmem:[#allocation3 + $0x40] sm:$0xff] %vm462, 0.0
        %472 = vst.msk [vmem:[#allocation3 + $0x48] sm:$0xff] %vm462, 0.0
        %473 = vst.msk [vmem:[#allocation3 + $0x50] sm:$0xff] %vm462, 0.0
        %474 = vst.msk [vmem:[#allocation3 + $0x58] sm:$0xff] %vm462, 0.0
        %v475 = vld [vmem:[#allocation2] sm:$0xff]
        %v476 = vld [vmem:[#allocation2 + $0x8] sm:$0xff]
        %v477 = vld [vmem:[#allocation2 + $0x10] sm:$0xff]
        %v478 = vld [vmem:[#allocation2 + $0x18] sm:$0xf]
        %s479 = sld [smem:[#allocation6]]
        %v480 = vstv %s479
        %v481 = vmul.f32 %v475, %v480
        %v482 = vmul.f32 %v476, %v480
        %v483 = vmul.f32 %v477, %v480
        %v484 = vmul.f32 %v478, %v480
        %v485 = vadd.f32 %v481, 0.0
        %v486 = vadd.f32 %v482, 0.0
        %v487 = vadd.f32 %v483, 0.0
        %v488 = vadd.f32 %v484, 0.0
        %s489 = sld [smem:[#allocation6 + $0x1b]]
        %v490 = vstv %s489
        %v491 = vmul.f32 %v475, %v490
        %v492 = vmul.f32 %v476, %v490
        %v493 = vmul.f32 %v477, %v490
        %v494 = vmul.f32 %v478, %v490
        %v495 = vadd.f32 %v491, 0.0
        %v496 = vadd.f32 %v492, 0.0
        %v497 = vadd.f32 %v493, 0.0
        %v498 = vadd.f32 %v494, 0.0
        %s499 = sld [smem:[#allocation6 + $0x36]]
        %v500 = vstv %s499
        %v501 = vmul.f32 %v475, %v500
        %v502 = vmul.f32 %v476, %v500
        %v503 = vmul.f32 %v477, %v500
        %v504 = vmul.f32 %v478, %v500
        %v505 = vadd.f32 %v501, 0.0
        %v506 = vadd.f32 %v502, 0.0
        %v507 = vadd.f32 %v503, 0.0
        %v508 = vadd.f32 %v504, 0.0
        %s509 = sld [smem:[#allocation6 + $0x1]]
        %v510 = vstv %s509
        %v511 = vmul.f32 %v475, %v510
        %v512 = vmul.f32 %v476, %v510
        %v513 = vmul.f32 %v477, %v510
        %v514 = vmul.f32 %v478, %v510
        %519 = vrot.lane.b32.xlu0 %v511, 127
        %v520 = vpop.permute.xlu0 %519
        %521 = vrot.lane.b32.xlu0 %v512, 127
        %v522 = vpop.permute.xlu0 %521
        %523 = vrot.lane.b32.xlu0 %v513, 127
        %v524 = vpop.permute.xlu0 %523
        %525 = vrot.lane.b32.xlu0 %v514, 127
        %v526 = vpop.permute.xlu0 %525
        %v531 = vadd.f32 %v485, %v520
        %v532 = vadd.f32 %v486, %v522
        %v533 = vadd.f32 %v487, %v524
        %v534 = vadd.f32 %v488, %v526
        %s535 = sld [smem:[#allocation6 + $0x1c]]
        %v536 = vstv %s535
        %v537 = vmul.f32 %v475, %v536
        %v538 = vmul.f32 %v476, %v536
        %v539 = vmul.f32 %v477, %v536
        %v540 = vmul.f32 %v478, %v536
        %545 = vrot.lane.b32.xlu0 %v537, 127
        %v546 = vpop.permute.xlu0 %545
        %547 = vrot.lane.b32.xlu0 %v538, 127
        %v548 = vpop.permute.xlu0 %547
        %549 = vrot.lane.b32.xlu0 %v539, 127
        %v550 = vpop.permute.xlu0 %549
        %551 = vrot.lane.b32.xlu0 %v540, 127
        %v552 = vpop.permute.xlu0 %551
        %v557 = vadd.f32 %v495, %v546
        %v558 = vadd.f32 %v496, %v548
        %v559 = vadd.f32 %v497, %v550
        %v560 = vadd.f32 %v498, %v552
        %s561 = sld [smem:[#allocation6 + $0x37]]
        %v562 = vstv %s561
        %v563 = vmul.f32 %v475, %v562
        %v564 = vmul.f32 %v476, %v562
        %v565 = vmul.f32 %v477, %v562
        %v566 = vmul.f32 %v478, %v562
        %571 = vrot.lane.b32.xlu0 %v563, 127
        %v572 = vpop.permute.xlu0 %571
        %573 = vrot.lane.b32.xlu0 %v564, 127
        %v574 = vpop.permute.xlu0 %573
        %575 = vrot.lane.b32.xlu0 %v565, 127
        %v576 = vpop.permute.xlu0 %575
        %577 = vrot.lane.b32.xlu0 %v566, 127
        %v578 = vpop.permute.xlu0 %577
        %v583 = vadd.f32 %v505, %v572
        %v584 = vadd.f32 %v506, %v574
        %v585 = vadd.f32 %v507, %v576
        %v586 = vadd.f32 %v508, %v578
        %s587 = sld [smem:[#allocation6 + $0x2]]
        %v588 = vstv %s587
        %v589 = vmul.f32 %v475, %v588
        %v590 = vmul.f32 %v476, %v588
        %v591 = vmul.f32 %v477, %v588
        %v592 = vmul.f32 %v478, %v588
        %597 = vrot.lane.b32.xlu0 %v589, 126
        %v598 = vpop.permute.xlu0 %597
        %599 = vrot.lane.b32.xlu0 %v590, 126
        %v600 = vpop.permute.xlu0 %599
        %601 = vrot.lane.b32.xlu0 %v591, 126
        %v602 = vpop.permute.xlu0 %601
        %603 = vrot.lane.b32.xlu0 %v592, 126
        %v604 = vpop.permute.xlu0 %603
        %v609 = vadd.f32 %v531, %v598
        %v610 = vadd.f32 %v532, %v600
        %v611 = vadd.f32 %v533, %v602
        %v612 = vadd.f32 %v534, %v604
        %s613 = sld [smem:[#allocation6 + $0x1d]]
        %v614 = vstv %s613
        %v615 = vmul.f32 %v475, %v614
        %v616 = vmul.f32 %v476, %v614
        %v617 = vmul.f32 %v477, %v614
        %v618 = vmul.f32 %v478, %v614
        %623 = vrot.lane.b32.xlu0 %v615, 126
        %v624 = vpop.permute.xlu0 %623
        %625 = vrot.lane.b32.xlu0 %v616, 126
        %v626 = vpop.permute.xlu0 %625
        %627 = vrot.lane.b32.xlu0 %v617, 126
        %v628 = vpop.permute.xlu0 %627
        %629 = vrot.lane.b32.xlu0 %v618, 126
        %v630 = vpop.permute.xlu0 %629
        %v635 = vadd.f32 %v557, %v624
        %v636 = vadd.f32 %v558, %v626
        %v637 = vadd.f32 %v559, %v628
        %v638 = vadd.f32 %v560, %v630
        %s639 = sld [smem:[#allocation6 + $0x38]]
        %v640 = vstv %s639
        %v641 = vmul.f32 %v475, %v640
        %v642 = vmul.f32 %v476, %v640
        %v643 = vmul.f32 %v477, %v640
        %v644 = vmul.f32 %v478, %v640
        %649 = vrot.lane.b32.xlu0 %v641, 126
        %v650 = vpop.permute.xlu0 %649
        %651 = vrot.lane.b32.xlu0 %v642, 126
        %v652 = vpop.permute.xlu0 %651
        %653 = vrot.lane.b32.xlu0 %v643, 126
        %v654 = vpop.permute.xlu0 %653
        %655 = vrot.lane.b32.xlu0 %v644, 126
        %v656 = vpop.permute.xlu0 %655
        %v661 = vadd.f32 %v583, %v650
        %v662 = vadd.f32 %v584, %v652
        %v663 = vadd.f32 %v585, %v654
        %v664 = vadd.f32 %v586, %v656
        %v665 = vld [vmem:[#allocation2 + $0x1] sm:$0xff]
        %v666 = vld [vmem:[#allocation2 + $0x9] sm:$0xff]
        %v667 = vld [vmem:[#allocation2 + $0x11] sm:$0xff]
        %v668 = vld [vmem:[#allocation2 + $0x19] sm:$0xf]
        %s669 = sld [smem:[#allocation6 + $0x3]]
        %v670 = vstv %s669
        %v671 = vmul.f32 %v665, %v670
        %v672 = vmul.f32 %v666, %v670
        %v673 = vmul.f32 %v667, %v670
        %v674 = vmul.f32 %v668, %v670
        %v675 = vadd.f32 %v609, %v671
        %v676 = vadd.f32 %v610, %v672
        %v677 = vadd.f32 %v611, %v673
        %v678 = vadd.f32 %v612, %v674
        %s679 = sld [smem:[#allocation6 + $0x1e]]
        %v680 = vstv %s679
        %v681 = vmul.f32 %v665, %v680
        %v682 = vmul.f32 %v666, %v680
        %v683 = vmul.f32 %v667, %v680
        %v684 = vmul.f32 %v668, %v680
        %v685 = vadd.f32 %v635, %v681
        %v686 = vadd.f32 %v636, %v682
        %v687 = vadd.f32 %v637, %v683
        %v688 = vadd.f32 %v638, %v684
        %s689 = sld [smem:[#allocation6 + $0x39]]
        %v690 = vstv %s689
        %v691 = vmul.f32 %v665, %v690
        %v692 = vmul.f32 %v666, %v690
        %v693 = vmul.f32 %v667, %v690
        %v694 = vmul.f32 %v668, %v690
        %v695 = vadd.f32 %v661, %v691
        %v696 = vadd.f32 %v662, %v692
        %v697 = vadd.f32 %v663, %v693
        %v698 = vadd.f32 %v664, %v694
        %s699 = sld [smem:[#allocation6 + $0x4]]
        %v700 = vstv %s699
        %v701 = vmul.f32 %v665, %v700
        %v702 = vmul.f32 %v666, %v700
        %v703 = vmul.f32 %v667, %v700
        %v704 = vmul.f32 %v668, %v700
        %709 = vrot.lane.b32.xlu0 %v701, 127
        %v710 = vpop.permute.xlu0 %709
        %711 = vrot.lane.b32.xlu0 %v702, 127
        %v712 = vpop.permute.xlu0 %711
        %713 = vrot.lane.b32.xlu0 %v703, 127
        %v714 = vpop.permute.xlu0 %713
        %715 = vrot.lane.b32.xlu0 %v704, 127
        %v716 = vpop.permute.xlu0 %715
        %v721 = vadd.f32 %v675, %v710
        %v722 = vadd.f32 %v676, %v712
        %v723 = vadd.f32 %v677, %v714
        %v724 = vadd.f32 %v678, %v716
        %s725 = sld [smem:[#allocation6 + $0x1f]]
        %v726 = vstv %s725
        %v727 = vmul.f32 %v665, %v726
        %v728 = vmul.f32 %v666, %v726
        %v729 = vmul.f32 %v667, %v726
        %v730 = vmul.f32 %v668, %v726
        %735 = vrot.lane.b32.xlu0 %v727, 127
        %v736 = vpop.permute.xlu0 %735
        %737 = vrot.lane.b32.xlu0 %v728, 127
        %v738 = vpop.permute.xlu0 %737
        %739 = vrot.lane.b32.xlu0 %v729, 127
        %v740 = vpop.permute.xlu0 %739
        %741 = vrot.lane.b32.xlu0 %v730, 127
        %v742 = vpop.permute.xlu0 %741
        %v747 = vadd.f32 %v685, %v736
        %v748 = vadd.f32 %v686, %v738
        %v749 = vadd.f32 %v687, %v740
        %v750 = vadd.f32 %v688, %v742
        %s751 = sld [smem:[#allocation6 + $0x3a]]
        %v752 = vstv %s751
        %v753 = vmul.f32 %v665, %v752
        %v754 = vmul.f32 %v666, %v752
        %v755 = vmul.f32 %v667, %v752
        %v756 = vmul.f32 %v668, %v752
        %761 = vrot.lane.b32.xlu0 %v753, 127
        %v762 = vpop.permute.xlu0 %761
        %763 = vrot.lane.b32.xlu0 %v754, 127
        %v764 = vpop.permute.xlu0 %763
        %765 = vrot.lane.b32.xlu0 %v755, 127
        %v766 = vpop.permute.xlu0 %765
        %767 = vrot.lane.b32.xlu0 %v756, 127
        %v768 = vpop.permute.xlu0 %767
        %v773 = vadd.f32 %v695, %v762
        %v774 = vadd.f32 %v696, %v764
        %v775 = vadd.f32 %v697, %v766
        %v776 = vadd.f32 %v698, %v768
        %s777 = sld [smem:[#allocation6 + $0x5]]
        %v778 = vstv %s777
        %v779 = vmul.f32 %v665, %v778
        %v780 = vmul.f32 %v666, %v778
        %v781 = vmul.f32 %v667, %v778
        %v782 = vmul.f32 %v668, %v778
        %787 = vrot.lane.b32.xlu0 %v779, 126
        %v788 = vpop.permute.xlu0 %787
        %789 = vrot.lane.b32.xlu0 %v780, 126
        %v790 = vpop.permute.xlu0 %789
        %791 = vrot.lane.b32.xlu0 %v781, 126
        %v792 = vpop.permute.xlu0 %791
        %793 = vrot.lane.b32.xlu0 %v782, 126
        %v794 = vpop.permute.xlu0 %793
        %v799 = vadd.f32 %v721, %v788
        %v800 = vadd.f32 %v722, %v790
        %v801 = vadd.f32 %v723, %v792
        %v802 = vadd.f32 %v724, %v794
        %s803 = sld [smem:[#allocation6 + $0x20]]
        %v804 = vstv %s803
        %v805 = vmul.f32 %v665, %v804
        %v806 = vmul.f32 %v666, %v804
        %v807 = vmul.f32 %v667, %v804
        %v808 = vmul.f32 %v668, %v804
        %813 = vrot.lane.b32.xlu0 %v805, 126
        %v814 = vpop.permute.xlu0 %813
        %815 = vrot.lane.b32.xlu0 %v806, 126
        %v816 = vpop.permute.xlu0 %815
        %817 = vrot.lane.b32.xlu0 %v807, 126
        %v818 = vpop.permute.xlu0 %817
        %819 = vrot.lane.b32.xlu0 %v808, 126
        %v820 = vpop.permute.xlu0 %819
        %v825 = vadd.f32 %v747, %v814
        %v826 = vadd.f32 %v748, %v816
        %v827 = vadd.f32 %v749, %v818
        %v828 = vadd.f32 %v750, %v820
        %s829 = sld [smem:[#allocation6 + $0x3b]]
        %v830 = vstv %s829
        %v831 = vmul.f32 %v665, %v830
        %v832 = vmul.f32 %v666, %v830
        %v833 = vmul.f32 %v667, %v830
        %v834 = vmul.f32 %v668, %v830
        %839 = vrot.lane.b32.xlu0 %v831, 126
        %v840 = vpop.permute.xlu0 %839
        %841 = vrot.lane.b32.xlu0 %v832, 126
        %v842 = vpop.permute.xlu0 %841
        %843 = vrot.lane.b32.xlu0 %v833, 126
        %v844 = vpop.permute.xlu0 %843
        %845 = vrot.lane.b32.xlu0 %v834, 126
        %v846 = vpop.permute.xlu0 %845
        %v851 = vadd.f32 %v773, %v840
        %v852 = vadd.f32 %v774, %v842
        %v853 = vadd.f32 %v775, %v844
        %v854 = vadd.f32 %v776, %v846
        %v855 = vld [vmem:[#allocation2 + $0x2] sm:$0xff]
        %v856 = vld [vmem:[#allocation2 + $0xa] sm:$0xff]
        %v857 = vld [vmem:[#allocation2 + $0x12] sm:$0xff]
        %v858 = vld [vmem:[#allocation2 + $0x1a] sm:$0xf]
        %s859 = sld [smem:[#allocation6 + $0x6]]
        %v860 = vstv %s859
        %v861 = vmul.f32 %v855, %v860
        %v862 = vmul.f32 %v856, %v860
        %v863 = vmul.f32 %v857, %v860
        %v864 = vmul.f32 %v858, %v860
        %v865 = vadd.f32 %v799, %v861
        %v866 = vadd.f32 %v800, %v862
        %v867 = vadd.f32 %v801, %v863
        %v868 = vadd.f32 %v802, %v864
        %s869 = sld [smem:[#allocation6 + $0x21]]
        %v870 = vstv %s869
        %v871 = vmul.f32 %v855, %v870
        %v872 = vmul.f32 %v856, %v870
        %v873 = vmul.f32 %v857, %v870
        %v874 = vmul.f32 %v858, %v870
        %v875 = vadd.f32 %v825, %v871
        %v876 = vadd.f32 %v826, %v872
        %v877 = vadd.f32 %v827, %v873
        %v878 = vadd.f32 %v828, %v874
        %s879 = sld [smem:[#allocation6 + $0x3c]]
        %v880 = vstv %s879
        %v881 = vmul.f32 %v855, %v880
        %v882 = vmul.f32 %v856, %v880
        %v883 = vmul.f32 %v857, %v880
        %v884 = vmul.f32 %v858, %v880
        %v885 = vadd.f32 %v851, %v881
        %v886 = vadd.f32 %v852, %v882
        %v887 = vadd.f32 %v853, %v883
        %v888 = vadd.f32 %v854, %v884
        %s889 = sld [smem:[#allocation6 + $0x7]]
        %v890 = vstv %s889
        %v891 = vmul.f32 %v855, %v890
        %v892 = vmul.f32 %v856, %v890
        %v893 = vmul.f32 %v857, %v890
        %v894 = vmul.f32 %v858, %v890
        %899 = vrot.lane.b32.xlu0 %v891, 127
        %v900 = vpop.permute.xlu0 %899
        %901 = vrot.lane.b32.xlu0 %v892, 127
        %v902 = vpop.permute.xlu0 %901
        %903 = vrot.lane.b32.xlu0 %v893, 127
        %v904 = vpop.permute.xlu0 %903
        %905 = vrot.lane.b32.xlu0 %v894, 127
        %v906 = vpop.permute.xlu0 %905
        %v911 = vadd.f32 %v865, %v900
        %v912 = vadd.f32 %v866, %v902
        %v913 = vadd.f32 %v867, %v904
        %v914 = vadd.f32 %v868, %v906
        %s915 = sld [smem:[#allocation6 + $0x22]]
        %v916 = vstv %s915
        %v917 = vmul.f32 %v855, %v916
        %v918 = vmul.f32 %v856, %v916
        %v919 = vmul.f32 %v857, %v916
        %v920 = vmul.f32 %v858, %v916
        %925 = vrot.lane.b32.xlu0 %v917, 127
        %v926 = vpop.permute.xlu0 %925
        %927 = vrot.lane.b32.xlu0 %v918, 127
        %v928 = vpop.permute.xlu0 %927
        %929 = vrot.lane.b32.xlu0 %v919, 127
        %v930 = vpop.permute.xlu0 %929
        %931 = vrot.lane.b32.xlu0 %v920, 127
        %v932 = vpop.permute.xlu0 %931
        %v937 = vadd.f32 %v875, %v926
        %v938 = vadd.f32 %v876, %v928
        %v939 = vadd.f32 %v877, %v930
        %v940 = vadd.f32 %v878, %v932
        %s941 = sld [smem:[#allocation6 + $0x3d]]
        %v942 = vstv %s941
        %v943 = vmul.f32 %v855, %v942
        %v944 = vmul.f32 %v856, %v942
        %v945 = vmul.f32 %v857, %v942
        %v946 = vmul.f32 %v858, %v942
        %951 = vrot.lane.b32.xlu0 %v943, 127
        %v952 = vpop.permute.xlu0 %951
        %953 = vrot.lane.b32.xlu0 %v944, 127
        %v954 = vpop.permute.xlu0 %953
        %955 = vrot.lane.b32.xlu0 %v945, 127
        %v956 = vpop.permute.xlu0 %955
        %957 = vrot.lane.b32.xlu0 %v946, 127
        %v958 = vpop.permute.xlu0 %957
        %v963 = vadd.f32 %v885, %v952
        %v964 = vadd.f32 %v886, %v954
        %v965 = vadd.f32 %v887, %v956
        %v966 = vadd.f32 %v888, %v958
        %s967 = sld [smem:[#allocation6 + $0x8]]
        %v968 = vstv %s967
        %v969 = vmul.f32 %v855, %v968
        %v970 = vmul.f32 %v856, %v968
        %v971 = vmul.f32 %v857, %v968
        %v972 = vmul.f32 %v858, %v968
        %977 = vrot.lane.b32.xlu0 %v969, 126
        %v978 = vpop.permute.xlu0 %977
        %979 = vrot.lane.b32.xlu0 %v970, 126
        %v980 = vpop.permute.xlu0 %979
        %981 = vrot.lane.b32.xlu0 %v971, 126
        %v982 = vpop.permute.xlu0 %981
        %983 = vrot.lane.b32.xlu0 %v972, 126
        %v984 = vpop.permute.xlu0 %983
        %v989 = vadd.f32 %v911, %v978
        %v990 = vadd.f32 %v912, %v980
        %v991 = vadd.f32 %v913, %v982
        %v992 = vadd.f32 %v914, %v984
        %s993 = sld [smem:[#allocation6 + $0x23]]
        %v994 = vstv %s993
        %v995 = vmul.f32 %v855, %v994
        %v996 = vmul.f32 %v856, %v994
        %v997 = vmul.f32 %v857, %v994
        %v998 = vmul.f32 %v858, %v994
        %1003 = vrot.lane.b32.xlu0 %v995, 126
        %v1004 = vpop.permute.xlu0 %1003
        %1005 = vrot.lane.b32.xlu0 %v996, 126
        %v1006 = vpop.permute.xlu0 %1005
        %1007 = vrot.lane.b32.xlu0 %v997, 126
        %v1008 = vpop.permute.xlu0 %1007
        %1009 = vrot.lane.b32.xlu0 %v998, 126
        %v1010 = vpop.permute.xlu0 %1009
        %v1015 = vadd.f32 %v937, %v1004
        %v1016 = vadd.f32 %v938, %v1006
        %v1017 = vadd.f32 %v939, %v1008
        %v1018 = vadd.f32 %v940, %v1010
        %s1019 = sld [smem:[#allocation6 + $0x3e]]
        %v1020 = vstv %s1019
        %v1021 = vmul.f32 %v855, %v1020
        %v1022 = vmul.f32 %v856, %v1020
        %v1023 = vmul.f32 %v857, %v1020
        %v1024 = vmul.f32 %v858, %v1020
        %1029 = vrot.lane.b32.xlu0 %v1021, 126
        %v1030 = vpop.permute.xlu0 %1029
        %1031 = vrot.lane.b32.xlu0 %v1022, 126
        %v1032 = vpop.permute.xlu0 %1031
        %1033 = vrot.lane.b32.xlu0 %v1023, 126
        %v1034 = vpop.permute.xlu0 %1033
        %1035 = vrot.lane.b32.xlu0 %v1024, 126
        %v1036 = vpop.permute.xlu0 %1035
        %v1041 = vadd.f32 %v963, %v1030
        %v1042 = vadd.f32 %v964, %v1032
        %v1043 = vadd.f32 %v965, %v1034
        %v1044 = vadd.f32 %v966, %v1036
        %v1045 = vld [vmem:[%s431] sm:$0xff]
        %v1046 = vld [vmem:[%s431 + $0x8] sm:$0xff]
        %v1047 = vld [vmem:[%s431 + $0x10] sm:$0xff]
        %v1048 = vld [vmem:[%s431 + $0x18] sm:$0xf]
        %s1049 = sld [smem:[#allocation6 + $0x9]]
        %v1050 = vstv %s1049
        %v1051 = vmul.f32 %v1045, %v1050
        %v1052 = vmul.f32 %v1046, %v1050
        %v1053 = vmul.f32 %v1047, %v1050
        %v1054 = vmul.f32 %v1048, %v1050
        %v1055 = vadd.f32 %v989, %v1051
        %v1056 = vadd.f32 %v990, %v1052
        %v1057 = vadd.f32 %v991, %v1053
        %v1058 = vadd.f32 %v992, %v1054
        %s1059 = sld [smem:[#allocation6 + $0x24]]
        %v1060 = vstv %s1059
        %v1061 = vmul.f32 %v1045, %v1060
        %v1062 = vmul.f32 %v1046, %v1060
        %v1063 = vmul.f32 %v1047, %v1060
        %v1064 = vmul.f32 %v1048, %v1060
        %v1065 = vadd.f32 %v1015, %v1061
        %v1066 = vadd.f32 %v1016, %v1062
        %v1067 = vadd.f32 %v1017, %v1063
        %v1068 = vadd.f32 %v1018, %v1064
        %s1069 = sld [smem:[#allocation6 + $0x3f]]
        %v1070 = vstv %s1069
        %v1071 = vmul.f32 %v1045, %v1070
        %v1072 = vmul.f32 %v1046, %v1070
        %v1073 = vmul.f32 %v1047, %v1070
        %v1074 = vmul.f32 %v1048, %v1070
        %v1075 = vadd.f32 %v1041, %v1071
        %v1076 = vadd.f32 %v1042, %v1072
        %v1077 = vadd.f32 %v1043, %v1073
        %v1078 = vadd.f32 %v1044, %v1074
        %s1079 = sld [smem:[#allocation6 + $0xa]]
        %v1080 = vstv %s1079
        %v1081 = vmul.f32 %v1045, %v1080
        %v1082 = vmul.f32 %v1046, %v1080
        %v1083 = vmul.f32 %v1047, %v1080
        %v1084 = vmul.f32 %v1048, %v1080
        %1089 = vrot.lane.b32.xlu0 %v1081, 127
        %v1090 = vpop.permute.xlu0 %1089
        %1091 = vrot.lane.b32.xlu0 %v1082, 127
        %v1092 = vpop.permute.xlu0 %1091
        %1093 = vrot.lane.b32.xlu0 %v1083, 127
        %v1094 = vpop.permute.xlu0 %1093
        %1095 = vrot.lane.b32.xlu0 %v1084, 127
        %v1096 = vpop.permute.xlu0 %1095
        %v1101 = vadd.f32 %v1055, %v1090
        %v1102 = vadd.f32 %v1056, %v1092
        %v1103 = vadd.f32 %v1057, %v1094
        %v1104 = vadd.f32 %v1058, %v1096
        %s1105 = sld [smem:[#allocation6 + $0x25]]
        %v1106 = vstv %s1105
        %v1107 = vmul.f32 %v1045, %v1106
        %v1108 = vmul.f32 %v1046, %v1106
        %v1109 = vmul.f32 %v1047, %v1106
        %v1110 = vmul.f32 %v1048, %v1106
        %1115 = vrot.lane.b32.xlu0 %v1107, 127
        %v1116 = vpop.permute.xlu0 %1115
        %1117 = vrot.lane.b32.xlu0 %v1108, 127
        %v1118 = vpop.permute.xlu0 %1117
        %1119 = vrot.lane.b32.xlu0 %v1109, 127
        %v1120 = vpop.permute.xlu0 %1119
        %1121 = vrot.lane.b32.xlu0 %v1110, 127
        %v1122 = vpop.permute.xlu0 %1121
        %v1127 = vadd.f32 %v1065, %v1116
        %v1128 = vadd.f32 %v1066, %v1118
        %v1129 = vadd.f32 %v1067, %v1120
        %v1130 = vadd.f32 %v1068, %v1122
        %s1131 = sld [smem:[#allocation6 + $0x40]]
        %v1132 = vstv %s1131
        %v1133 = vmul.f32 %v1045, %v1132
        %v1134 = vmul.f32 %v1046, %v1132
        %v1135 = vmul.f32 %v1047, %v1132
        %v1136 = vmul.f32 %v1048, %v1132
        %1141 = vrot.lane.b32.xlu0 %v1133, 127
        %v1142 = vpop.permute.xlu0 %1141
        %1143 = vrot.lane.b32.xlu0 %v1134, 127
        %v1144 = vpop.permute.xlu0 %1143
        %1145 = vrot.lane.b32.xlu0 %v1135, 127
        %v1146 = vpop.permute.xlu0 %1145
        %1147 = vrot.lane.b32.xlu0 %v1136, 127
        %v1148 = vpop.permute.xlu0 %1147
        %v1153 = vadd.f32 %v1075, %v1142
        %v1154 = vadd.f32 %v1076, %v1144
        %v1155 = vadd.f32 %v1077, %v1146
        %v1156 = vadd.f32 %v1078, %v1148
        %s1157 = sld [smem:[#allocation6 + $0xb]]
        %v1158 = vstv %s1157
        %v1159 = vmul.f32 %v1045, %v1158
        %v1160 = vmul.f32 %v1046, %v1158
        %v1161 = vmul.f32 %v1047, %v1158
        %v1162 = vmul.f32 %v1048, %v1158
        %1167 = vrot.lane.b32.xlu0 %v1159, 126
        %v1168 = vpop.permute.xlu0 %1167
        %1169 = vrot.lane.b32.xlu0 %v1160, 126
        %v1170 = vpop.permute.xlu0 %1169
        %1171 = vrot.lane.b32.xlu0 %v1161, 126
        %v1172 = vpop.permute.xlu0 %1171
        %1173 = vrot.lane.b32.xlu0 %v1162, 126
        %v1174 = vpop.permute.xlu0 %1173
        %v1179 = vadd.f32 %v1101, %v1168
        %v1180 = vadd.f32 %v1102, %v1170
        %v1181 = vadd.f32 %v1103, %v1172
        %v1182 = vadd.f32 %v1104, %v1174
        %s1183 = sld [smem:[#allocation6 + $0x26]]
        %v1184 = vstv %s1183
        %v1185 = vmul.f32 %v1045, %v1184
        %v1186 = vmul.f32 %v1046, %v1184
        %v1187 = vmul.f32 %v1047, %v1184
        %v1188 = vmul.f32 %v1048, %v1184
        %1193 = vrot.lane.b32.xlu0 %v1185, 126
        %v1194 = vpop.permute.xlu0 %1193
        %1195 = vrot.lane.b32.xlu0 %v1186, 126
        %v1196 = vpop.permute.xlu0 %1195
        %1197 = vrot.lane.b32.xlu0 %v1187, 126
        %v1198 = vpop.permute.xlu0 %1197
        %1199 = vrot.lane.b32.xlu0 %v1188, 126
        %v1200 = vpop.permute.xlu0 %1199
        %v1205 = vadd.f32 %v1127, %v1194
        %v1206 = vadd.f32 %v1128, %v1196
        %v1207 = vadd.f32 %v1129, %v1198
        %v1208 = vadd.f32 %v1130, %v1200
        %s1209 = sld [smem:[#allocation6 + $0x41]]
        %v1210 = vstv %s1209
        %v1211 = vmul.f32 %v1045, %v1210
        %v1212 = vmul.f32 %v1046, %v1210
        %v1213 = vmul.f32 %v1047, %v1210
        %v1214 = vmul.f32 %v1048, %v1210
        %1219 = vrot.lane.b32.xlu0 %v1211, 126
        %v1220 = vpop.permute.xlu0 %1219
        %1221 = vrot.lane.b32.xlu0 %v1212, 126
        %v1222 = vpop.permute.xlu0 %1221
        %1223 = vrot.lane.b32.xlu0 %v1213, 126
        %v1224 = vpop.permute.xlu0 %1223
        %1225 = vrot.lane.b32.xlu0 %v1214, 126
        %v1226 = vpop.permute.xlu0 %1225
        %v1231 = vadd.f32 %v1153, %v1220
        %v1232 = vadd.f32 %v1154, %v1222
        %v1233 = vadd.f32 %v1155, %v1224
        %v1234 = vadd.f32 %v1156, %v1226
        %v1235 = vld [vmem:[%s431 + $0x1] sm:$0xff]
        %v1236 = vld [vmem:[%s431 + $0x9] sm:$0xff]
        %v1237 = vld [vmem:[%s431 + $0x11] sm:$0xff]
        %v1238 = vld [vmem:[%s431 + $0x19] sm:$0xf]
        %s1239 = sld [smem:[#allocation6 + $0xc]]
        %v1240 = vstv %s1239
        %v1241 = vmul.f32 %v1235, %v1240
        %v1242 = vmul.f32 %v1236, %v1240
        %v1243 = vmul.f32 %v1237, %v1240
        %v1244 = vmul.f32 %v1238, %v1240
        %v1245 = vadd.f32 %v1179, %v1241
        %v1246 = vadd.f32 %v1180, %v1242
        %v1247 = vadd.f32 %v1181, %v1243
        %v1248 = vadd.f32 %v1182, %v1244
        %s1249 = sld [smem:[#allocation6 + $0x27]]
        %v1250 = vstv %s1249
        %v1251 = vmul.f32 %v1235, %v1250
        %v1252 = vmul.f32 %v1236, %v1250
        %v1253 = vmul.f32 %v1237, %v1250
        %v1254 = vmul.f32 %v1238, %v1250
        %v1255 = vadd.f32 %v1205, %v1251
        %v1256 = vadd.f32 %v1206, %v1252
        %v1257 = vadd.f32 %v1207, %v1253
        %v1258 = vadd.f32 %v1208, %v1254
        %s1259 = sld [smem:[#allocation6 + $0x42]]
        %v1260 = vstv %s1259
        %v1261 = vmul.f32 %v1235, %v1260
        %v1262 = vmul.f32 %v1236, %v1260
        %v1263 = vmul.f32 %v1237, %v1260
        %v1264 = vmul.f32 %v1238, %v1260
        %v1265 = vadd.f32 %v1231, %v1261
        %v1266 = vadd.f32 %v1232, %v1262
        %v1267 = vadd.f32 %v1233, %v1263
        %v1268 = vadd.f32 %v1234, %v1264
        %s1269 = sld [smem:[#allocation6 + $0xd]]
        %v1270 = vstv %s1269
        %v1271 = vmul.f32 %v1235, %v1270
        %v1272 = vmul.f32 %v1236, %v1270
        %v1273 = vmul.f32 %v1237, %v1270
        %v1274 = vmul.f32 %v1238, %v1270
        %1279 = vrot.lane.b32.xlu0 %v1271, 127
        %v1280 = vpop.permute.xlu0 %1279
        %1281 = vrot.lane.b32.xlu0 %v1272, 127
        %v1282 = vpop.permute.xlu0 %1281
        %1283 = vrot.lane.b32.xlu0 %v1273, 127
        %v1284 = vpop.permute.xlu0 %1283
        %1285 = vrot.lane.b32.xlu0 %v1274, 127
        %v1286 = vpop.permute.xlu0 %1285
        %v1291 = vadd.f32 %v1245, %v1280
        %v1292 = vadd.f32 %v1246, %v1282
        %v1293 = vadd.f32 %v1247, %v1284
        %v1294 = vadd.f32 %v1248, %v1286
        %s1295 = sld [smem:[#allocation6 + $0x28]]
        %v1296 = vstv %s1295
        %v1297 = vmul.f32 %v1235, %v1296
        %v1298 = vmul.f32 %v1236, %v1296
        %v1299 = vmul.f32 %v1237, %v1296
        %v1300 = vmul.f32 %v1238, %v1296
        %1305 = vrot.lane.b32.xlu0 %v1297, 127
        %v1306 = vpop.permute.xlu0 %1305
        %1307 = vrot.lane.b32.xlu0 %v1298, 127
        %v1308 = vpop.permute.xlu0 %1307
        %1309 = vrot.lane.b32.xlu0 %v1299, 127
        %v1310 = vpop.permute.xlu0 %1309
        %1311 = vrot.lane.b32.xlu0 %v1300, 127
        %v1312 = vpop.permute.xlu0 %1311
        %v1317 = vadd.f32 %v1255, %v1306
        %v1318 = vadd.f32 %v1256, %v1308
        %v1319 = vadd.f32 %v1257, %v1310
        %v1320 = vadd.f32 %v1258, %v1312
        %s1321 = sld [smem:[#allocation6 + $0x43]]
        %v1322 = vstv %s1321
        %v1323 = vmul.f32 %v1235, %v1322
        %v1324 = vmul.f32 %v1236, %v1322
        %v1325 = vmul.f32 %v1237, %v1322
        %v1326 = vmul.f32 %v1238, %v1322
        %1331 = vrot.lane.b32.xlu0 %v1323, 127
        %v1332 = vpop.permute.xlu0 %1331
        %1333 = vrot.lane.b32.xlu0 %v1324, 127
        %v1334 = vpop.permute.xlu0 %1333
        %1335 = vrot.lane.b32.xlu0 %v1325, 127
        %v1336 = vpop.permute.xlu0 %1335
        %1337 = vrot.lane.b32.xlu0 %v1326, 127
        %v1338 = vpop.permute.xlu0 %1337
        %v1343 = vadd.f32 %v1265, %v1332
        %v1344 = vadd.f32 %v1266, %v1334
        %v1345 = vadd.f32 %v1267, %v1336
        %v1346 = vadd.f32 %v1268, %v1338
        %s1347 = sld [smem:[#allocation6 + $0xe]]
        %v1348 = vstv %s1347
        %v1349 = vmul.f32 %v1235, %v1348
        %v1350 = vmul.f32 %v1236, %v1348
        %v1351 = vmul.f32 %v1237, %v1348
        %v1352 = vmul.f32 %v1238, %v1348
        %1357 = vrot.lane.b32.xlu0 %v1349, 126
        %v1358 = vpop.permute.xlu0 %1357
        %1359 = vrot.lane.b32.xlu0 %v1350, 126
        %v1360 = vpop.permute.xlu0 %1359
        %1361 = vrot.lane.b32.xlu0 %v1351, 126
        %v1362 = vpop.permute.xlu0 %1361
        %1363 = vrot.lane.b32.xlu0 %v1352, 126
        %v1364 = vpop.permute.xlu0 %1363
        %v1369 = vadd.f32 %v1291, %v1358
        %v1370 = vadd.f32 %v1292, %v1360
        %v1371 = vadd.f32 %v1293, %v1362
        %v1372 = vadd.f32 %v1294, %v1364
        %s1373 = sld [smem:[#allocation6 + $0x29]]
        %v1374 = vstv %s1373
        %v1375 = vmul.f32 %v1235, %v1374
        %v1376 = vmul.f32 %v1236, %v1374
        %v1377 = vmul.f32 %v1237, %v1374
        %v1378 = vmul.f32 %v1238, %v1374
        %1383 = vrot.lane.b32.xlu0 %v1375, 126
        %v1384 = vpop.permute.xlu0 %1383
        %1385 = vrot.lane.b32.xlu0 %v1376, 126
        %v1386 = vpop.permute.xlu0 %1385
        %1387 = vrot.lane.b32.xlu0 %v1377, 126
        %v1388 = vpop.permute.xlu0 %1387
        %1389 = vrot.lane.b32.xlu0 %v1378, 126
        %v1390 = vpop.permute.xlu0 %1389
        %v1395 = vadd.f32 %v1317, %v1384
        %v1396 = vadd.f32 %v1318, %v1386
        %v1397 = vadd.f32 %v1319, %v1388
        %v1398 = vadd.f32 %v1320, %v1390
        %s1399 = sld [smem:[#allocation6 + $0x44]]
        %v1400 = vstv %s1399
        %v1401 = vmul.f32 %v1235, %v1400
        %v1402 = vmul.f32 %v1236, %v1400
        %v1403 = vmul.f32 %v1237, %v1400
        %v1404 = vmul.f32 %v1238, %v1400
        %1409 = vrot.lane.b32.xlu0 %v1401, 126
        %v1410 = vpop.permute.xlu0 %1409
        %1411 = vrot.lane.b32.xlu0 %v1402, 126
        %v1412 = vpop.permute.xlu0 %1411
        %1413 = vrot.lane.b32.xlu0 %v1403, 126
        %v1414 = vpop.permute.xlu0 %1413
        %1415 = vrot.lane.b32.xlu0 %v1404, 126
        %v1416 = vpop.permute.xlu0 %1415
        %v1421 = vadd.f32 %v1343, %v1410
        %v1422 = vadd.f32 %v1344, %v1412
        %v1423 = vadd.f32 %v1345, %v1414
        %v1424 = vadd.f32 %v1346, %v1416
        %v1425 = vld [vmem:[%s431 + $0x2] sm:$0xff]
        %v1426 = vld [vmem:[%s431 + $0xa] sm:$0xff]
        %v1427 = vld [vmem:[%s431 + $0x12] sm:$0xff]
        %v1428 = vld [vmem:[%s431 + $0x1a] sm:$0xf]
        %s1429 = sld [smem:[#allocation6 + $0xf]]
        %v1430 = vstv %s1429
        %v1431 = vmul.f32 %v1425, %v1430
        %v1432 = vmul.f32 %v1426, %v1430
        %v1433 = vmul.f32 %v1427, %v1430
        %v1434 = vmul.f32 %v1428, %v1430
        %v1435 = vadd.f32 %v1369, %v1431
        %v1436 = vadd.f32 %v1370, %v1432
        %v1437 = vadd.f32 %v1371, %v1433
        %v1438 = vadd.f32 %v1372, %v1434
        %s1439 = sld [smem:[#allocation6 + $0x2a]]
        %v1440 = vstv %s1439
        %v1441 = vmul.f32 %v1425, %v1440
        %v1442 = vmul.f32 %v1426, %v1440
        %v1443 = vmul.f32 %v1427, %v1440
        %v1444 = vmul.f32 %v1428, %v1440
        %v1445 = vadd.f32 %v1395, %v1441
        %v1446 = vadd.f32 %v1396, %v1442
        %v1447 = vadd.f32 %v1397, %v1443
        %v1448 = vadd.f32 %v1398, %v1444
        %s1449 = sld [smem:[#allocation6 + $0x45]]
        %v1450 = vstv %s1449
        %v1451 = vmul.f32 %v1425, %v1450
        %v1452 = vmul.f32 %v1426, %v1450
        %v1453 = vmul.f32 %v1427, %v1450
        %v1454 = vmul.f32 %v1428, %v1450
        %v1455 = vadd.f32 %v1421, %v1451
        %v1456 = vadd.f32 %v1422, %v1452
        %v1457 = vadd.f32 %v1423, %v1453
        %v1458 = vadd.f32 %v1424, %v1454
        %s1459 = sld [smem:[#allocation6 + $0x10]]
        %v1460 = vstv %s1459
        %v1461 = vmul.f32 %v1425, %v1460
        %v1462 = vmul.f32 %v1426, %v1460
        %v1463 = vmul.f32 %v1427, %v1460
        %v1464 = vmul.f32 %v1428, %v1460
        %1469 = vrot.lane.b32.xlu0 %v1461, 127
        %v1470 = vpop.permute.xlu0 %1469
        %1471 = vrot.lane.b32.xlu0 %v1462, 127
        %v1472 = vpop.permute.xlu0 %1471
        %1473 = vrot.lane.b32.xlu0 %v1463, 127
        %v1474 = vpop.permute.xlu0 %1473
        %1475 = vrot.lane.b32.xlu0 %v1464, 127
        %v1476 = vpop.permute.xlu0 %1475
        %v1481 = vadd.f32 %v1435, %v1470
        %v1482 = vadd.f32 %v1436, %v1472
        %v1483 = vadd.f32 %v1437, %v1474
        %v1484 = vadd.f32 %v1438, %v1476
        %s1485 = sld [smem:[#allocation6 + $0x2b]]
        %v1486 = vstv %s1485
        %v1487 = vmul.f32 %v1425, %v1486
        %v1488 = vmul.f32 %v1426, %v1486
        %v1489 = vmul.f32 %v1427, %v1486
        %v1490 = vmul.f32 %v1428, %v1486
        %1495 = vrot.lane.b32.xlu0 %v1487, 127
        %v1496 = vpop.permute.xlu0 %1495
        %1497 = vrot.lane.b32.xlu0 %v1488, 127
        %v1498 = vpop.permute.xlu0 %1497
        %1499 = vrot.lane.b32.xlu0 %v1489, 127
        %v1500 = vpop.permute.xlu0 %1499
        %1501 = vrot.lane.b32.xlu0 %v1490, 127
        %v1502 = vpop.permute.xlu0 %1501
        %v1507 = vadd.f32 %v1445, %v1496
        %v1508 = vadd.f32 %v1446, %v1498
        %v1509 = vadd.f32 %v1447, %v1500
        %v1510 = vadd.f32 %v1448, %v1502
        %s1511 = sld [smem:[#allocation6 + $0x46]]
        %v1512 = vstv %s1511
        %v1513 = vmul.f32 %v1425, %v1512
        %v1514 = vmul.f32 %v1426, %v1512
        %v1515 = vmul.f32 %v1427, %v1512
        %v1516 = vmul.f32 %v1428, %v1512
        %1521 = vrot.lane.b32.xlu0 %v1513, 127
        %v1522 = vpop.permute.xlu0 %1521
        %1523 = vrot.lane.b32.xlu0 %v1514, 127
        %v1524 = vpop.permute.xlu0 %1523
        %1525 = vrot.lane.b32.xlu0 %v1515, 127
        %v1526 = vpop.permute.xlu0 %1525
        %1527 = vrot.lane.b32.xlu0 %v1516, 127
        %v1528 = vpop.permute.xlu0 %1527
        %v1533 = vadd.f32 %v1455, %v1522
        %v1534 = vadd.f32 %v1456, %v1524
        %v1535 = vadd.f32 %v1457, %v1526
        %v1536 = vadd.f32 %v1458, %v1528
        %s1537 = sld [smem:[#allocation6 + $0x11]]
        %v1538 = vstv %s1537
        %v1539 = vmul.f32 %v1425, %v1538
        %v1540 = vmul.f32 %v1426, %v1538
        %v1541 = vmul.f32 %v1427, %v1538
        %v1542 = vmul.f32 %v1428, %v1538
        %1547 = vrot.lane.b32.xlu0 %v1539, 126
        %v1548 = vpop.permute.xlu0 %1547
        %1549 = vrot.lane.b32.xlu0 %v1540, 126
        %v1550 = vpop.permute.xlu0 %1549
        %1551 = vrot.lane.b32.xlu0 %v1541, 126
        %v1552 = vpop.permute.xlu0 %1551
        %1553 = vrot.lane.b32.xlu0 %v1542, 126
        %v1554 = vpop.permute.xlu0 %1553
        %v1559 = vadd.f32 %v1481, %v1548
        %v1560 = vadd.f32 %v1482, %v1550
        %v1561 = vadd.f32 %v1483, %v1552
        %v1562 = vadd.f32 %v1484, %v1554
        %s1563 = sld [smem:[#allocation6 + $0x2c]]
        %v1564 = vstv %s1563
        %v1565 = vmul.f32 %v1425, %v1564
        %v1566 = vmul.f32 %v1426, %v1564
        %v1567 = vmul.f32 %v1427, %v1564
        %v1568 = vmul.f32 %v1428, %v1564
        %1573 = vrot.lane.b32.xlu0 %v1565, 126
        %v1574 = vpop.permute.xlu0 %1573
        %1575 = vrot.lane.b32.xlu0 %v1566, 126
        %v1576 = vpop.permute.xlu0 %1575
        %1577 = vrot.lane.b32.xlu0 %v1567, 126
        %v1578 = vpop.permute.xlu0 %1577
        %1579 = vrot.lane.b32.xlu0 %v1568, 126
        %v1580 = vpop.permute.xlu0 %1579
        %v1585 = vadd.f32 %v1507, %v1574
        %v1586 = vadd.f32 %v1508, %v1576
        %v1587 = vadd.f32 %v1509, %v1578
        %v1588 = vadd.f32 %v1510, %v1580
        %s1589 = sld [smem:[#allocation6 + $0x47]]
        %v1590 = vstv %s1589
        %v1591 = vmul.f32 %v1425, %v1590
        %v1592 = vmul.f32 %v1426, %v1590
        %v1593 = vmul.f32 %v1427, %v1590
        %v1594 = vmul.f32 %v1428, %v1590
        %1599 = vrot.lane.b32.xlu0 %v1591, 126
        %v1600 = vpop.permute.xlu0 %1599
        %1601 = vrot.lane.b32.xlu0 %v1592, 126
        %v1602 = vpop.permute.xlu0 %1601
        %1603 = vrot.lane.b32.xlu0 %v1593, 126
        %v1604 = vpop.permute.xlu0 %1603
        %1605 = vrot.lane.b32.xlu0 %v1594, 126
        %v1606 = vpop.permute.xlu0 %1605
        %v1611 = vadd.f32 %v1533, %v1600
        %v1612 = vadd.f32 %v1534, %v1602
        %v1613 = vadd.f32 %v1535, %v1604
        %v1614 = vadd.f32 %v1536, %v1606
        %v1615 = vld [vmem:[%s457] sm:$0xff]
        %v1616 = vld [vmem:[%s457 + $0x8] sm:$0xff]
        %v1617 = vld [vmem:[%s457 + $0x10] sm:$0xff]
        %v1618 = vld [vmem:[%s457 + $0x18] sm:$0xf]
        %s1619 = sld [smem:[#allocation6 + $0x12]]
        %v1620 = vstv %s1619
        %v1621 = vmul.f32 %v1615, %v1620
        %v1622 = vmul.f32 %v1616, %v1620
        %v1623 = vmul.f32 %v1617, %v1620
        %v1624 = vmul.f32 %v1618, %v1620
        %v1625 = vadd.f32 %v1559, %v1621
        %v1626 = vadd.f32 %v1560, %v1622
        %v1627 = vadd.f32 %v1561, %v1623
        %v1628 = vadd.f32 %v1562, %v1624
        %s1629 = sld [smem:[#allocation6 + $0x2d]]
        %v1630 = vstv %s1629
        %v1631 = vmul.f32 %v1615, %v1630
        %v1632 = vmul.f32 %v1616, %v1630
        %v1633 = vmul.f32 %v1617, %v1630
        %v1634 = vmul.f32 %v1618, %v1630
        %v1635 = vadd.f32 %v1585, %v1631
        %v1636 = vadd.f32 %v1586, %v1632
        %v1637 = vadd.f32 %v1587, %v1633
        %v1638 = vadd.f32 %v1588, %v1634
        %s1639 = sld [smem:[#allocation6 + $0x48]]
        %v1640 = vstv %s1639
        %v1641 = vmul.f32 %v1615, %v1640
        %v1642 = vmul.f32 %v1616, %v1640
        %v1643 = vmul.f32 %v1617, %v1640
        %v1644 = vmul.f32 %v1618, %v1640
        %v1645 = vadd.f32 %v1611, %v1641
        %v1646 = vadd.f32 %v1612, %v1642
        %v1647 = vadd.f32 %v1613, %v1643
        %v1648 = vadd.f32 %v1614, %v1644
        %s1649 = sld [smem:[#allocation6 + $0x13]]
        %v1650 = vstv %s1649
        %v1651 = vmul.f32 %v1615, %v1650
        %v1652 = vmul.f32 %v1616, %v1650
        %v1653 = vmul.f32 %v1617, %v1650
        %v1654 = vmul.f32 %v1618, %v1650
        %1659 = vrot.lane.b32.xlu0 %v1651, 127
        %v1660 = vpop.permute.xlu0 %1659
        %1661 = vrot.lane.b32.xlu0 %v1652, 127
        %v1662 = vpop.permute.xlu0 %1661
        %1663 = vrot.lane.b32.xlu0 %v1653, 127
        %v1664 = vpop.permute.xlu0 %1663
        %1665 = vrot.lane.b32.xlu0 %v1654, 127
        %v1666 = vpop.permute.xlu0 %1665
        %v1671 = vadd.f32 %v1625, %v1660
        %v1672 = vadd.f32 %v1626, %v1662
        %v1673 = vadd.f32 %v1627, %v1664
        %v1674 = vadd.f32 %v1628, %v1666
        %s1675 = sld [smem:[#allocation6 + $0x2e]]
        %v1676 = vstv %s1675
        %v1677 = vmul.f32 %v1615, %v1676
        %v1678 = vmul.f32 %v1616, %v1676
        %v1679 = vmul.f32 %v1617, %v1676
        %v1680 = vmul.f32 %v1618, %v1676
        %1685 = vrot.lane.b32.xlu0 %v1677, 127
        %v1686 = vpop.permute.xlu0 %1685
        %1687 = vrot.lane.b32.xlu0 %v1678, 127
        %v1688 = vpop.permute.xlu0 %1687
        %1689 = vrot.lane.b32.xlu0 %v1679, 127
        %v1690 = vpop.permute.xlu0 %1689
        %1691 = vrot.lane.b32.xlu0 %v1680, 127
        %v1692 = vpop.permute.xlu0 %1691
        %v1697 = vadd.f32 %v1635, %v1686
        %v1698 = vadd.f32 %v1636, %v1688
        %v1699 = vadd.f32 %v1637, %v1690
        %v1700 = vadd.f32 %v1638, %v1692
        %s1701 = sld [smem:[#allocation6 + $0x49]]
        %v1702 = vstv %s1701
        %v1703 = vmul.f32 %v1615, %v1702
        %v1704 = vmul.f32 %v1616, %v1702
        %v1705 = vmul.f32 %v1617, %v1702
        %v1706 = vmul.f32 %v1618, %v1702
        %1711 = vrot.lane.b32.xlu0 %v1703, 127
        %v1712 = vpop.permute.xlu0 %1711
        %1713 = vrot.lane.b32.xlu0 %v1704, 127
        %v1714 = vpop.permute.xlu0 %1713
        %1715 = vrot.lane.b32.xlu0 %v1705, 127
        %v1716 = vpop.permute.xlu0 %1715
        %1717 = vrot.lane.b32.xlu0 %v1706, 127
        %v1718 = vpop.permute.xlu0 %1717
        %v1723 = vadd.f32 %v1645, %v1712
        %v1724 = vadd.f32 %v1646, %v1714
        %v1725 = vadd.f32 %v1647, %v1716
        %v1726 = vadd.f32 %v1648, %v1718
        %s1727 = sld [smem:[#allocation6 + $0x14]]
        %v1728 = vstv %s1727
        %v1729 = vmul.f32 %v1615, %v1728
        %v1730 = vmul.f32 %v1616, %v1728
        %v1731 = vmul.f32 %v1617, %v1728
        %v1732 = vmul.f32 %v1618, %v1728
        %1737 = vrot.lane.b32.xlu0 %v1729, 126
        %v1738 = vpop.permute.xlu0 %1737
        %1739 = vrot.lane.b32.xlu0 %v1730, 126
        %v1740 = vpop.permute.xlu0 %1739
        %1741 = vrot.lane.b32.xlu0 %v1731, 126
        %v1742 = vpop.permute.xlu0 %1741
        %1743 = vrot.lane.b32.xlu0 %v1732, 126
        %v1744 = vpop.permute.xlu0 %1743
        %v1749 = vadd.f32 %v1671, %v1738
        %v1750 = vadd.f32 %v1672, %v1740
        %v1751 = vadd.f32 %v1673, %v1742
        %v1752 = vadd.f32 %v1674, %v1744
        %s1753 = sld [smem:[#allocation6 + $0x2f]]
        %v1754 = vstv %s1753
        %v1755 = vmul.f32 %v1615, %v1754
        %v1756 = vmul.f32 %v1616, %v1754
        %v1757 = vmul.f32 %v1617, %v1754
        %v1758 = vmul.f32 %v1618, %v1754
        %1763 = vrot.lane.b32.xlu0 %v1755, 126
        %v1764 = vpop.permute.xlu0 %1763
        %1765 = vrot.lane.b32.xlu0 %v1756, 126
        %v1766 = vpop.permute.xlu0 %1765
        %1767 = vrot.lane.b32.xlu0 %v1757, 126
        %v1768 = vpop.permute.xlu0 %1767
        %1769 = vrot.lane.b32.xlu0 %v1758, 126
        %v1770 = vpop.permute.xlu0 %1769
        %v1775 = vadd.f32 %v1697, %v1764
        %v1776 = vadd.f32 %v1698, %v1766
        %v1777 = vadd.f32 %v1699, %v1768
        %v1778 = vadd.f32 %v1700, %v1770
        %s1779 = sld [smem:[#allocation6 + $0x4a]]
        %v1780 = vstv %s1779
        %v1781 = vmul.f32 %v1615, %v1780
        %v1782 = vmul.f32 %v1616, %v1780
        %v1783 = vmul.f32 %v1617, %v1780
        %v1784 = vmul.f32 %v1618, %v1780
        %1789 = vrot.lane.b32.xlu0 %v1781, 126
        %v1790 = vpop.permute.xlu0 %1789
        %1791 = vrot.lane.b32.xlu0 %v1782, 126
        %v1792 = vpop.permute.xlu0 %1791
        %1793 = vrot.lane.b32.xlu0 %v1783, 126
        %v1794 = vpop.permute.xlu0 %1793
        %1795 = vrot.lane.b32.xlu0 %v1784, 126
        %v1796 = vpop.permute.xlu0 %1795
        %v1801 = vadd.f32 %v1723, %v1790
        %v1802 = vadd.f32 %v1724, %v1792
        %v1803 = vadd.f32 %v1725, %v1794
        %v1804 = vadd.f32 %v1726, %v1796
        %v1805 = vld [vmem:[%s457 + $0x1] sm:$0xff]
        %v1806 = vld [vmem:[%s457 + $0x9] sm:$0xff]
        %v1807 = vld [vmem:[%s457 + $0x11] sm:$0xff]
        %v1808 = vld [vmem:[%s457 + $0x19] sm:$0xf]
        %s1809 = sld [smem:[#allocation6 + $0x15]]
        %v1810 = vstv %s1809
        %v1811 = vmul.f32 %v1805, %v1810
        %v1812 = vmul.f32 %v1806, %v1810
        %v1813 = vmul.f32 %v1807, %v1810
        %v1814 = vmul.f32 %v1808, %v1810
        %v1815 = vadd.f32 %v1749, %v1811
        %v1816 = vadd.f32 %v1750, %v1812
        %v1817 = vadd.f32 %v1751, %v1813
        %v1818 = vadd.f32 %v1752, %v1814
        %s1819 = sld [smem:[#allocation6 + $0x30]]
        %v1820 = vstv %s1819
        %v1821 = vmul.f32 %v1805, %v1820
        %v1822 = vmul.f32 %v1806, %v1820
        %v1823 = vmul.f32 %v1807, %v1820
        %v1824 = vmul.f32 %v1808, %v1820
        %v1825 = vadd.f32 %v1775, %v1821
        %v1826 = vadd.f32 %v1776, %v1822
        %v1827 = vadd.f32 %v1777, %v1823
        %v1828 = vadd.f32 %v1778, %v1824
        %s1829 = sld [smem:[#allocation6 + $0x4b]]
        %v1830 = vstv %s1829
        %v1831 = vmul.f32 %v1805, %v1830
        %v1832 = vmul.f32 %v1806, %v1830
        %v1833 = vmul.f32 %v1807, %v1830
        %v1834 = vmul.f32 %v1808, %v1830
        %v1835 = vadd.f32 %v1801, %v1831
        %v1836 = vadd.f32 %v1802, %v1832
        %v1837 = vadd.f32 %v1803, %v1833
        %v1838 = vadd.f32 %v1804, %v1834
        %s1839 = sld [smem:[#allocation6 + $0x16]]
        %v1840 = vstv %s1839
        %v1841 = vmul.f32 %v1805, %v1840
        %v1842 = vmul.f32 %v1806, %v1840
        %v1843 = vmul.f32 %v1807, %v1840
        %v1844 = vmul.f32 %v1808, %v1840
        %1849 = vrot.lane.b32.xlu0 %v1841, 127
        %v1850 = vpop.permute.xlu0 %1849
        %1851 = vrot.lane.b32.xlu0 %v1842, 127
        %v1852 = vpop.permute.xlu0 %1851
        %1853 = vrot.lane.b32.xlu0 %v1843, 127
        %v1854 = vpop.permute.xlu0 %1853
        %1855 = vrot.lane.b32.xlu0 %v1844, 127
        %v1856 = vpop.permute.xlu0 %1855
        %v1861 = vadd.f32 %v1815, %v1850
        %v1862 = vadd.f32 %v1816, %v1852
        %v1863 = vadd.f32 %v1817, %v1854
        %v1864 = vadd.f32 %v1818, %v1856
        %s1865 = sld [smem:[#allocation6 + $0x31]]
        %v1866 = vstv %s1865
        %v1867 = vmul.f32 %v1805, %v1866
        %v1868 = vmul.f32 %v1806, %v1866
        %v1869 = vmul.f32 %v1807, %v1866
        %v1870 = vmul.f32 %v1808, %v1866
        %1875 = vrot.lane.b32.xlu0 %v1867, 127
        %v1876 = vpop.permute.xlu0 %1875
        %1877 = vrot.lane.b32.xlu0 %v1868, 127
        %v1878 = vpop.permute.xlu0 %1877
        %1879 = vrot.lane.b32.xlu0 %v1869, 127
        %v1880 = vpop.permute.xlu0 %1879
        %1881 = vrot.lane.b32.xlu0 %v1870, 127
        %v1882 = vpop.permute.xlu0 %1881
        %v1887 = vadd.f32 %v1825, %v1876
        %v1888 = vadd.f32 %v1826, %v1878
        %v1889 = vadd.f32 %v1827, %v1880
        %v1890 = vadd.f32 %v1828, %v1882
        %s1891 = sld [smem:[#allocation6 + $0x4c]]
        %v1892 = vstv %s1891
        %v1893 = vmul.f32 %v1805, %v1892
        %v1894 = vmul.f32 %v1806, %v1892
        %v1895 = vmul.f32 %v1807, %v1892
        %v1896 = vmul.f32 %v1808, %v1892
        %1901 = vrot.lane.b32.xlu0 %v1893, 127
        %v1902 = vpop.permute.xlu0 %1901
        %1903 = vrot.lane.b32.xlu0 %v1894, 127
        %v1904 = vpop.permute.xlu0 %1903
        %1905 = vrot.lane.b32.xlu0 %v1895, 127
        %v1906 = vpop.permute.xlu0 %1905
        %1907 = vrot.lane.b32.xlu0 %v1896, 127
        %v1908 = vpop.permute.xlu0 %1907
        %v1913 = vadd.f32 %v1835, %v1902
        %v1914 = vadd.f32 %v1836, %v1904
        %v1915 = vadd.f32 %v1837, %v1906
        %v1916 = vadd.f32 %v1838, %v1908
        %s1917 = sld [smem:[#allocation6 + $0x17]]
        %v1918 = vstv %s1917
        %v1919 = vmul.f32 %v1805, %v1918
        %v1920 = vmul.f32 %v1806, %v1918
        %v1921 = vmul.f32 %v1807, %v1918
        %v1922 = vmul.f32 %v1808, %v1918
        %1927 = vrot.lane.b32.xlu0 %v1919, 126
        %v1928 = vpop.permute.xlu0 %1927
        %1929 = vrot.lane.b32.xlu0 %v1920, 126
        %v1930 = vpop.permute.xlu0 %1929
        %1931 = vrot.lane.b32.xlu0 %v1921, 126
        %v1932 = vpop.permute.xlu0 %1931
        %1933 = vrot.lane.b32.xlu0 %v1922, 126
        %v1934 = vpop.permute.xlu0 %1933
        %v1939 = vadd.f32 %v1861, %v1928
        %v1940 = vadd.f32 %v1862, %v1930
        %v1941 = vadd.f32 %v1863, %v1932
        %v1942 = vadd.f32 %v1864, %v1934
        %s1943 = sld [smem:[#allocation6 + $0x32]]
        %v1944 = vstv %s1943
        %v1945 = vmul.f32 %v1805, %v1944
        %v1946 = vmul.f32 %v1806, %v1944
        %v1947 = vmul.f32 %v1807, %v1944
        %v1948 = vmul.f32 %v1808, %v1944
        %1953 = vrot.lane.b32.xlu0 %v1945, 126
        %v1954 = vpop.permute.xlu0 %1953
        %1955 = vrot.lane.b32.xlu0 %v1946, 126
        %v1956 = vpop.permute.xlu0 %1955
        %1957 = vrot.lane.b32.xlu0 %v1947, 126
        %v1958 = vpop.permute.xlu0 %1957
        %1959 = vrot.lane.b32.xlu0 %v1948, 126
        %v1960 = vpop.permute.xlu0 %1959
        %v1965 = vadd.f32 %v1887, %v1954
        %v1966 = vadd.f32 %v1888, %v1956
        %v1967 = vadd.f32 %v1889, %v1958
        %v1968 = vadd.f32 %v1890, %v1960
        %s1969 = sld [smem:[#allocation6 + $0x4d]]
        %v1970 = vstv %s1969
        %v1971 = vmul.f32 %v1805, %v1970
        %v1972 = vmul.f32 %v1806, %v1970
        %v1973 = vmul.f32 %v1807, %v1970
        %v1974 = vmul.f32 %v1808, %v1970
        %1979 = vrot.lane.b32.xlu0 %v1971, 126
        %v1980 = vpop.permute.xlu0 %1979
        %1981 = vrot.lane.b32.xlu0 %v1972, 126
        %v1982 = vpop.permute.xlu0 %1981
        %1983 = vrot.lane.b32.xlu0 %v1973, 126
        %v1984 = vpop.permute.xlu0 %1983
        %1985 = vrot.lane.b32.xlu0 %v1974, 126
        %v1986 = vpop.permute.xlu0 %1985
        %v1991 = vadd.f32 %v1913, %v1980
        %v1992 = vadd.f32 %v1914, %v1982
        %v1993 = vadd.f32 %v1915, %v1984
        %v1994 = vadd.f32 %v1916, %v1986
        %v1995 = vld [vmem:[%s457 + $0x2] sm:$0xff]
        %v1996 = vld [vmem:[%s457 + $0xa] sm:$0xff]
        %v1997 = vld [vmem:[%s457 + $0x12] sm:$0xff]
        %v1998 = vld [vmem:[%s457 + $0x1a] sm:$0xf]
        %s1999 = sld [smem:[#allocation6 + $0x18]]
        %v2000 = vstv %s1999
        %v2001 = vmul.f32 %v1995, %v2000
        %v2002 = vmul.f32 %v1996, %v2000
        %v2003 = vmul.f32 %v1997, %v2000
        %v2004 = vmul.f32 %v1998, %v2000
        %v2005 = vadd.f32 %v1939, %v2001
        %v2006 = vadd.f32 %v1940, %v2002
        %v2007 = vadd.f32 %v1941, %v2003
        %v2008 = vadd.f32 %v1942, %v2004
        %s2009 = sld [smem:[#allocation6 + $0x33]]
        %v2010 = vstv %s2009
        %v2011 = vmul.f32 %v1995, %v2010
        %v2012 = vmul.f32 %v1996, %v2010
        %v2013 = vmul.f32 %v1997, %v2010
        %v2014 = vmul.f32 %v1998, %v2010
        %v2015 = vadd.f32 %v1965, %v2011
        %v2016 = vadd.f32 %v1966, %v2012
        %v2017 = vadd.f32 %v1967, %v2013
        %v2018 = vadd.f32 %v1968, %v2014
        %s2019 = sld [smem:[#allocation6 + $0x4e]]
        %v2020 = vstv %s2019
        %v2021 = vmul.f32 %v1995, %v2020
        %v2022 = vmul.f32 %v1996, %v2020
        %v2023 = vmul.f32 %v1997, %v2020
        %v2024 = vmul.f32 %v1998, %v2020
        %v2025 = vadd.f32 %v1991, %v2021
        %v2026 = vadd.f32 %v1992, %v2022
        %v2027 = vadd.f32 %v1993, %v2023
        %v2028 = vadd.f32 %v1994, %v2024
        %s2029 = sld [smem:[#allocation6 + $0x19]]
        %v2030 = vstv %s2029
        %v2031 = vmul.f32 %v1995, %v2030
        %v2032 = vmul.f32 %v1996, %v2030
        %v2033 = vmul.f32 %v1997, %v2030
        %v2034 = vmul.f32 %v1998, %v2030
        %2039 = vrot.lane.b32.xlu0 %v2031, 127
        %v2040 = vpop.permute.xlu0 %2039
        %2041 = vrot.lane.b32.xlu0 %v2032, 127
        %v2042 = vpop.permute.xlu0 %2041
        %2043 = vrot.lane.b32.xlu0 %v2033, 127
        %v2044 = vpop.permute.xlu0 %2043
        %2045 = vrot.lane.b32.xlu0 %v2034, 127
        %v2046 = vpop.permute.xlu0 %2045
        %v2051 = vadd.f32 %v2005, %v2040
        %v2052 = vadd.f32 %v2006, %v2042
        %v2053 = vadd.f32 %v2007, %v2044
        %v2054 = vadd.f32 %v2008, %v2046
        %s2055 = sld [smem:[#allocation6 + $0x34]]
        %v2056 = vstv %s2055
        %v2057 = vmul.f32 %v1995, %v2056
        %v2058 = vmul.f32 %v1996, %v2056
        %v2059 = vmul.f32 %v1997, %v2056
        %v2060 = vmul.f32 %v1998, %v2056
        %2065 = vrot.lane.b32.xlu0 %v2057, 127
        %v2066 = vpop.permute.xlu0 %2065
        %2067 = vrot.lane.b32.xlu0 %v2058, 127
        %v2068 = vpop.permute.xlu0 %2067
        %2069 = vrot.lane.b32.xlu0 %v2059, 127
        %v2070 = vpop.permute.xlu0 %2069
        %2071 = vrot.lane.b32.xlu0 %v2060, 127
        %v2072 = vpop.permute.xlu0 %2071
        %v2077 = vadd.f32 %v2015, %v2066
        %v2078 = vadd.f32 %v2016, %v2068
        %v2079 = vadd.f32 %v2017, %v2070
        %v2080 = vadd.f32 %v2018, %v2072
        %s2081 = sld [smem:[#allocation6 + $0x4f]]
        %v2082 = vstv %s2081
        %v2083 = vmul.f32 %v1995, %v2082
        %v2084 = vmul.f32 %v1996, %v2082
        %v2085 = vmul.f32 %v1997, %v2082
        %v2086 = vmul.f32 %v1998, %v2082
        %2091 = vrot.lane.b32.xlu0 %v2083, 127
        %v2092 = vpop.permute.xlu0 %2091
        %2093 = vrot.lane.b32.xlu0 %v2084, 127
        %v2094 = vpop.permute.xlu0 %2093
        %2095 = vrot.lane.b32.xlu0 %v2085, 127
        %v2096 = vpop.permute.xlu0 %2095
        %2097 = vrot.lane.b32.xlu0 %v2086, 127
        %v2098 = vpop.permute.xlu0 %2097
        %v2103 = vadd.f32 %v2025, %v2092
        %v2104 = vadd.f32 %v2026, %v2094
        %v2105 = vadd.f32 %v2027, %v2096
        %v2106 = vadd.f32 %v2028, %v2098
        %s2107 = sld [smem:[#allocation6 + $0x1a]]
        %v2108 = vstv %s2107
        %v2109 = vmul.f32 %v1995, %v2108
        %v2110 = vmul.f32 %v1996, %v2108
        %v2111 = vmul.f32 %v1997, %v2108
        %v2112 = vmul.f32 %v1998, %v2108
        %2117 = vrot.lane.b32.xlu0 %v2109, 126
        %v2118 = vpop.permute.xlu0 %2117
        %2119 = vrot.lane.b32.xlu0 %v2110, 126
        %v2120 = vpop.permute.xlu0 %2119
        %2121 = vrot.lane.b32.xlu0 %v2111, 126
        %v2122 = vpop.permute.xlu0 %2121
        %2123 = vrot.lane.b32.xlu0 %v2112, 126
        %v2124 = vpop.permute.xlu0 %2123
        %v2129 = vadd.f32 %v2051, %v2118
        %v2130 = vadd.f32 %v2052, %v2120
        %v2131 = vadd.f32 %v2053, %v2122
        %v2132 = vadd.f32 %v2054, %v2124
        %s2133 = sld [smem:[#allocation6 + $0x35]]
        %v2134 = vstv %s2133
        %v2135 = vmul.f32 %v1995, %v2134
        %v2136 = vmul.f32 %v1996, %v2134
        %v2137 = vmul.f32 %v1997, %v2134
        %v2138 = vmul.f32 %v1998, %v2134
        %2143 = vrot.lane.b32.xlu0 %v2135, 126
        %v2144 = vpop.permute.xlu0 %2143
        %2145 = vrot.lane.b32.xlu0 %v2136, 126
        %v2146 = vpop.permute.xlu0 %2145
        %2147 = vrot.lane.b32.xlu0 %v2137, 126
        %v2148 = vpop.permute.xlu0 %2147
        %2149 = vrot.lane.b32.xlu0 %v2138, 126
        %v2150 = vpop.permute.xlu0 %2149
        %v2155 = vadd.f32 %v2077, %v2144
        %v2156 = vadd.f32 %v2078, %v2146
        %v2157 = vadd.f32 %v2079, %v2148
        %v2158 = vadd.f32 %v2080, %v2150
        %s2159 = sld [smem:[#allocation6 + $0x50]]
        %v2160 = vstv %s2159
        %v2161 = vmul.f32 %v1995, %v2160
        %v2162 = vmul.f32 %v1996, %v2160
        %v2163 = vmul.f32 %v1997, %v2160
        %v2164 = vmul.f32 %v1998, %v2160
        %2169 = vrot.lane.b32.xlu0 %v2161, 126
        %v2170 = vpop.permute.xlu0 %2169
        %2171 = vrot.lane.b32.xlu0 %v2162, 126
        %v2172 = vpop.permute.xlu0 %2171
        %2173 = vrot.lane.b32.xlu0 %v2163, 126
        %v2174 = vpop.permute.xlu0 %2173
        %2175 = vrot.lane.b32.xlu0 %v2164, 126
        %v2176 = vpop.permute.xlu0 %2175
        %v2181 = vadd.f32 %v2103, %v2170
        %v2182 = vadd.f32 %v2104, %v2172
        %v2183 = vadd.f32 %v2105, %v2174
        %v2184 = vadd.f32 %v2106, %v2176
        %s2185 = sld [smem:[#allocation9]]
        %v2186 = vstv %s2185
        %v2187 = vadd.f32 %v2129, %v2186
        %v2188 = vadd.f32 %v2130, %v2186
        %v2189 = vadd.f32 %v2131, %v2186
        %v2190 = vadd.f32 %v2132, %v2186
        %v2191 = vsub.f32 0.0, %v2187
        %v2192 = vsub.f32 0.0, %v2188
        %v2193 = vsub.f32 0.0, %v2189
        %v2194 = vsub.f32 0.0, %v2190
        %v2195 = vmul.f32 %v2191, 1.442695
        %v2196 = vpow.pop %v2195
        %v2197 = vmul.f32 %v2192, 1.442695
        %v2198 = vpow.pop %v2197
        %v2199 = vmul.f32 %v2193, 1.442695
        %v2200 = vpow.pop %v2199
        %v2201 = vmul.f32 %v2194, 1.442695
        %v2202 = vpow.pop %v2201
        %v2203 = vadd.f32 %v2196, 1.0
        %v2204 = vadd.f32 %v2198, 1.0
        %v2205 = vadd.f32 %v2200, 1.0
        %v2206 = vadd.f32 %v2202, 1.0
        %v2207 = vrcp.pop %v2203
        %v2208 = vmul.f32 1.0, %v2207
        %v2209 = vrcp.pop %v2204
        %v2210 = vmul.f32 1.0, %v2209
        %v2211 = vrcp.pop %v2205
        %v2212 = vmul.f32 1.0, %v2211
        %v2213 = vrcp.pop %v2206
        %v2214 = vmul.f32 1.0, %v2213
        %2219 = vrot.lane.b32.xlu0 %v2208, 2
        %v2220 = vpop.permute.xlu0 %2219
        %2221 = vrot.lane.b32.xlu0 %v2210, 2
        %v2222 = vpop.permute.xlu0 %2221
        %2223 = vrot.lane.b32.xlu0 %v2212, 2
        %v2224 = vpop.permute.xlu0 %2223
        %2225 = vrot.lane.b32.xlu0 %v2214, 2
        %v2226 = vpop.permute.xlu0 %2225
        %vm2231 = vcmask 244752
        %2232 = vst.msk [vmem:[#allocation3 + $0x2] sm:$0xff] %vm2231, %v2220
        %2233 = vst.msk [vmem:[#allocation3 + $0xa] sm:$0xff] %vm2231, %v2222
        %2234 = vst.msk [vmem:[#allocation3 + $0x12] sm:$0xff] %vm2231, %v2224
        %vm2235 = vcmask 240656
        %2236 = vst.msk [vmem:[#allocation3 + $0x1a] sm:$0xf] %vm2235, %v2226
        %v2237 = vld [vmem:[#allocation3 + $0x2] sm:$0xff]
        %v2238 = vld [vmem:[#allocation3 + $0xa] sm:$0xff]
        %v2239 = vld [vmem:[#allocation3 + $0x12] sm:$0xff]
        %v2240 = vld [vmem:[#allocation3 + $0x1a] sm:$0xf]
        %v2241 = vld [vmem:[#allocation3 + $0x3] sm:$0xff]
        %v2242 = vld [vmem:[#allocation3 + $0xb] sm:$0xff]
        %v2243 = vld [vmem:[#allocation3 + $0x13] sm:$0xff]
        %v2244 = vld [vmem:[#allocation3 + $0x1b] sm:$0xf]
        %2249 = vrot.lane.b32.xlu0 %v2237, 127
        %v2250 = vpop.permute.xlu0 %2249
        %2251 = vrot.lane.b32.xlu0 %v2238, 127
        %v2252 = vpop.permute.xlu0 %2251
        %2253 = vrot.lane.b32.xlu0 %v2239, 127
        %v2254 = vpop.permute.xlu0 %2253
        %2255 = vrot.lane.b32.xlu0 %v2240, 127
        %v2256 = vpop.permute.xlu0 %2255
        %v2261 = vmax.f32 %v2237, %v2250
        %v2262 = vmax.f32 %v2238, %v2252
        %v2263 = vmax.f32 %v2239, %v2254
        %v2264 = vmax.f32 %v2240, %v2256
        %2269 = vrot.lane.b32.xlu0 %v2241, 127
        %v2270 = vpop.permute.xlu0 %2269
        %2271 = vrot.lane.b32.xlu0 %v2242, 127
        %v2272 = vpop.permute.xlu0 %2271
        %2273 = vrot.lane.b32.xlu0 %v2243, 127
        %v2274 = vpop.permute.xlu0 %2273
        %2275 = vrot.lane.b32.xlu0 %v2244, 127
        %v2276 = vpop.permute.xlu0 %2275
        %v2281 = vmax.f32 %v2241, %v2270
        %v2282 = vmax.f32 %v2242, %v2272
        %v2283 = vmax.f32 %v2243, %v2274
        %v2284 = vmax.f32 %v2244, %v2276
        %v2285 = vmax.f32 %v2261, %v2281
        %v2286 = vmax.f32 %v2262, %v2282
        %v2287 = vmax.f32 %v2263, %v2283
        %v2288 = vmax.f32 %v2264, %v2284
        %2289 = vst.msk [vmem:[#allocation3 + $0x2] sm:$0xff] %vm2231, %v2285
        %2290 = vst.msk [vmem:[#allocation3 + $0xa] sm:$0xff] %vm2231, %v2286
        %2291 = vst.msk [vmem:[#allocation3 + $0x12] sm:$0xff] %vm2231, %v2287
        %2292 = vst.msk [vmem:[#allocation3 + $0x1a] sm:$0xf] %vm2235, %v2288
        %s2293 = sld [smem:[#allocation9 + $0x1]]
        %v2294 = vstv %s2293
        %v2295 = vadd.f32 %v2155, %v2294
        %v2296 = vadd.f32 %v2156, %v2294
        %v2297 = vadd.f32 %v2157, %v2294
        %v2298 = vadd.f32 %v2158, %v2294
        %v2299 = vsub.f32 0.0, %v2295
        %v2300 = vsub.f32 0.0, %v2296
        %v2301 = vsub.f32 0.0, %v2297
        %v2302 = vsub.f32 0.0, %v2298
        %v2303 = vmul.f32 %v2299, 1.442695
        %v2304 = vpow.pop %v2303
        %v2305 = vmul.f32 %v2300, 1.442695
        %v2306 = vpow.pop %v2305
        %v2307 = vmul.f32 %v2301, 1.442695
        %v2308 = vpow.pop %v2307
        %v2309 = vmul.f32 %v2302, 1.442695
        %v2310 = vpow.pop %v2309
        %v2311 = vadd.f32 %v2304, 1.0
        %v2312 = vadd.f32 %v2306, 1.0
        %v2313 = vadd.f32 %v2308, 1.0
        %v2314 = vadd.f32 %v2310, 1.0
        %v2315 = vrcp.pop %v2311
        %v2316 = vmul.f32 1.0, %v2315
        %v2317 = vrcp.pop %v2312
        %v2318 = vmul.f32 1.0, %v2317
        %v2319 = vrcp.pop %v2313
        %v2320 = vmul.f32 1.0, %v2319
        %v2321 = vrcp.pop %v2314
        %v2322 = vmul.f32 1.0, %v2321
        %2327 = vrot.lane.b32.xlu0 %v2316, 2
        %v2328 = vpop.permute.xlu0 %2327
        %2329 = vrot.lane.b32.xlu0 %v2318, 2
        %v2330 = vpop.permute.xlu0 %2329
        %2331 = vrot.lane.b32.xlu0 %v2320, 2
        %v2332 = vpop.permute.xlu0 %2331
        %2333 = vrot.lane.b32.xlu0 %v2322, 2
        %v2334 = vpop.permute.xlu0 %2333
        %s2339 = scalar_lea.vmem [#allocation3], 32
        %2340 = vst.msk [vmem:[%s2339 + $0x2] sm:$0xff] %vm2231, %v2328
        %2341 = vst.msk [vmem:[%s2339 + $0xa] sm:$0xff] %vm2231, %v2330
        %2342 = vst.msk [vmem:[%s2339 + $0x12] sm:$0xff] %vm2231, %v2332
        %2343 = vst.msk [vmem:[%s2339 + $0x1a] sm:$0xf] %vm2235, %v2334
        %v2344 = vld [vmem:[%s2339 + $0x2] sm:$0xff]
        %v2345 = vld [vmem:[%s2339 + $0xa] sm:$0xff]
        %v2346 = vld [vmem:[%s2339 + $0x12] sm:$0xff]
        %v2347 = vld [vmem:[%s2339 + $0x1a] sm:$0xf]
        %v2348 = vld [vmem:[%s2339 + $0x3] sm:$0xff]
        %v2349 = vld [vmem:[%s2339 + $0xb] sm:$0xff]
        %v2350 = vld [vmem:[%s2339 + $0x13] sm:$0xff]
        %v2351 = vld [vmem:[%s2339 + $0x1b] sm:$0xf]
        %2356 = vrot.lane.b32.xlu0 %v2344, 127
        %v2357 = vpop.permute.xlu0 %2356
        %2358 = vrot.lane.b32.xlu0 %v2345, 127
        %v2359 = vpop.permute.xlu0 %2358
        %2360 = vrot.lane.b32.xlu0 %v2346, 127
        %v2361 = vpop.permute.xlu0 %2360
        %2362 = vrot.lane.b32.xlu0 %v2347, 127
        %v2363 = vpop.permute.xlu0 %2362
        %v2368 = vmax.f32 %v2344, %v2357
        %v2369 = vmax.f32 %v2345, %v2359
        %v2370 = vmax.f32 %v2346, %v2361
        %v2371 = vmax.f32 %v2347, %v2363
        %2376 = vrot.lane.b32.xlu0 %v2348, 127
        %v2377 = vpop.permute.xlu0 %2376
        %2378 = vrot.lane.b32.xlu0 %v2349, 127
        %v2379 = vpop.permute.xlu0 %2378
        %2380 = vrot.lane.b32.xlu0 %v2350, 127
        %v2381 = vpop.permute.xlu0 %2380
        %2382 = vrot.lane.b32.xlu0 %v2351, 127
        %v2383 = vpop.permute.xlu0 %2382
        %v2388 = vmax.f32 %v2348, %v2377
        %v2389 = vmax.f32 %v2349, %v2379
        %v2390 = vmax.f32 %v2350, %v2381
        %v2391 = vmax.f32 %v2351, %v2383
        %v2392 = vmax.f32 %v2368, %v2388
        %v2393 = vmax.f32 %v2369, %v2389
        %v2394 = vmax.f32 %v2370, %v2390
        %v2395 = vmax.f32 %v2371, %v2391
        %2396 = vst.msk [vmem:[%s2339 + $0x2] sm:$0xff] %vm2231, %v2392
        %2397 = vst.msk [vmem:[%s2339 + $0xa] sm:$0xff] %vm2231, %v2393
        %2398 = vst.msk [vmem:[%s2339 + $0x12] sm:$0xff] %vm2231, %v2394
        %2399 = vst.msk [vmem:[%s2339 + $0x1a] sm:$0xf] %vm2235, %v2395
        %s2400 = sld [smem:[#allocation9 + $0x2]]
        %v2401 = vstv %s2400
        %v2402 = vadd.f32 %v2181, %v2401
        %v2403 = vadd.f32 %v2182, %v2401
        %v2404 = vadd.f32 %v2183, %v2401
        %v2405 = vadd.f32 %v2184, %v2401
        %v2406 = vsub.f32 0.0, %v2402
        %v2407 = vsub.f32 0.0, %v2403
        %v2408 = vsub.f32 0.0, %v2404
        %v2409 = vsub.f32 0.0, %v2405
        %v2410 = vmul.f32 %v2406, 1.442695
        %v2411 = vpow.pop %v2410
        %v2412 = vmul.f32 %v2407, 1.442695
        %v2413 = vpow.pop %v2412
        %v2414 = vmul.f32 %v2408, 1.442695
        %v2415 = vpow.pop %v2414
        %v2416 = vmul.f32 %v2409, 1.442695
        %v2417 = vpow.pop %v2416
        %v2418 = vadd.f32 %v2411, 1.0
        %v2419 = vadd.f32 %v2413, 1.0
        %v2420 = vadd.f32 %v2415, 1.0
        %v2421 = vadd.f32 %v2417, 1.0
        %v2422 = vrcp.pop %v2418
        %v2423 = vmul.f32 1.0, %v2422
        %v2424 = vrcp.pop %v2419
        %v2425 = vmul.f32 1.0, %v2424
        %v2426 = vrcp.pop %v2420
        %v2427 = vmul.f32 1.0, %v2426
        %v2428 = vrcp.pop %v2421
        %v2429 = vmul.f32 1.0, %v2428
        %2434 = vrot.lane.b32.xlu0 %v2423, 2
        %v2435 = vpop.permute.xlu0 %2434
        %2436 = vrot.lane.b32.xlu0 %v2425, 2
        %v2437 = vpop.permute.xlu0 %2436
        %2438 = vrot.lane.b32.xlu0 %v2427, 2
        %v2439 = vpop.permute.xlu0 %2438
        %2440 = vrot.lane.b32.xlu0 %v2429, 2
        %v2441 = vpop.permute.xlu0 %2440
        %s2446 = scalar_lea.vmem [#allocation3], 64
        %2447 = vst.msk [vmem:[%s2446 + $0x2] sm:$0xff] %vm2231, %v2435
        %2448 = vst.msk [vmem:[%s2446 + $0xa] sm:$0xff] %vm2231, %v2437
        %2449 = vst.msk [vmem:[%s2446 + $0x12] sm:$0xff] %vm2231, %v2439
        %2450 = vst.msk [vmem:[%s2446 + $0x1a] sm:$0xf] %vm2235, %v2441
        %v2451 = vld [vmem:[%s2446 + $0x2] sm:$0xff]
        %v2452 = vld [vmem:[%s2446 + $0xa] sm:$0xff]
        %v2453 = vld [vmem:[%s2446 + $0x12] sm:$0xff]
        %v2454 = vld [vmem:[%s2446 + $0x1a] sm:$0xf]
        %v2455 = vld [vmem:[%s2446 + $0x3] sm:$0xff]
        %v2456 = vld [vmem:[%s2446 + $0xb] sm:$0xff]
        %v2457 = vld [vmem:[%s2446 + $0x13] sm:$0xff]
        %v2458 = vld [vmem:[%s2446 + $0x1b] sm:$0xf]
        %2463 = vrot.lane.b32.xlu0 %v2451, 127
        %v2464 = vpop.permute.xlu0 %2463
        %2465 = vrot.lane.b32.xlu0 %v2452, 127
        %v2466 = vpop.permute.xlu0 %2465
        %2467 = vrot.lane.b32.xlu0 %v2453, 127
        %v2468 = vpop.permute.xlu0 %2467
        %2469 = vrot.lane.b32.xlu0 %v2454, 127
        %v2470 = vpop.permute.xlu0 %2469
        %v2475 = vmax.f32 %v2451, %v2464
        %v2476 = vmax.f32 %v2452, %v2466
        %v2477 = vmax.f32 %v2453, %v2468
        %v2478 = vmax.f32 %v2454, %v2470
        %2483 = vrot.lane.b32.xlu0 %v2455, 127
        %v2484 = vpop.permute.xlu0 %2483
        %2485 = vrot.lane.b32.xlu0 %v2456, 127
        %v2486 = vpop.permute.xlu0 %2485
        %2487 = vrot.lane.b32.xlu0 %v2457, 127
        %v2488 = vpop.permute.xlu0 %2487
        %2489 = vrot.lane.b32.xlu0 %v2458, 127
        %v2490 = vpop.permute.xlu0 %2489
        %v2495 = vmax.f32 %v2455, %v2484
        %v2496 = vmax.f32 %v2456, %v2486
        %v2497 = vmax.f32 %v2457, %v2488
        %v2498 = vmax.f32 %v2458, %v2490
        %v2499 = vmax.f32 %v2475, %v2495
        %v2500 = vmax.f32 %v2476, %v2496
        %v2501 = vmax.f32 %v2477, %v2497
        %v2502 = vmax.f32 %v2478, %v2498
        %2503 = vst.msk [vmem:[%s2446 + $0x2] sm:$0xff] %vm2231, %v2499
        %2504 = vst.msk [vmem:[%s2446 + $0xa] sm:$0xff] %vm2231, %v2500
        %2505 = vst.msk [vmem:[%s2446 + $0x12] sm:$0xff] %vm2231, %v2501
        %2506 = vst.msk [vmem:[%s2446 + $0x1a] sm:$0xf] %vm2235, %v2502
        %s2507 = sld [smem:[#allocation11]]
        %v2508 = vld [vmem:[#allocation3] sm:$0xff]
        %v2509 = vld [vmem:[#allocation3 + $0x8] sm:$0xff]
        %v2510 = vld [vmem:[#allocation3 + $0x10] sm:$0xff]
        %v2511 = vld [vmem:[#allocation3 + $0x18] sm:$0xf]
        %v2512 = vstv %s2507
        %v2513 = vmul.f32 %v2508, %v2512
        %v2514 = vmul.f32 %v2509, %v2512
        %v2515 = vmul.f32 %v2510, %v2512
        %v2516 = vmul.f32 %v2511, %v2512
        %v2517 = vadd.f32 %v2513, 0.0
        %v2518 = vadd.f32 %v2514, 0.0
        %v2519 = vadd.f32 %v2515, 0.0
        %v2520 = vadd.f32 %v2516, 0.0
        %s2521 = sld [smem:[#allocation11 + $0x1]]
        %v2522 = vstv %s2521
        %v2523 = vmul.f32 %v2508, %v2522
        %v2524 = vmul.f32 %v2509, %v2522
        %v2525 = vmul.f32 %v2510, %v2522
        %v2526 = vmul.f32 %v2511, %v2522
        %2531 = vrot.lane.b32.xlu0 %v2523, 126
        %v2532 = vpop.permute.xlu0 %2531
        %2533 = vrot.lane.b32.xlu0 %v2524, 126
        %v2534 = vpop.permute.xlu0 %2533
        %2535 = vrot.lane.b32.xlu0 %v2525, 126
        %v2536 = vpop.permute.xlu0 %2535
        %2537 = vrot.lane.b32.xlu0 %v2526, 126
        %v2538 = vpop.permute.xlu0 %2537
        %v2543 = vadd.f32 %v2517, %v2532
        %v2544 = vadd.f32 %v2518, %v2534
        %v2545 = vadd.f32 %v2519, %v2536
        %v2546 = vadd.f32 %v2520, %v2538
        %s2547 = sld [smem:[#allocation11 + $0x2]]
        %v2548 = vstv %s2547
        %v2549 = vmul.f32 %v2508, %v2548
        %v2550 = vmul.f32 %v2509, %v2548
        %v2551 = vmul.f32 %v2510, %v2548
        %v2552 = vmul.f32 %v2511, %v2548
        %2557 = vrot.lane.b32.xlu0 %v2549, 124
        %v2558 = vpop.permute.xlu0 %2557
        %2559 = vrot.lane.b32.xlu0 %v2550, 124
        %v2560 = vpop.permute.xlu0 %2559
        %2561 = vrot.lane.b32.xlu0 %v2551, 124
        %v2562 = vpop.permute.xlu0 %2561
        %2563 = vrot.lane.b32.xlu0 %v2552, 124
        %v2564 = vpop.permute.xlu0 %2563
        %v2569 = vadd.f32 %v2543, %v2558
        %v2570 = vadd.f32 %v2544, %v2560
        %v2571 = vadd.f32 %v2545, %v2562
        %v2572 = vadd.f32 %v2546, %v2564
        %s2573 = sld [smem:[#allocation11 + $0x3]]
        %v2574 = vld [vmem:[#allocation3 + $0x2] sm:$0xff]
        %v2575 = vld [vmem:[#allocation3 + $0xa] sm:$0xff]
        %v2576 = vld [vmem:[#allocation3 + $0x12] sm:$0xff]
        %v2577 = vld [vmem:[#allocation3 + $0x1a] sm:$0xf]
        %v2578 = vstv %s2573
        %v2579 = vmul.f32 %v2574, %v2578
        %v2580 = vmul.f32 %v2575, %v2578
        %v2581 = vmul.f32 %v2576, %v2578
        %v2582 = vmul.f32 %v2577, %v2578
        %v2583 = vadd.f32 %v2569, %v2579
        %v2584 = vadd.f32 %v2570, %v2580
        %v2585 = vadd.f32 %v2571, %v2581
        %v2586 = vadd.f32 %v2572, %v2582
        %s2587 = sld [smem:[#allocation11 + $0x4]]
        %v2588 = vstv %s2587
        %v2589 = vmul.f32 %v2574, %v2588
        %v2590 = vmul.f32 %v2575, %v2588
        %v2591 = vmul.f32 %v2576, %v2588
        %v2592 = vmul.f32 %v2577, %v2588
        %2597 = vrot.lane.b32.xlu0 %v2589, 126
        %v2598 = vpop.permute.xlu0 %2597
        %2599 = vrot.lane.b32.xlu0 %v2590, 126
        %v2600 = vpop.permute.xlu0 %2599
        %2601 = vrot.lane.b32.xlu0 %v2591, 126
        %v2602 = vpop.permute.xlu0 %2601
        %2603 = vrot.lane.b32.xlu0 %v2592, 126
        %v2604 = vpop.permute.xlu0 %2603
        %v2609 = vadd.f32 %v2583, %v2598
        %v2610 = vadd.f32 %v2584, %v2600
        %v2611 = vadd.f32 %v2585, %v2602
        %v2612 = vadd.f32 %v2586, %v2604
        %s2613 = sld [smem:[#allocation11 + $0x5]]
        %v2614 = vstv %s2613
        %v2615 = vmul.f32 %v2574, %v2614
        %v2616 = vmul.f32 %v2575, %v2614
        %v2617 = vmul.f32 %v2576, %v2614
        %v2618 = vmul.f32 %v2577, %v2614
        %2623 = vrot.lane.b32.xlu0 %v2615, 124
        %v2624 = vpop.permute.xlu0 %2623
        %2625 = vrot.lane.b32.xlu0 %v2616, 124
        %v2626 = vpop.permute.xlu0 %2625
        %2627 = vrot.lane.b32.xlu0 %v2617, 124
        %v2628 = vpop.permute.xlu0 %2627
        %2629 = vrot.lane.b32.xlu0 %v2618, 124
        %v2630 = vpop.permute.xlu0 %2629
        %v2635 = vadd.f32 %v2609, %v2624
        %v2636 = vadd.f32 %v2610, %v2626
        %v2637 = vadd.f32 %v2611, %v2628
        %v2638 = vadd.f32 %v2612, %v2630
        %s2639 = sld [smem:[#allocation11 + $0x6]]
        %v2640 = vld [vmem:[#allocation3 + $0x4] sm:$0xff]
        %v2641 = vld [vmem:[#allocation3 + $0xc] sm:$0xff]
        %v2642 = vld [vmem:[#allocation3 + $0x14] sm:$0xff]
        %v2643 = vld [vmem:[#allocation3 + $0x1c] sm:$0xf]
        %v2644 = vstv %s2639
        %v2645 = vmul.f32 %v2640, %v2644
        %v2646 = vmul.f32 %v2641, %v2644
        %v2647 = vmul.f32 %v2642, %v2644
        %v2648 = vmul.f32 %v2643, %v2644
        %v2649 = vadd.f32 %v2635, %v2645
        %v2650 = vadd.f32 %v2636, %v2646
        %v2651 = vadd.f32 %v2637, %v2647
        %v2652 = vadd.f32 %v2638, %v2648
        %s2653 = sld [smem:[#allocation11 + $0x7]]
        %v2654 = vstv %s2653
        %v2655 = vmul.f32 %v2640, %v2654
        %v2656 = vmul.f32 %v2641, %v2654
        %v2657 = vmul.f32 %v2642, %v2654
        %v2658 = vmul.f32 %v2643, %v2654
        %2663 = vrot.lane.b32.xlu0 %v2655, 126
        %v2664 = vpop.permute.xlu0 %2663
        %2665 = vrot.lane.b32.xlu0 %v2656, 126
        %v2666 = vpop.permute.xlu0 %2665
        %2667 = vrot.lane.b32.xlu0 %v2657, 126
        %v2668 = vpop.permute.xlu0 %2667
        %2669 = vrot.lane.b32.xlu0 %v2658, 126
        %v2670 = vpop.permute.xlu0 %2669
        %v2675 = vadd.f32 %v2649, %v2664
        %v2676 = vadd.f32 %v2650, %v2666
        %v2677 = vadd.f32 %v2651, %v2668
        %v2678 = vadd.f32 %v2652, %v2670
        %s2679 = sld [smem:[#allocation11 + $0x8]]
        %v2680 = vstv %s2679
        %v2681 = vmul.f32 %v2640, %v2680
        %v2682 = vmul.f32 %v2641, %v2680
        %v2683 = vmul.f32 %v2642, %v2680
        %v2684 = vmul.f32 %v2643, %v2680
        %2689 = vrot.lane.b32.xlu0 %v2681, 124
        %v2690 = vpop.permute.xlu0 %2689
        %2691 = vrot.lane.b32.xlu0 %v2682, 124
        %v2692 = vpop.permute.xlu0 %2691
        %2693 = vrot.lane.b32.xlu0 %v2683, 124
        %v2694 = vpop.permute.xlu0 %2693
        %2695 = vrot.lane.b32.xlu0 %v2684, 124
        %v2696 = vpop.permute.xlu0 %2695
        %v2701 = vadd.f32 %v2675, %v2690
        %v2702 = vadd.f32 %v2676, %v2692
        %v2703 = vadd.f32 %v2677, %v2694
        %v2704 = vadd.f32 %v2678, %v2696
        %s2705 = sld [smem:[#allocation11 + $0x9]]
        %v2706 = vld [vmem:[%s2339] sm:$0xff]
        %v2707 = vld [vmem:[%s2339 + $0x8] sm:$0xff]
        %v2708 = vld [vmem:[%s2339 + $0x10] sm:$0xff]
        %v2709 = vld [vmem:[%s2339 + $0x18] sm:$0xf]
        %v2710 = vstv %s2705
        %v2711 = vmul.f32 %v2706, %v2710
        %v2712 = vmul.f32 %v2707, %v2710
        %v2713 = vmul.f32 %v2708, %v2710
        %v2714 = vmul.f32 %v2709, %v2710
        %v2715 = vadd.f32 %v2701, %v2711
        %v2716 = vadd.f32 %v2702, %v2712
        %v2717 = vadd.f32 %v2703, %v2713
        %v2718 = vadd.f32 %v2704, %v2714
        %s2719 = sld [smem:[#allocation11 + $0xa]]
        %v2720 = vstv %s2719
        %v2721 = vmul.f32 %v2706, %v2720
        %v2722 = vmul.f32 %v2707, %v2720
        %v2723 = vmul.f32 %v2708, %v2720
        %v2724 = vmul.f32 %v2709, %v2720
        %2729 = vrot.lane.b32.xlu0 %v2721, 126
        %v2730 = vpop.permute.xlu0 %2729
        %2731 = vrot.lane.b32.xlu0 %v2722, 126
        %v2732 = vpop.permute.xlu0 %2731
        %2733 = vrot.lane.b32.xlu0 %v2723, 126
        %v2734 = vpop.permute.xlu0 %2733
        %2735 = vrot.lane.b32.xlu0 %v2724, 126
        %v2736 = vpop.permute.xlu0 %2735
        %v2741 = vadd.f32 %v2715, %v2730
        %v2742 = vadd.f32 %v2716, %v2732
        %v2743 = vadd.f32 %v2717, %v2734
        %v2744 = vadd.f32 %v2718, %v2736
        %s2745 = sld [smem:[#allocation11 + $0xb]]
        %v2746 = vstv %s2745
        %v2747 = vmul.f32 %v2706, %v2746
        %v2748 = vmul.f32 %v2707, %v2746
        %v2749 = vmul.f32 %v2708, %v2746
        %v2750 = vmul.f32 %v2709, %v2746
        %2755 = vrot.lane.b32.xlu0 %v2747, 124
        %v2756 = vpop.permute.xlu0 %2755
        %2757 = vrot.lane.b32.xlu0 %v2748, 124
        %v2758 = vpop.permute.xlu0 %2757
        %2759 = vrot.lane.b32.xlu0 %v2749, 124
        %v2760 = vpop.permute.xlu0 %2759
        %2761 = vrot.lane.b32.xlu0 %v2750, 124
        %v2762 = vpop.permute.xlu0 %2761
        %v2767 = vadd.f32 %v2741, %v2756
        %v2768 = vadd.f32 %v2742, %v2758
        %v2769 = vadd.f32 %v2743, %v2760
        %v2770 = vadd.f32 %v2744, %v2762
        %s2771 = sld [smem:[#allocation11 + $0xc]]
        %v2772 = vld [vmem:[%s2339 + $0x2] sm:$0xff]
        %v2773 = vld [vmem:[%s2339 + $0xa] sm:$0xff]
        %v2774 = vld [vmem:[%s2339 + $0x12] sm:$0xff]
        %v2775 = vld [vmem:[%s2339 + $0x1a] sm:$0xf]
        %v2776 = vstv %s2771
        %v2777 = vmul.f32 %v2772, %v2776
        %v2778 = vmul.f32 %v2773, %v2776
        %v2779 = vmul.f32 %v2774, %v2776
        %v2780 = vmul.f32 %v2775, %v2776
        %v2781 = vadd.f32 %v2767, %v2777
        %v2782 = vadd.f32 %v2768, %v2778
        %v2783 = vadd.f32 %v2769, %v2779
        %v2784 = vadd.f32 %v2770, %v2780
        %s2785 = sld [smem:[#allocation11 + $0xd]]
        %v2786 = vstv %s2785
        %v2787 = vmul.f32 %v2772, %v2786
        %v2788 = vmul.f32 %v2773, %v2786
        %v2789 = vmul.f32 %v2774, %v2786
        %v2790 = vmul.f32 %v2775, %v2786
        %2795 = vrot.lane.b32.xlu0 %v2787, 126
        %v2796 = vpop.permute.xlu0 %2795
        %2797 = vrot.lane.b32.xlu0 %v2788, 126
        %v2798 = vpop.permute.xlu0 %2797
        %2799 = vrot.lane.b32.xlu0 %v2789, 126
        %v2800 = vpop.permute.xlu0 %2799
        %2801 = vrot.lane.b32.xlu0 %v2790, 126
        %v2802 = vpop.permute.xlu0 %2801
        %v2807 = vadd.f32 %v2781, %v2796
        %v2808 = vadd.f32 %v2782, %v2798
        %v2809 = vadd.f32 %v2783, %v2800
        %v2810 = vadd.f32 %v2784, %v2802
        %s2811 = sld [smem:[#allocation11 + $0xe]]
        %v2812 = vstv %s2811
        %v2813 = vmul.f32 %v2772, %v2812
        %v2814 = vmul.f32 %v2773, %v2812
        %v2815 = vmul.f32 %v2774, %v2812
        %v2816 = vmul.f32 %v2775, %v2812
        %2821 = vrot.lane.b32.xlu0 %v2813, 124
        %v2822 = vpop.permute.xlu0 %2821
        %2823 = vrot.lane.b32.xlu0 %v2814, 124
        %v2824 = vpop.permute.xlu0 %2823
        %2825 = vrot.lane.b32.xlu0 %v2815, 124
        %v2826 = vpop.permute.xlu0 %2825
        %2827 = vrot.lane.b32.xlu0 %v2816, 124
        %v2828 = vpop.permute.xlu0 %2827
        %v2833 = vadd.f32 %v2807, %v2822
        %v2834 = vadd.f32 %v2808, %v2824
        %v2835 = vadd.f32 %v2809, %v2826
        %v2836 = vadd.f32 %v2810, %v2828
        %s2837 = sld [smem:[#allocation11 + $0xf]]
        %v2838 = vld [vmem:[%s2339 + $0x4] sm:$0xff]
        %v2839 = vld [vmem:[%s2339 + $0xc] sm:$0xff]
        %v2840 = vld [vmem:[%s2339 + $0x14] sm:$0xff]
        %v2841 = vld [vmem:[%s2339 + $0x1c] sm:$0xf]
        %v2842 = vstv %s2837
        %v2843 = vmul.f32 %v2838, %v2842
        %v2844 = vmul.f32 %v2839, %v2842
        %v2845 = vmul.f32 %v2840, %v2842
        %v2846 = vmul.f32 %v2841, %v2842
        %v2847 = vadd.f32 %v2833, %v2843
        %v2848 = vadd.f32 %v2834, %v2844
        %v2849 = vadd.f32 %v2835, %v2845
        %v2850 = vadd.f32 %v2836, %v2846
        %s2851 = sld [smem:[#allocation11 + $0x10]]
        %v2852 = vstv %s2851
        %v2853 = vmul.f32 %v2838, %v2852
        %v2854 = vmul.f32 %v2839, %v2852
        %v2855 = vmul.f32 %v2840, %v2852
        %v2856 = vmul.f32 %v2841, %v2852
        %2861 = vrot.lane.b32.xlu0 %v2853, 126
        %v2862 = vpop.permute.xlu0 %2861
        %2863 = vrot.lane.b32.xlu0 %v2854, 126
        %v2864 = vpop.permute.xlu0 %2863
        %2865 = vrot.lane.b32.xlu0 %v2855, 126
        %v2866 = vpop.permute.xlu0 %2865
        %2867 = vrot.lane.b32.xlu0 %v2856, 126
        %v2868 = vpop.permute.xlu0 %2867
        %v2873 = vadd.f32 %v2847, %v2862
        %v2874 = vadd.f32 %v2848, %v2864
        %v2875 = vadd.f32 %v2849, %v2866
        %v2876 = vadd.f32 %v2850, %v2868
        %s2877 = sld [smem:[#allocation11 + $0x11]]
        %v2878 = vstv %s2877
        %v2879 = vmul.f32 %v2838, %v2878
        %v2880 = vmul.f32 %v2839, %v2878
        %v2881 = vmul.f32 %v2840, %v2878
        %v2882 = vmul.f32 %v2841, %v2878
        %2887 = vrot.lane.b32.xlu0 %v2879, 124
        %v2888 = vpop.permute.xlu0 %2887
        %2889 = vrot.lane.b32.xlu0 %v2880, 124
        %v2890 = vpop.permute.xlu0 %2889
        %2891 = vrot.lane.b32.xlu0 %v2881, 124
        %v2892 = vpop.permute.xlu0 %2891
        %2893 = vrot.lane.b32.xlu0 %v2882, 124
        %v2894 = vpop.permute.xlu0 %2893
        %v2899 = vadd.f32 %v2873, %v2888
        %v2900 = vadd.f32 %v2874, %v2890
        %v2901 = vadd.f32 %v2875, %v2892
        %v2902 = vadd.f32 %v2876, %v2894
        %s2903 = sld [smem:[#allocation11 + $0x12]]
        %v2904 = vld [vmem:[%s2446] sm:$0xff]
        %v2905 = vld [vmem:[%s2446 + $0x8] sm:$0xff]
        %v2906 = vld [vmem:[%s2446 + $0x10] sm:$0xff]
        %v2907 = vld [vmem:[%s2446 + $0x18] sm:$0xf]
        %v2908 = vstv %s2903
        %v2909 = vmul.f32 %v2904, %v2908
        %v2910 = vmul.f32 %v2905, %v2908
        %v2911 = vmul.f32 %v2906, %v2908
        %v2912 = vmul.f32 %v2907, %v2908
        %v2913 = vadd.f32 %v2899, %v2909
        %v2914 = vadd.f32 %v2900, %v2910
        %v2915 = vadd.f32 %v2901, %v2911
        %v2916 = vadd.f32 %v2902, %v2912
        %s2917 = sld [smem:[#allocation11 + $0x13]]
        %v2918 = vstv %s2917
        %v2919 = vmul.f32 %v2904, %v2918
        %v2920 = vmul.f32 %v2905, %v2918
        %v2921 = vmul.f32 %v2906, %v2918
        %v2922 = vmul.f32 %v2907, %v2918
        %2927 = vrot.lane.b32.xlu0 %v2919, 126
        %v2928 = vpop.permute.xlu0 %2927
        %2929 = vrot.lane.b32.xlu0 %v2920, 126
        %v2930 = vpop.permute.xlu0 %2929
        %2931 = vrot.lane.b32.xlu0 %v2921, 126
        %v2932 = vpop.permute.xlu0 %2931
        %2933 = vrot.lane.b32.xlu0 %v2922, 126
        %v2934 = vpop.permute.xlu0 %2933
        %v2939 = vadd.f32 %v2913, %v2928
        %v2940 = vadd.f32 %v2914, %v2930
        %v2941 = vadd.f32 %v2915, %v2932
        %v2942 = vadd.f32 %v2916, %v2934
        %s2943 = sld [smem:[#allocation11 + $0x14]]
        %v2944 = vstv %s2943
        %v2945 = vmul.f32 %v2904, %v2944
        %v2946 = vmul.f32 %v2905, %v2944
        %v2947 = vmul.f32 %v2906, %v2944
        %v2948 = vmul.f32 %v2907, %v2944
        %2953 = vrot.lane.b32.xlu0 %v2945, 124
        %v2954 = vpop.permute.xlu0 %2953
        %2955 = vrot.lane.b32.xlu0 %v2946, 124
        %v2956 = vpop.permute.xlu0 %2955
        %2957 = vrot.lane.b32.xlu0 %v2947, 124
        %v2958 = vpop.permute.xlu0 %2957
        %2959 = vrot.lane.b32.xlu0 %v2948, 124
        %v2960 = vpop.permute.xlu0 %2959
        %v2965 = vadd.f32 %v2939, %v2954
        %v2966 = vadd.f32 %v2940, %v2956
        %v2967 = vadd.f32 %v2941, %v2958
        %v2968 = vadd.f32 %v2942, %v2960
        %s2969 = sld [smem:[#allocation11 + $0x15]]
        %v2970 = vld [vmem:[%s2446 + $0x2] sm:$0xff]
        %v2971 = vld [vmem:[%s2446 + $0xa] sm:$0xff]
        %v2972 = vld [vmem:[%s2446 + $0x12] sm:$0xff]
        %v2973 = vld [vmem:[%s2446 + $0x1a] sm:$0xf]
        %v2974 = vstv %s2969
        %v2975 = vmul.f32 %v2970, %v2974
        %v2976 = vmul.f32 %v2971, %v2974
        %v2977 = vmul.f32 %v2972, %v2974
        %v2978 = vmul.f32 %v2973, %v2974
        %v2979 = vadd.f32 %v2965, %v2975
        %v2980 = vadd.f32 %v2966, %v2976
        %v2981 = vadd.f32 %v2967, %v2977
        %v2982 = vadd.f32 %v2968, %v2978
        %s2983 = sld [smem:[#allocation11 + $0x16]]
        %v2984 = vstv %s2983
        %v2985 = vmul.f32 %v2970, %v2984
        %v2986 = vmul.f32 %v2971, %v2984
        %v2987 = vmul.f32 %v2972, %v2984
        %v2988 = vmul.f32 %v2973, %v2984
        %2993 = vrot.lane.b32.xlu0 %v2985, 126
        %v2994 = vpop.permute.xlu0 %2993
        %2995 = vrot.lane.b32.xlu0 %v2986, 126
        %v2996 = vpop.permute.xlu0 %2995
        %2997 = vrot.lane.b32.xlu0 %v2987, 126
        %v2998 = vpop.permute.xlu0 %2997
        %2999 = vrot.lane.b32.xlu0 %v2988, 126
        %v3000 = vpop.permute.xlu0 %2999
        %v3005 = vadd.f32 %v2979, %v2994
        %v3006 = vadd.f32 %v2980, %v2996
        %v3007 = vadd.f32 %v2981, %v2998
        %v3008 = vadd.f32 %v2982, %v3000
        %s3009 = sld [smem:[#allocation11 + $0x17]]
        %v3010 = vstv %s3009
        %v3011 = vmul.f32 %v2970, %v3010
        %v3012 = vmul.f32 %v2971, %v3010
        %v3013 = vmul.f32 %v2972, %v3010
        %v3014 = vmul.f32 %v2973, %v3010
        %3019 = vrot.lane.b32.xlu0 %v3011, 124
        %v3020 = vpop.permute.xlu0 %3019
        %3021 = vrot.lane.b32.xlu0 %v3012, 124
        %v3022 = vpop.permute.xlu0 %3021
        %3023 = vrot.lane.b32.xlu0 %v3013, 124
        %v3024 = vpop.permute.xlu0 %3023
        %3025 = vrot.lane.b32.xlu0 %v3014, 124
        %v3026 = vpop.permute.xlu0 %3025
        %v3031 = vadd.f32 %v3005, %v3020
        %v3032 = vadd.f32 %v3006, %v3022
        %v3033 = vadd.f32 %v3007, %v3024
        %v3034 = vadd.f32 %v3008, %v3026
        %s3035 = sld [smem:[#allocation11 + $0x18]]
        %v3036 = vld [vmem:[%s2446 + $0x4] sm:$0xff]
        %v3037 = vld [vmem:[%s2446 + $0xc] sm:$0xff]
        %v3038 = vld [vmem:[%s2446 + $0x14] sm:$0xff]
        %v3039 = vld [vmem:[%s2446 + $0x1c] sm:$0xf]
        %v3040 = vstv %s3035
        %v3041 = vmul.f32 %v3036, %v3040
        %v3042 = vmul.f32 %v3037, %v3040
        %v3043 = vmul.f32 %v3038, %v3040
        %v3044 = vmul.f32 %v3039, %v3040
        %v3045 = vadd.f32 %v3031, %v3041
        %v3046 = vadd.f32 %v3032, %v3042
        %v3047 = vadd.f32 %v3033, %v3043
        %v3048 = vadd.f32 %v3034, %v3044
        %s3049 = sld [smem:[#allocation11 + $0x19]]
        %v3050 = vstv %s3049
        %v3051 = vmul.f32 %v3036, %v3050
        %v3052 = vmul.f32 %v3037, %v3050
        %v3053 = vmul.f32 %v3038, %v3050
        %v3054 = vmul.f32 %v3039, %v3050
        %3059 = vrot.lane.b32.xlu0 %v3051, 126
        %v3060 = vpop.permute.xlu0 %3059
        %3061 = vrot.lane.b32.xlu0 %v3052, 126
        %v3062 = vpop.permute.xlu0 %3061
        %3063 = vrot.lane.b32.xlu0 %v3053, 126
        %v3064 = vpop.permute.xlu0 %3063
        %3065 = vrot.lane.b32.xlu0 %v3054, 126
        %v3066 = vpop.permute.xlu0 %3065
        %v3071 = vadd.f32 %v3045, %v3060
        %v3072 = vadd.f32 %v3046, %v3062
        %v3073 = vadd.f32 %v3047, %v3064
        %v3074 = vadd.f32 %v3048, %v3066
        %s3075 = sld [smem:[#allocation11 + $0x1a]]
        %v3076 = vstv %s3075
        %v3077 = vmul.f32 %v3036, %v3076
        %v3078 = vmul.f32 %v3037, %v3076
        %v3079 = vmul.f32 %v3038, %v3076
        %v3080 = vmul.f32 %v3039, %v3076
        %3085 = vrot.lane.b32.xlu0 %v3077, 124
        %v3086 = vpop.permute.xlu0 %3085
        %3087 = vrot.lane.b32.xlu0 %v3078, 124
        %v3088 = vpop.permute.xlu0 %3087
        %3089 = vrot.lane.b32.xlu0 %v3079, 124
        %v3090 = vpop.permute.xlu0 %3089
        %3091 = vrot.lane.b32.xlu0 %v3080, 124
        %v3092 = vpop.permute.xlu0 %3091
        %v3097 = vadd.f32 %v3071, %v3086
        %v3098 = vadd.f32 %v3072, %v3088
        %v3099 = vadd.f32 %v3073, %v3090
        %v3100 = vadd.f32 %v3074, %v3092
        %s3101 = sld [smem:[#allocation5]]
        %v3102 = vstv %s3101
        %v3103 = vadd.f32 %v3097, %v3102
        %v3104 = vadd.f32 %v3098, %v3102
        %v3105 = vadd.f32 %v3099, %v3102
        %v3106 = vadd.f32 %v3100, %v3102
        %v3107 = vsub.f32 0.0, %v3103
        %v3108 = vsub.f32 0.0, %v3104
        %v3109 = vsub.f32 0.0, %v3105
        %v3110 = vsub.f32 0.0, %v3106
        %v3111 = vmul.f32 %v3107, 1.442695
        %v3112 = vpow.pop %v3111
        %v3113 = vmul.f32 %v3108, 1.442695
        %v3114 = vpow.pop %v3113
        %v3115 = vmul.f32 %v3109, 1.442695
        %v3116 = vpow.pop %v3115
        %v3117 = vmul.f32 %v3110, 1.442695
        %v3118 = vpow.pop %v3117
        %v3119 = vadd.f32 %v3112, 1.0
        %v3120 = vadd.f32 %v3114, 1.0
        %v3121 = vadd.f32 %v3116, 1.0
        %v3122 = vadd.f32 %v3118, 1.0
        %v3123 = vrcp.pop %v3119
        %v3124 = vmul.f32 1.0, %v3123
        %v3125 = vrcp.pop %v3120
        %v3126 = vmul.f32 1.0, %v3125
        %v3127 = vrcp.pop %v3121
        %v3128 = vmul.f32 1.0, %v3127
        %v3129 = vrcp.pop %v3122
        %v3130 = vmul.f32 1.0, %v3129
        %vm3131 = vcmask 228352
        %3132 = vst.msk [vmem:[#allocation4] sm:$0xff] %vm3131, %v3124
        %3133 = vst.msk [vmem:[#allocation4 + $0x8] sm:$0xff] %vm3131, %v3126
        %3134 = vst.msk [vmem:[#allocation4 + $0x10] sm:$0xff] %vm3131, %v3128
        %vm3135 = vcmask 224256
        %3136 = vst.msk [vmem:[#allocation4 + $0x18] sm:$0xf] %vm3135, %v3130
        %v3137 = vld [vmem:[%s6] sm:$0x1]
        %v3138 = vld [vmem:[#allocation4] sm:$0x1]
        %v3139 = vld [vmem:[#allocation4 + $0x2] sm:$0x1]
        %3141 = vrot.lane.b32.xlu0 %v3138, 126
        %v3142 = vpop.permute.xlu0 %3141
        %v3144 = vmax.f32 %v3138, %v3142
        %3146 = vrot.lane.b32.xlu0 %v3139, 126
        %v3147 = vpop.permute.xlu0 %3146
        %v3149 = vmax.f32 %v3139, %v3147
        %v3150 = vmax.f32 %v3144, %v3149
        %v3151 = vld [vmem:[%s5] sm:$0xff]
        %v3152 = vld [vmem:[%s5 + $0x8] sm:$0xff]
        %v3153 = vld [vmem:[%s5 + $0x10] sm:$0xff]
        %v3154 = vld [vmem:[%s5 + $0x18] sm:$0x3]
        %vm3155 = vcmask 211968
        %v3157 = vsel %vm3155, %v3150, 0
        %vm3159 = vcmask 1041408
        %v3161 = vsel %vm3159, %v3154, 0
        %3163 = vmatprep.subr.mxu0 0.0
        %3164 = vmatpush1.msra.mxu0 %v3151
        %3165 = vmatprep.subr.mxu0 0.0
        %3166 = vmatpush1.msra.mxu0 %v3152
        %3167 = vmatprep.subr.mxu0 0.0
        %3168 = vmatpush1.msra.mxu0 %v3153
        %3169 = vmatprep.subr.mxu0 0.0
        %3170 = vmatpush1.msra.mxu0 %v3161
        %3171 = vmatprep.subr.mxu0 0.0
        %3172 = vmatpush1.msra.mxu0 0.0
        %3173 = vmatprep.subr.mxu0 0.0
        %3174 = vmatpush1.msra.mxu0 0.0
        %3175 = vmatprep.subr.mxu0 0.0
        %3176 = vmatpush1.msra.mxu0 0.0
        %3177 = vmatprep.subr.mxu0 0.0
        %3178 = vmatpush1.msra.mxu0 0.0
        %3179 = vmatprep.subr.mxu0 0.0
        %3180 = vmatpush1.msra.mxu0 0.0
        %3181 = vmatprep.subr.mxu0 0.0
        %3182 = vmatpush1.msra.mxu0 0.0
        %3183 = vmatprep.subr.mxu0 0.0
        %3184 = vmatpush1.msra.mxu0 0.0
        %3185 = vmatprep.subr.mxu0 0.0
        %3186 = vmatpush1.msra.mxu0 0.0
        %3187 = vmatprep.subr.mxu0 0.0
        %3188 = vmatpush1.msra.mxu0 0.0
        %3189 = vmatprep.subr.mxu0 0.0
        %3190 = vmatpush1.msra.mxu0 0.0
        %3191 = vmatprep.subr.mxu0 0.0
        %3192 = vmatpush1.msra.mxu0 0.0
        %3193 = vmatprep.subr.mxu0 0.0
        %3194 = vmatpush1.msra.mxu0 0.0
        %3195 = vmatprep.subr.mxu0 0.0
        %3196 = vmatpush1.msra.mxu0 0.0
        %3197 = vmatprep.subr.mxu0 0.0
        %3198 = vmatpush1.msra.mxu0 0.0
        %3199 = vmatprep.subr.mxu0 0.0
        %3200 = vmatpush1.msra.mxu0 0.0
        %3201 = vmatprep.subr.mxu0 0.0
        %3202 = vmatpush1.msra.mxu0 0.0
        %3203 = vmatprep.subr.mxu0 0.0
        %3204 = vmatpush1.msra.mxu0 0.0
        %3205 = vmatprep.subr.mxu0 0.0
        %3206 = vmatpush1.msra.mxu0 0.0
        %3207 = vmatprep.subr.mxu0 0.0
        %3208 = vmatpush1.msra.mxu0 0.0
        %3209 = vmatprep.subr.mxu0 0.0
        %3210 = vmatpush1.msra.mxu0 0.0
        %3211 = vmatprep.subr.mxu0 0.0
        %3212 = vmatpush1.msra.mxu0 0.0
        %3213 = vmatprep.subr.mxu0 0.0
        %3214 = vmatpush1.msra.mxu0 0.0
        %3215 = vmatprep.subr.mxu0 0.0
        %3216 = vmatpush1.msra.mxu0 0.0
        %3217 = vmatprep.subr.mxu0 0.0
        %3218 = vmatpush1.msra.mxu0 0.0
        %3219 = vmatprep.subr.mxu0 0.0
        %3220 = vmatpush1.msra.mxu0 0.0
        %3221 = vmatprep.subr.mxu0 0.0
        %3222 = vmatpush1.msra.mxu0 0.0
        %3223 = vmatprep.subr.mxu0 0.0
        %3224 = vmatpush1.msra.mxu0 0.0
        %3225 = vmatprep.subr.mxu0 0.0
        %3226 = vmatpush1.msra.mxu0 0.0
        %3227 = vmatprep.mubr.f32.mxu0 0.0
        %3228 = vmatmul.mubr.f32.gmra.mrb[0].mxu0 %v3157
        %v3229 = vpop.f32.mrb[0].mxu0
        %v3230 = vadd.f32 0.0, %v3229
        %v3231 = vpop.f32.mrb[0].mxu0
        %3232 = vdwg.mxu0
        %v3233 = vadd.f32 %v3137, %v3230
        %v3234 = vld [vmem:[#allocation4 + $0x4] sm:$0x1]
        %v3235 = vld [vmem:[#allocation4 + $0x6] sm:$0x1]
        %3237 = vrot.lane.b32.xlu0 %v3234, 126
        %v3238 = vpop.permute.xlu0 %3237
        %v3240 = vmax.f32 %v3234, %v3238
        %3242 = vrot.lane.b32.xlu0 %v3235, 126
        %v3243 = vpop.permute.xlu0 %3242
        %v3245 = vmax.f32 %v3235, %v3243
        %v3246 = vmax.f32 %v3240, %v3245
        %s3247 = scalar_lea.vmem %s5, 32
        %v3248 = vld [vmem:[%s3247] sm:$0xff]
        %v3249 = vld [vmem:[%s3247 + $0x8] sm:$0xff]
        %v3250 = vld [vmem:[%s3247 + $0x10] sm:$0xff]
        %v3251 = vld [vmem:[%s3247 + $0x18] sm:$0x3]
        %v3253 = vsel %vm3155, %v3246, 0
        %v3256 = vsel %vm3159, %v3251, 0
        %3258 = vmatprep.subr.mxu0 0.0
        %3259 = vmatpush1.msra.mxu0 %v3248
        %3260 = vmatprep.subr.mxu0 0.0
        %3261 = vmatpush1.msra.mxu0 %v3249
        %3262 = vmatprep.subr.mxu0 0.0
        %3263 = vmatpush1.msra.mxu0 %v3250
        %3264 = vmatprep.subr.mxu0 0.0
        %3265 = vmatpush1.msra.mxu0 %v3256
        %3266 = vmatprep.subr.mxu0 0.0
        %3267 = vmatpush1.msra.mxu0 0.0
        %3268 = vmatprep.subr.mxu0 0.0
        %3269 = vmatpush1.msra.mxu0 0.0
        %3270 = vmatprep.subr.mxu0 0.0
        %3271 = vmatpush1.msra.mxu0 0.0
        %3272 = vmatprep.subr.mxu0 0.0
        %3273 = vmatpush1.msra.mxu0 0.0
        %3274 = vmatprep.subr.mxu0 0.0
        %3275 = vmatpush1.msra.mxu0 0.0
        %3276 = vmatprep.subr.mxu0 0.0
        %3277 = vmatpush1.msra.mxu0 0.0
        %3278 = vmatprep.subr.mxu0 0.0
        %3279 = vmatpush1.msra.mxu0 0.0
        %3280 = vmatprep.subr.mxu0 0.0
        %3281 = vmatpush1.msra.mxu0 0.0
        %3282 = vmatprep.subr.mxu0 0.0
        %3283 = vmatpush1.msra.mxu0 0.0
        %3284 = vmatprep.subr.mxu0 0.0
        %3285 = vmatpush1.msra.mxu0 0.0
        %3286 = vmatprep.subr.mxu0 0.0
        %3287 = vmatpush1.msra.mxu0 0.0
        %3288 = vmatprep.subr.mxu0 0.0
        %3289 = vmatpush1.msra.mxu0 0.0
        %3290 = vmatprep.subr.mxu0 0.0
        %3291 = vmatpush1.msra.mxu0 0.0
        %3292 = vmatprep.subr.mxu0 0.0
        %3293 = vmatpush1.msra.mxu0 0.0
        %3294 = vmatprep.subr.mxu0 0.0
        %3295 = vmatpush1.msra.mxu0 0.0
        %3296 = vmatprep.subr.mxu0 0.0
        %3297 = vmatpush1.msra.mxu0 0.0
        %3298 = vmatprep.subr.mxu0 0.0
        %3299 = vmatpush1.msra.mxu0 0.0
        %3300 = vmatprep.subr.mxu0 0.0
        %3301 = vmatpush1.msra.mxu0 0.0
        %3302 = vmatprep.subr.mxu0 0.0
        %3303 = vmatpush1.msra.mxu0 0.0
        %3304 = vmatprep.subr.mxu0 0.0
        %3305 = vmatpush1.msra.mxu0 0.0
        %3306 = vmatprep.subr.mxu0 0.0
        %3307 = vmatpush1.msra.mxu0 0.0
        %3308 = vmatprep.subr.mxu0 0.0
        %3309 = vmatpush1.msra.mxu0 0.0
        %3310 = vmatprep.subr.mxu0 0.0
        %3311 = vmatpush1.msra.mxu0 0.0
        %3312 = vmatprep.subr.mxu0 0.0
        %3313 = vmatpush1.msra.mxu0 0.0
        %3314 = vmatprep.subr.mxu0 0.0
        %3315 = vmatpush1.msra.mxu0 0.0
        %3316 = vmatprep.subr.mxu0 0.0
        %3317 = vmatpush1.msra.mxu0 0.0
        %3318 = vmatprep.subr.mxu0 0.0
        %3319 = vmatpush1.msra.mxu0 0.0
        %3320 = vmatprep.subr.mxu0 0.0
        %3321 = vmatpush1.msra.mxu0 0.0
        %3322 = vmatprep.mubr.f32.mxu0 0.0
        %3323 = vmatmul.mubr.f32.gmra.mrb[0].mxu0 %v3253
        %v3324 = vpop.f32.mrb[0].mxu0
        %v3325 = vadd.f32 0.0, %v3324
        %v3326 = vpop.f32.mrb[0].mxu0
        %3327 = vdwg.mxu0
        %v3328 = vadd.f32 %v3233, %v3325
        %v3329 = vld [vmem:[#allocation4 + $0x8] sm:$0x1]
        %v3330 = vld [vmem:[#allocation4 + $0xa] sm:$0x1]
        %3332 = vrot.lane.b32.xlu0 %v3329, 126
        %v3333 = vpop.permute.xlu0 %3332
        %v3335 = vmax.f32 %v3329, %v3333
        %3337 = vrot.lane.b32.xlu0 %v3330, 126
        %v3338 = vpop.permute.xlu0 %3337
        %v3340 = vmax.f32 %v3330, %v3338
        %v3341 = vmax.f32 %v3335, %v3340
        %s3342 = scalar_lea.vmem %s5, 64
        %v3343 = vld [vmem:[%s3342] sm:$0xff]
        %v3344 = vld [vmem:[%s3342 + $0x8] sm:$0xff]
        %v3345 = vld [vmem:[%s3342 + $0x10] sm:$0xff]
        %v3346 = vld [vmem:[%s3342 + $0x18] sm:$0x3]
        %v3348 = vsel %vm3155, %v3341, 0
        %v3351 = vsel %vm3159, %v3346, 0
        %3353 = vmatprep.subr.mxu0 0.0
        %3354 = vmatpush1.msra.mxu0 %v3343
        %3355 = vmatprep.subr.mxu0 0.0
        %3356 = vmatpush1.msra.mxu0 %v3344
        %3357 = vmatprep.subr.mxu0 0.0
        %3358 = vmatpush1.msra.mxu0 %v3345
        %3359 = vmatprep.subr.mxu0 0.0
        %3360 = vmatpush1.msra.mxu0 %v3351
        %3361 = vmatprep.subr.mxu0 0.0
        %3362 = vmatpush1.msra.mxu0 0.0
        %3363 = vmatprep.subr.mxu0 0.0
        %3364 = vmatpush1.msra.mxu0 0.0
        %3365 = vmatprep.subr.mxu0 0.0
        %3366 = vmatpush1.msra.mxu0 0.0
        %3367 = vmatprep.subr.mxu0 0.0
        %3368 = vmatpush1.msra.mxu0 0.0
        %3369 = vmatprep.subr.mxu0 0.0
        %3370 = vmatpush1.msra.mxu0 0.0
        %3371 = vmatprep.subr.mxu0 0.0
        %3372 = vmatpush1.msra.mxu0 0.0
        %3373 = vmatprep.subr.mxu0 0.0
        %3374 = vmatpush1.msra.mxu0 0.0
        %3375 = vmatprep.subr.mxu0 0.0
        %3376 = vmatpush1.msra.mxu0 0.0
        %3377 = vmatprep.subr.mxu0 0.0
        %3378 = vmatpush1.msra.mxu0 0.0
        %3379 = vmatprep.subr.mxu0 0.0
        %3380 = vmatpush1.msra.mxu0 0.0
        %3381 = vmatprep.subr.mxu0 0.0
        %3382 = vmatpush1.msra.mxu0 0.0
        %3383 = vmatprep.subr.mxu0 0.0
        %3384 = vmatpush1.msra.mxu0 0.0
        %3385 = vmatprep.subr.mxu0 0.0
        %3386 = vmatpush1.msra.mxu0 0.0
        %3387 = vmatprep.subr.mxu0 0.0
        %3388 = vmatpush1.msra.mxu0 0.0
        %3389 = vmatprep.subr.mxu0 0.0
        %3390 = vmatpush1.msra.mxu0 0.0
        %3391 = vmatprep.subr.mxu0 0.0
        %3392 = vmatpush1.msra.mxu0 0.0
        %3393 = vmatprep.subr.mxu0 0.0
        %3394 = vmatpush1.msra.mxu0 0.0
        %3395 = vmatprep.subr.mxu0 0.0
        %3396 = vmatpush1.msra.mxu0 0.0
        %3397 = vmatprep.subr.mxu0 0.0
        %3398 = vmatpush1.msra.mxu0 0.0
        %3399 = vmatprep.subr.mxu0 0.0
        %3400 = vmatpush1.msra.mxu0 0.0
        %3401 = vmatprep.subr.mxu0 0.0
        %3402 = vmatpush1.msra.mxu0 0.0
        %3403 = vmatprep.subr.mxu0 0.0
        %3404 = vmatpush1.msra.mxu0 0.0
        %3405 = vmatprep.subr.mxu0 0.0
        %3406 = vmatpush1.msra.mxu0 0.0
        %3407 = vmatprep.subr.mxu0 0.0
        %3408 = vmatpush1.msra.mxu0 0.0
        %3409 = vmatprep.subr.mxu0 0.0
        %3410 = vmatpush1.msra.mxu0 0.0
        %3411 = vmatprep.subr.mxu0 0.0
        %3412 = vmatpush1.msra.mxu0 0.0
        %3413 = vmatprep.subr.mxu0 0.0
        %3414 = vmatpush1.msra.mxu0 0.0
        %3415 = vmatprep.subr.mxu0 0.0
        %3416 = vmatpush1.msra.mxu0 0.0
        %3417 = vmatprep.mubr.f32.mxu0 0.0
        %3418 = vmatmul.mubr.f32.gmra.mrb[0].mxu0 %v3348
        %v3419 = vpop.f32.mrb[0].mxu0
        %v3420 = vadd.f32 0.0, %v3419
        %v3421 = vpop.f32.mrb[0].mxu0
        %3422 = vdwg.mxu0
        %v3423 = vadd.f32 %v3328, %v3420
        %v3424 = vld [vmem:[#allocation4 + $0xc] sm:$0x1]
        %v3425 = vld [vmem:[#allocation4 + $0xe] sm:$0x1]
        %3427 = vrot.lane.b32.xlu0 %v3424, 126
        %v3428 = vpop.permute.xlu0 %3427
        %v3430 = vmax.f32 %v3424, %v3428
        %3432 = vrot.lane.b32.xlu0 %v3425, 126
        %v3433 = vpop.permute.xlu0 %3432
        %v3435 = vmax.f32 %v3425, %v3433
        %v3436 = vmax.f32 %v3430, %v3435
        %s3437 = scalar_lea.vmem %s5, 96
        %v3438 = vld [vmem:[%s3437] sm:$0xff]
        %v3439 = vld [vmem:[%s3437 + $0x8] sm:$0xff]
        %v3440 = vld [vmem:[%s3437 + $0x10] sm:$0xff]
        %v3441 = vld [vmem:[%s3437 + $0x18] sm:$0x3]
        %v3443 = vsel %vm3155, %v3436, 0
        %v3446 = vsel %vm3159, %v3441, 0
        %3448 = vmatprep.subr.mxu0 0.0
        %3449 = vmatpush1.msra.mxu0 %v3438
        %3450 = vmatprep.subr.mxu0 0.0
        %3451 = vmatpush1.msra.mxu0 %v3439
        %3452 = vmatprep.subr.mxu0 0.0
        %3453 = vmatpush1.msra.mxu0 %v3440
        %3454 = vmatprep.subr.mxu0 0.0
        %3455 = vmatpush1.msra.mxu0 %v3446
        %3456 = vmatprep.subr.mxu0 0.0
        %3457 = vmatpush1.msra.mxu0 0.0
        %3458 = vmatprep.subr.mxu0 0.0
        %3459 = vmatpush1.msra.mxu0 0.0
        %3460 = vmatprep.subr.mxu0 0.0
        %3461 = vmatpush1.msra.mxu0 0.0
        %3462 = vmatprep.subr.mxu0 0.0
        %3463 = vmatpush1.msra.mxu0 0.0
        %3464 = vmatprep.subr.mxu0 0.0
        %3465 = vmatpush1.msra.mxu0 0.0
        %3466 = vmatprep.subr.mxu0 0.0
        %3467 = vmatpush1.msra.mxu0 0.0
        %3468 = vmatprep.subr.mxu0 0.0
        %3469 = vmatpush1.msra.mxu0 0.0
        %3470 = vmatprep.subr.mxu0 0.0
        %3471 = vmatpush1.msra.mxu0 0.0
        %3472 = vmatprep.subr.mxu0 0.0
        %3473 = vmatpush1.msra.mxu0 0.0
        %3474 = vmatprep.subr.mxu0 0.0
        %3475 = vmatpush1.msra.mxu0 0.0
        %3476 = vmatprep.subr.mxu0 0.0
        %3477 = vmatpush1.msra.mxu0 0.0
        %3478 = vmatprep.subr.mxu0 0.0
        %3479 = vmatpush1.msra.mxu0 0.0
        %3480 = vmatprep.subr.mxu0 0.0
        %3481 = vmatpush1.msra.mxu0 0.0
        %3482 = vmatprep.subr.mxu0 0.0
        %3483 = vmatpush1.msra.mxu0 0.0
        %3484 = vmatprep.subr.mxu0 0.0
        %3485 = vmatpush1.msra.mxu0 0.0
        %3486 = vmatprep.subr.mxu0 0.0
        %3487 = vmatpush1.msra.mxu0 0.0
        %3488 = vmatprep.subr.mxu0 0.0
        %3489 = vmatpush1.msra.mxu0 0.0
        %3490 = vmatprep.subr.mxu0 0.0
        %3491 = vmatpush1.msra.mxu0 0.0
        %3492 = vmatprep.subr.mxu0 0.0
        %3493 = vmatpush1.msra.mxu0 0.0
        %3494 = vmatprep.subr.mxu0 0.0
        %3495 = vmatpush1.msra.mxu0 0.0
        %3496 = vmatprep.subr.mxu0 0.0
        %3497 = vmatpush1.msra.mxu0 0.0
        %3498 = vmatprep.subr.mxu0 0.0
        %3499 = vmatpush1.msra.mxu0 0.0
        %3500 = vmatprep.subr.mxu0 0.0
        %3501 = vmatpush1.msra.mxu0 0.0
        %3502 = vmatprep.subr.mxu0 0.0
        %3503 = vmatpush1.msra.mxu0 0.0
        %3504 = vmatprep.subr.mxu0 0.0
        %3505 = vmatpush1.msra.mxu0 0.0
        %3506 = vmatprep.subr.mxu0 0.0
        %3507 = vmatpush1.msra.mxu0 0.0
        %3508 = vmatprep.subr.mxu0 0.0
        %3509 = vmatpush1.msra.mxu0 0.0
        %3510 = vmatprep.subr.mxu0 0.0
        %3511 = vmatpush1.msra.mxu0 0.0
        %3512 = vmatprep.mubr.f32.mxu0 0.0
        %3513 = vmatmul.mubr.f32.gmra.mrb[0].mxu0 %v3443
        %v3514 = vpop.f32.mrb[0].mxu0
        %v3515 = vadd.f32 0.0, %v3514
        %v3516 = vpop.f32.mrb[0].mxu0
        %3517 = vdwg.mxu0
        %v3518 = vadd.f32 %v3423, %v3515
        %v3519 = vld [vmem:[#allocation4 + $0x10] sm:$0x1]
        %v3520 = vld [vmem:[#allocation4 + $0x12] sm:$0x1]
        %3522 = vrot.lane.b32.xlu0 %v3519, 126
        %v3523 = vpop.permute.xlu0 %3522
        %v3525 = vmax.f32 %v3519, %v3523
        %3527 = vrot.lane.b32.xlu0 %v3520, 126
        %v3528 = vpop.permute.xlu0 %3527
        %v3530 = vmax.f32 %v3520, %v3528
        %v3531 = vmax.f32 %v3525, %v3530
        %s3532 = scalar_lea.vmem %s5, 128
        %v3533 = vld [vmem:[%s3532] sm:$0xff]
        %v3534 = vld [vmem:[%s3532 + $0x8] sm:$0xff]
        %v3535 = vld [vmem:[%s3532 + $0x10] sm:$0xff]
        %v3536 = vld [vmem:[%s3532 + $0x18] sm:$0x3]
        %v3538 = vsel %vm3155, %v3531, 0
        %v3541 = vsel %vm3159, %v3536, 0
        %3543 = vmatprep.subr.mxu0 0.0
        %3544 = vmatpush1.msra.mxu0 %v3533
        %3545 = vmatprep.subr.mxu0 0.0
        %3546 = vmatpush1.msra.mxu0 %v3534
        %3547 = vmatprep.subr.mxu0 0.0
        %3548 = vmatpush1.msra.mxu0 %v3535
        %3549 = vmatprep.subr.mxu0 0.0
        %3550 = vmatpush1.msra.mxu0 %v3541
        %3551 = vmatprep.subr.mxu0 0.0
        %3552 = vmatpush1.msra.mxu0 0.0
        %3553 = vmatprep.subr.mxu0 0.0
        %3554 = vmatpush1.msra.mxu0 0.0
        %3555 = vmatprep.subr.mxu0 0.0
        %3556 = vmatpush1.msra.mxu0 0.0
        %3557 = vmatprep.subr.mxu0 0.0
        %3558 = vmatpush1.msra.mxu0 0.0
        %3559 = vmatprep.subr.mxu0 0.0
        %3560 = vmatpush1.msra.mxu0 0.0
        %3561 = vmatprep.subr.mxu0 0.0
        %3562 = vmatpush1.msra.mxu0 0.0
        %3563 = vmatprep.subr.mxu0 0.0
        %3564 = vmatpush1.msra.mxu0 0.0
        %3565 = vmatprep.subr.mxu0 0.0
        %3566 = vmatpush1.msra.mxu0 0.0
        %3567 = vmatprep.subr.mxu0 0.0
        %3568 = vmatpush1.msra.mxu0 0.0
        %3569 = vmatprep.subr.mxu0 0.0
        %3570 = vmatpush1.msra.mxu0 0.0
        %3571 = vmatprep.subr.mxu0 0.0
        %3572 = vmatpush1.msra.mxu0 0.0
        %3573 = vmatprep.subr.mxu0 0.0
        %3574 = vmatpush1.msra.mxu0 0.0
        %3575 = vmatprep.subr.mxu0 0.0
        %3576 = vmatpush1.msra.mxu0 0.0
        %3577 = vmatprep.subr.mxu0 0.0
        %3578 = vmatpush1.msra.mxu0 0.0
        %3579 = vmatprep.subr.mxu0 0.0
        %3580 = vmatpush1.msra.mxu0 0.0
        %3581 = vmatprep.subr.mxu0 0.0
        %3582 = vmatpush1.msra.mxu0 0.0
        %3583 = vmatprep.subr.mxu0 0.0
        %3584 = vmatpush1.msra.mxu0 0.0
        %3585 = vmatprep.subr.mxu0 0.0
        %3586 = vmatpush1.msra.mxu0 0.0
        %3587 = vmatprep.subr.mxu0 0.0
        %3588 = vmatpush1.msra.mxu0 0.0
        %3589 = vmatprep.subr.mxu0 0.0
        %3590 = vmatpush1.msra.mxu0 0.0
        %3591 = vmatprep.subr.mxu0 0.0
        %3592 = vmatpush1.msra.mxu0 0.0
        %3593 = vmatprep.subr.mxu0 0.0
        %3594 = vmatpush1.msra.mxu0 0.0
        %3595 = vmatprep.subr.mxu0 0.0
        %3596 = vmatpush1.msra.mxu0 0.0
        %3597 = vmatprep.subr.mxu0 0.0
        %3598 = vmatpush1.msra.mxu0 0.0
        %3599 = vmatprep.subr.mxu0 0.0
        %3600 = vmatpush1.msra.mxu0 0.0
        %3601 = vmatprep.subr.mxu0 0.0
        %3602 = vmatpush1.msra.mxu0 0.0
        %3603 = vmatprep.subr.mxu0 0.0
        %3604 = vmatpush1.msra.mxu0 0.0
        %3605 = vmatprep.subr.mxu0 0.0
        %3606 = vmatpush1.msra.mxu0 0.0
        %3607 = vmatprep.mubr.f32.mxu0 0.0
        %3608 = vmatmul.mubr.f32.gmra.mrb[0].mxu0 %v3538
        %v3609 = vpop.f32.mrb[0].mxu0
        %v3610 = vadd.f32 0.0, %v3609
        %v3611 = vpop.f32.mrb[0].mxu0
        %3612 = vdwg.mxu0
        %v3613 = vadd.f32 %v3518, %v3610
        %v3614 = vld [vmem:[#allocation4 + $0x14] sm:$0x1]
        %v3615 = vld [vmem:[#allocation4 + $0x16] sm:$0x1]
        %3617 = vrot.lane.b32.xlu0 %v3614, 126
        %v3618 = vpop.permute.xlu0 %3617
        %v3620 = vmax.f32 %v3614, %v3618
        %3622 = vrot.lane.b32.xlu0 %v3615, 126
        %v3623 = vpop.permute.xlu0 %3622
        %v3625 = vmax.f32 %v3615, %v3623
        %v3626 = vmax.f32 %v3620, %v3625
        %s3627 = scalar_lea.vmem %s5, 160
        %v3628 = vld [vmem:[%s3627] sm:$0xff]
        %v3629 = vld [vmem:[%s3627 + $0x8] sm:$0xff]
        %v3630 = vld [vmem:[%s3627 + $0x10] sm:$0xff]
        %v3631 = vld [vmem:[%s3627 + $0x18] sm:$0x3]
        %v3633 = vsel %vm3155, %v3626, 0
        %v3636 = vsel %vm3159, %v3631, 0
        %3638 = vmatprep.subr.mxu0 0.0
        %3639 = vmatpush1.msra.mxu0 %v3628
        %3640 = vmatprep.subr.mxu0 0.0
        %3641 = vmatpush1.msra.mxu0 %v3629
        %3642 = vmatprep.subr.mxu0 0.0
        %3643 = vmatpush1.msra.mxu0 %v3630
        %3644 = vmatprep.subr.mxu0 0.0
        %3645 = vmatpush1.msra.mxu0 %v3636
        %3646 = vmatprep.subr.mxu0 0.0
        %3647 = vmatpush1.msra.mxu0 0.0
        %3648 = vmatprep.subr.mxu0 0.0
        %3649 = vmatpush1.msra.mxu0 0.0
        %3650 = vmatprep.subr.mxu0 0.0
        %3651 = vmatpush1.msra.mxu0 0.0
        %3652 = vmatprep.subr.mxu0 0.0
        %3653 = vmatpush1.msra.mxu0 0.0
        %3654 = vmatprep.subr.mxu0 0.0
        %3655 = vmatpush1.msra.mxu0 0.0
        %3656 = vmatprep.subr.mxu0 0.0
        %3657 = vmatpush1.msra.mxu0 0.0
        %3658 = vmatprep.subr.mxu0 0.0
        %3659 = vmatpush1.msra.mxu0 0.0
        %3660 = vmatprep.subr.mxu0 0.0
        %3661 = vmatpush1.msra.mxu0 0.0
        %3662 = vmatprep.subr.mxu0 0.0
        %3663 = vmatpush1.msra.mxu0 0.0
        %3664 = vmatprep.subr.mxu0 0.0
        %3665 = vmatpush1.msra.mxu0 0.0
        %3666 = vmatprep.subr.mxu0 0.0
        %3667 = vmatpush1.msra.mxu0 0.0
        %3668 = vmatprep.subr.mxu0 0.0
        %3669 = vmatpush1.msra.mxu0 0.0
        %3670 = vmatprep.subr.mxu0 0.0
        %3671 = vmatpush1.msra.mxu0 0.0
        %3672 = vmatprep.subr.mxu0 0.0
        %3673 = vmatpush1.msra.mxu0 0.0
        %3674 = vmatprep.subr.mxu0 0.0
        %3675 = vmatpush1.msra.mxu0 0.0
        %3676 = vmatprep.subr.mxu0 0.0
        %3677 = vmatpush1.msra.mxu0 0.0
        %3678 = vmatprep.subr.mxu0 0.0
        %3679 = vmatpush1.msra.mxu0 0.0
        %3680 = vmatprep.subr.mxu0 0.0
        %3681 = vmatpush1.msra.mxu0 0.0
        %3682 = vmatprep.subr.mxu0 0.0
        %3683 = vmatpush1.msra.mxu0 0.0
        %3684 = vmatprep.subr.mxu0 0.0
        %3685 = vmatpush1.msra.mxu0 0.0
        %3686 = vmatprep.subr.mxu0 0.0
        %3687 = vmatpush1.msra.mxu0 0.0
        %3688 = vmatprep.subr.mxu0 0.0
        %3689 = vmatpush1.msra.mxu0 0.0
        %3690 = vmatprep.subr.mxu0 0.0
        %3691 = vmatpush1.msra.mxu0 0.0
        %3692 = vmatprep.subr.mxu0 0.0
        %3693 = vmatpush1.msra.mxu0 0.0
        %3694 = vmatprep.subr.mxu0 0.0
        %3695 = vmatpush1.msra.mxu0 0.0
        %3696 = vmatprep.subr.mxu0 0.0
        %3697 = vmatpush1.msra.mxu0 0.0
        %3698 = vmatprep.subr.mxu0 0.0
        %3699 = vmatpush1.msra.mxu0 0.0
        %3700 = vmatprep.subr.mxu0 0.0
        %3701 = vmatpush1.msra.mxu0 0.0
        %3702 = vmatprep.mubr.f32.mxu0 0.0
        %3703 = vmatmul.mubr.f32.gmra.mrb[0].mxu0 %v3633
        %v3704 = vpop.f32.mrb[0].mxu0
        %v3705 = vadd.f32 0.0, %v3704
        %v3706 = vpop.f32.mrb[0].mxu0
        %3707 = vdwg.mxu0
        %v3708 = vadd.f32 %v3613, %v3705
        %v3709 = vld [vmem:[#allocation4 + $0x18] sm:$0x1]
        %v3710 = vld [vmem:[#allocation4 + $0x1a] sm:$0x1]
        %3712 = vrot.lane.b32.xlu0 %v3709, 126
        %v3713 = vpop.permute.xlu0 %3712
        %v3715 = vmax.f32 %v3709, %v3713
        %3717 = vrot.lane.b32.xlu0 %v3710, 126
        %v3718 = vpop.permute.xlu0 %3717
        %v3720 = vmax.f32 %v3710, %v3718
        %v3721 = vmax.f32 %v3715, %v3720
        %s3722 = scalar_lea.vmem %s5, 192
        %v3723 = vld [vmem:[%s3722] sm:$0xff]
        %v3724 = vld [vmem:[%s3722 + $0x8] sm:$0xff]
        %v3725 = vld [vmem:[%s3722 + $0x10] sm:$0xff]
        %v3726 = vld [vmem:[%s3722 + $0x18] sm:$0x3]
        %v3728 = vsel %vm3155, %v3721, 0
        %v3731 = vsel %vm3159, %v3726, 0
        %3733 = vmatprep.subr.mxu0 0.0
        %3734 = vmatpush1.msra.mxu0 %v3723
        %3735 = vmatprep.subr.mxu0 0.0
        %3736 = vmatpush1.msra.mxu0 %v3724
        %3737 = vmatprep.subr.mxu0 0.0
        %3738 = vmatpush1.msra.mxu0 %v3725
        %3739 = vmatprep.subr.mxu0 0.0
        %3740 = vmatpush1.msra.mxu0 %v3731
        %3741 = vmatprep.subr.mxu0 0.0
        %3742 = vmatpush1.msra.mxu0 0.0
        %3743 = vmatprep.subr.mxu0 0.0
        %3744 = vmatpush1.msra.mxu0 0.0
        %3745 = vmatprep.subr.mxu0 0.0
        %3746 = vmatpush1.msra.mxu0 0.0
        %3747 = vmatprep.subr.mxu0 0.0
        %3748 = vmatpush1.msra.mxu0 0.0
        %3749 = vmatprep.subr.mxu0 0.0
        %3750 = vmatpush1.msra.mxu0 0.0
        %3751 = vmatprep.subr.mxu0 0.0
        %3752 = vmatpush1.msra.mxu0 0.0
        %3753 = vmatprep.subr.mxu0 0.0
        %3754 = vmatpush1.msra.mxu0 0.0
        %3755 = vmatprep.subr.mxu0 0.0
        %3756 = vmatpush1.msra.mxu0 0.0
        %3757 = vmatprep.subr.mxu0 0.0
        %3758 = vmatpush1.msra.mxu0 0.0
        %3759 = vmatprep.subr.mxu0 0.0
        %3760 = vmatpush1.msra.mxu0 0.0
        %3761 = vmatprep.subr.mxu0 0.0
        %3762 = vmatpush1.msra.mxu0 0.0
        %3763 = vmatprep.subr.mxu0 0.0
        %3764 = vmatpush1.msra.mxu0 0.0
        %3765 = vmatprep.subr.mxu0 0.0
        %3766 = vmatpush1.msra.mxu0 0.0
        %3767 = vmatprep.subr.mxu0 0.0
        %3768 = vmatpush1.msra.mxu0 0.0
        %3769 = vmatprep.subr.mxu0 0.0
        %3770 = vmatpush1.msra.mxu0 0.0
        %3771 = vmatprep.subr.mxu0 0.0
        %3772 = vmatpush1.msra.mxu0 0.0
        %3773 = vmatprep.subr.mxu0 0.0
        %3774 = vmatpush1.msra.mxu0 0.0
        %3775 = vmatprep.subr.mxu0 0.0
        %3776 = vmatpush1.msra.mxu0 0.0
        %3777 = vmatprep.subr.mxu0 0.0
        %3778 = vmatpush1.msra.mxu0 0.0
        %3779 = vmatprep.subr.mxu0 0.0
        %3780 = vmatpush1.msra.mxu0 0.0
        %3781 = vmatprep.subr.mxu0 0.0
        %3782 = vmatpush1.msra.mxu0 0.0
        %3783 = vmatprep.subr.mxu0 0.0
        %3784 = vmatpush1.msra.mxu0 0.0
        %3785 = vmatprep.subr.mxu0 0.0
        %3786 = vmatpush1.msra.mxu0 0.0
        %3787 = vmatprep.subr.mxu0 0.0
        %3788 = vmatpush1.msra.mxu0 0.0
        %3789 = vmatprep.subr.mxu0 0.0
        %3790 = vmatpush1.msra.mxu0 0.0
        %3791 = vmatprep.subr.mxu0 0.0
        %3792 = vmatpush1.msra.mxu0 0.0
        %3793 = vmatprep.subr.mxu0 0.0
        %3794 = vmatpush1.msra.mxu0 0.0
        %3795 = vmatprep.subr.mxu0 0.0
        %3796 = vmatpush1.msra.mxu0 0.0
        %3797 = vmatprep.mubr.f32.mxu0 0.0
        %3798 = vmatmul.mubr.f32.gmra.mrb[0].mxu0 %v3728
        %v3799 = vpop.f32.mrb[0].mxu0
        %v3800 = vadd.f32 0.0, %v3799
        %v3801 = vpop.f32.mrb[0].mxu0
        %3802 = vdwg.mxu0
        %v3803 = vadd.f32 %v3708, %v3800
        %v3804 = vld [vmem:[%s7] sm:$0xff]
        %v3805 = vld [vmem:[%s7 + $0x8] sm:$0x3]
        %v3806 = vld [vmem:[%s8] sm:$0x1]
        %vm3807 = vcmask 80896
        %v3809 = vsel %vm3807, %v3803, 0
        %v3812 = vsel %vm3159, %v3805, 0
        %3814 = vmatprep.subr.mxu0 0.0
        %3815 = vmatpush1.msra.mxu0 %v3804
        %3816 = vmatprep.subr.mxu0 0.0
        %3817 = vmatpush1.msra.mxu0 %v3812
        %3818 = vmatprep.subr.mxu0 0.0
        %3819 = vmatpush1.msra.mxu0 0.0
        %3820 = vmatprep.subr.mxu0 0.0
        %3821 = vmatpush1.msra.mxu0 0.0
        %3822 = vmatprep.subr.mxu0 0.0
        %3823 = vmatpush1.msra.mxu0 0.0
        %3824 = vmatprep.subr.mxu0 0.0
        %3825 = vmatpush1.msra.mxu0 0.0
        %3826 = vmatprep.subr.mxu0 0.0
        %3827 = vmatpush1.msra.mxu0 0.0
        %3828 = vmatprep.subr.mxu0 0.0
        %3829 = vmatpush1.msra.mxu0 0.0
        %3830 = vmatprep.subr.mxu0 0.0
        %3831 = vmatpush1.msra.mxu0 0.0
        %3832 = vmatprep.subr.mxu0 0.0
        %3833 = vmatpush1.msra.mxu0 0.0
        %3834 = vmatprep.subr.mxu0 0.0
        %3835 = vmatpush1.msra.mxu0 0.0
        %3836 = vmatprep.subr.mxu0 0.0
        %3837 = vmatpush1.msra.mxu0 0.0
        %3838 = vmatprep.subr.mxu0 0.0
        %3839 = vmatpush1.msra.mxu0 0.0
        %3840 = vmatprep.subr.mxu0 0.0
        %3841 = vmatpush1.msra.mxu0 0.0
        %3842 = vmatprep.subr.mxu0 0.0
        %3843 = vmatpush1.msra.mxu0 0.0
        %3844 = vmatprep.subr.mxu0 0.0
        %3845 = vmatpush1.msra.mxu0 0.0
        %3846 = vmatprep.subr.mxu0 0.0
        %3847 = vmatpush1.msra.mxu0 0.0
        %3848 = vmatprep.subr.mxu0 0.0
        %3849 = vmatpush1.msra.mxu0 0.0
        %3850 = vmatprep.subr.mxu0 0.0
        %3851 = vmatpush1.msra.mxu0 0.0
        %3852 = vmatprep.subr.mxu0 0.0
        %3853 = vmatpush1.msra.mxu0 0.0
        %3854 = vmatprep.subr.mxu0 0.0
        %3855 = vmatpush1.msra.mxu0 0.0
        %3856 = vmatprep.subr.mxu0 0.0
        %3857 = vmatpush1.msra.mxu0 0.0
        %3858 = vmatprep.subr.mxu0 0.0
        %3859 = vmatpush1.msra.mxu0 0.0
        %3860 = vmatprep.subr.mxu0 0.0
        %3861 = vmatpush1.msra.mxu0 0.0
        %3862 = vmatprep.subr.mxu0 0.0
        %3863 = vmatpush1.msra.mxu0 0.0
        %3864 = vmatprep.subr.mxu0 0.0
        %3865 = vmatpush1.msra.mxu0 0.0
        %3866 = vmatprep.subr.mxu0 0.0
        %3867 = vmatpush1.msra.mxu0 0.0
        %3868 = vmatprep.subr.mxu0 0.0
        %3869 = vmatpush1.msra.mxu0 0.0
        %3870 = vmatprep.subr.mxu0 0.0
        %3871 = vmatpush1.msra.mxu0 0.0
        %3872 = vmatprep.subr.mxu0 0.0
        %3873 = vmatpush1.msra.mxu0 0.0
        %3874 = vmatprep.subr.mxu0 0.0
        %3875 = vmatpush1.msra.mxu0 0.0
        %3876 = vmatprep.subr.mxu0 0.0
        %3877 = vmatpush1.msra.mxu0 0.0
        %3878 = vmatprep.mubr.f32.mxu0 0.0
        %3879 = vmatmul.mubr.f32.gmra.mrb[0].mxu0 %v3809
        %v3880 = vpop.f32.mrb[0].mxu0
        %v3881 = vadd.f32 %v3806, %v3880
        %v3882 = vpop.f32.mrb[0].mxu0
        %3883 = vdwg.mxu0
        %vm3884 = vcmask 73728
        %3885 = vst.msk [vmem:[%s364] sm:$0x1] %vm3884, %v3881
        %s3886 = sand.u32 %s228, 1
        %s3887 = scalar_lea.sflag [#allocation7], %s3886
        %s3888 = sand.u32 %s228, 1
        %s3889 = scalar_lea.vmem [#allocation12], %s3888
        // Predicated region
        $region69: #{cnn_forward.1} parent=55 // pred_check
          %p3890 = pneg %p238
        $region70: #{cnn_forward.1} parent=55 // pred_check_branch
          %3892 = sbr.rel (%p3890) target = $region72
        $region71: #{cnn_forward.1} parent=55 // pred_region
          %s3894 = ssub.s32 16, 16
          %3895 = vsyncadd %s3887, %s3894
          %s3896 = smul.addr %s26, 16
          %s3897 = scalar_lea.hbm %s9, %s3896
          %s3899 = sshll.u32 %s3889, 4
          %s3900 = int_to_ptr.vmem [resolvable:$true] %s3899
          %3902 = dma.vmem_to_hbm [thread:$0]  %s3900, 16, %s3897, %s3887
        $region72: #{cnn_forward.1} parent=55 // pred_fallthru
          _
      $region56: #{cnn_forward.1} parent=5 // pred_fallthru
        _
      %p3903 = scmp.le.s32.totalorder 2, %s21
      // Predicated region
      $region73: #{cnn_forward.1} parent=5 // pred_check
        %p3904 = pneg %p3903
      $region74: #{cnn_forward.1} parent=5 // pred_check_branch
        %3906 = sbr.rel (%p3904) target = $region76
      $region75: #{cnn_forward.1} parent=5 // pred_region
        %s3907 = ssub.s32 %s21, 2
        // Predicated region
        $region77: #{cnn_forward.1} parent=75 // pred_check
          %p3908 = pneg %p244
        $region78: #{cnn_forward.1} parent=75 // pred_check_branch
          %3910 = sbr.rel (%p3908) target = $region80
        $region79: #{cnn_forward.1} parent=75 // pred_region
          %s3911 = sand.u32 %s229, 1
          %s3912 = scalar_lea.sflag [#allocation7], %s3911
          %s3913 = sand.u32 %s229, 1
          %s3914 = scalar_lea.vmem [#allocation12], %s3913
          %3915 = dma.done %s3912, 16
        $region80: #{cnn_forward.1} parent=75 // pred_fallthru
          _
      $region76: #{cnn_forward.1} parent=5 // pred_fallthru
        _
    $region6: #{cnn_forward.1} parent=1 // loop_footer
      %s25 = sadd.s32 1, %s21
    $region7: #{cnn_forward.1} parent=1 // loop_footer_branch
      %20 = sbr.rel target = $region3
    $region8: #{cnn_forward.1} parent=1 // loop_exit
      _
    %3916 = vsyncpa [#allocation7], 1
    %s3917 = scalar_lea.sflag [#allocation7], 1
    %3918 = vsyncpa %s3917, 1
    %3919 = vsyncpa [#allocation8], 1
    %s3920 = scalar_lea.sflag [#allocation8], 1
    %3921 = vsyncpa %s3920, 1
    %3922 = vsyncpa [#allocation10], 1

</llo_original>
